<compile_context>
chip_gen: v7x
topology: tpu7x:2x2x1
jax: 0.10.0
libtpu: 0.0.40
codegen_flags: <defaults>
</compile_context>

<pallas_src>
import math
import functools

import jax
import jax.numpy as jnp
from jax import lax
from jax.experimental import pallas as pl
from jax.experimental.pallas import tpu as pltpu


def _round_up(x, m):
    return (x + m - 1) // m * m


def _tpu_vmem_capacity_bytes():
    try:
        return int(pltpu.get_tpu_info().vmem_capacity_bytes)
    except Exception:
        return 64 * 1024 * 1024   # v7x per-TC size; safe lower bound everywhere


def _pick_time_block(seq_len, batch_p, hidden_p, store_bytes, cap):
    """Largest time block whose double-buffered slabs fit a VMEM byte budget."""
    vmem = _tpu_vmem_capacity_bytes()
    budget = int(vmem * 0.6)                               # headroom for compiler
    fixed = (2 * hidden_p * hidden_p * store_bytes * 2     # W_hh (2 dirs), 2 bufs
             + 2 * batch_p * hidden_p * 4 * 2              # h0 (f32), 2 bufs
             + 2 * batch_p * hidden_p * 4 * 2              # h_n (f32), 2 bufs
             + 2 * batch_p * hidden_p * 4)                 # f32 scratch accumulators
    per_step = 4 * 2 * batch_p * hidden_p * store_bytes    # gx_f/gx_b/out_f/out_b ×2 bufs
    t_blk = max(1, (budget - fixed) // per_step)
    return int(max(1, min(seq_len, cap, t_blk)))


# ---------------------------------------------------------------------------
# Pallas kernel: fused (forward + backward) recurrence for one layer.
#   grid = (num_time_blocks,)   -- both directions advance inside each step
# ---------------------------------------------------------------------------
def _birnn_layer_kernel(gxf_ref, gxb_ref, h0_ref, whh_ref,
                        outf_ref, outb_ref, hn_ref,
                        hf_acc, hb_acc, *, t_valid, n_tb):
    """
    gxf_ref : (T_BLK, B, H)  precomputed x@W_ih^T + bias, forward direction,
                             natural time order (time block tb)
    gxb_ref : (T_BLK, B, H)  same, backward direction (time block n_tb-1-tb)
    h0_ref  : (2, B, H)      initial hidden states [fwd, bwd] (f32)
    whh_ref : (2, H, H)      W_hh^T for [fwd, bwd] (bf16)
    outf_ref: (T_BLK, B, H)  forward per-timestep hidden (natural time order)
    outb_ref: (T_BLK, B, H)  backward per-timestep hidden (natural time order)
    hn_ref  : (2, B, H)      final hidden [fwd, bwd] (f32, written once)
    hf_acc, hb_acc : (B, H) f32 VMEM scratch carrying hidden across blocks
    """
    t_blk = gxf_ref.shape[0]
    tb = pl.program_id(0)
    needs_mask = (n_tb * t_blk) != t_valid        # static Python bool

    @pl.when(tb == 0)
    def _():
        hf_acc[...] = h0_ref[0].astype(jnp.float32)
        hb_acc[...] = h0_ref[1].astype(jnp.float32)

    w_f = whh_ref[0]                              # hoisted out of the step loop
    w_b = whh_ref[1]
    mx_dtype = w_f.dtype
    out_dtype = outf_ref.dtype

    def step(i, carry):
        # ---- forward direction: natural within-block order ---------------
        h_f = hf_acc[...]
        pre_f = gxf_ref[i].astype(jnp.float32) + jnp.dot(
            h_f.astype(mx_dtype), w_f, preferred_element_type=jnp.float32)
        h_f_new = jnp.tanh(pre_f)
        if needs_mask:
            keep = (tb * t_blk + i < t_valid).astype(jnp.float32)
            h_f_new = keep * h_f_new + (1.0 - keep) * h_f
        hf_acc[...] = h_f_new
        outf_ref[i] = h_f_new.astype(out_dtype)

        # ---- backward direction: reverse within-block order ---------------
        s = t_blk - 1 - i
        h_b = hb_acc[...]
        pre_b = gxb_ref[s].astype(jnp.float32) + jnp.dot(
            h_b.astype(mx_dtype), w_b, preferred_element_type=jnp.float32)
        h_b_new = jnp.tanh(pre_b)
        if needs_mask:
            keep_b = ((n_tb - 1 - tb) * t_blk + s < t_valid).astype(jnp.float32)
            h_b_new = keep_b * h_b_new + (1.0 - keep_b) * h_b
        hb_acc[...] = h_b_new
        outb_ref[s] = h_b_new.astype(out_dtype)
        return carry

    # modest fixed unroll: overlaps step i+1's gx load / out store with step
    # i's matmul without blowing vreg live ranges.
    lax.fori_loop(0, t_blk, step, 0, unroll=min(8, t_blk))

    @pl.when(tb == n_tb - 1)
    def _():
        hn_ref[0] = hf_acc[...].astype(hn_ref.dtype)
        hn_ref[1] = hb_acc[...].astype(hn_ref.dtype)


def _run_layer(gx_f, gx_b, h0, w_hh, *, t_valid, t_blk, vmem_limit):
    """gx_f/gx_b: (T_pad, B, H); h0: (2, B, H) f32; w_hh: (2, H, H) bf16."""
    t_pad, bp, hp = gx_f.shape
    n_tb = t_pad // t_blk
    store_dtype = gx_f.dtype

    fwd_map = lambda tb: (tb, 0, 0)                 # forward walks blocks 0..n_tb-1
    bwd_map = lambda tb: (n_tb - 1 - tb, 0, 0)      # backward walks them in reverse
    fix_map = lambda tb: (0, 0, 0)

    kernel = functools.partial(_birnn_layer_kernel, t_valid=t_valid, n_tb=n_tb)

    out_f, out_b, h_n = pl.pallas_call(
        kernel,
        out_shape=(jax.ShapeDtypeStruct((t_pad, bp, hp), store_dtype),
                   jax.ShapeDtypeStruct((t_pad, bp, hp), store_dtype),
                   jax.ShapeDtypeStruct((2, bp, hp), jnp.float32)),
        grid_spec=pltpu.PrefetchScalarGridSpec(
            num_scalar_prefetch=0,
            grid=(n_tb,),
            in_specs=[
                pl.BlockSpec((t_blk, bp, hp), fwd_map),   # gx forward slab
                pl.BlockSpec((t_blk, bp, hp), bwd_map),   # gx backward slab
                pl.BlockSpec((2, bp, hp), fix_map),       # h0 (both directions)
                pl.BlockSpec((2, hp, hp), fix_map),       # W_hh^T (both directions)
            ],
            out_specs=(
                pl.BlockSpec((t_blk, bp, hp), fwd_map),   # forward hidden stream
                pl.BlockSpec((t_blk, bp, hp), bwd_map),   # backward hidden stream
                pl.BlockSpec((2, bp, hp), fix_map),       # final hidden (fwd, bwd)
            ),
            scratch_shapes=[pltpu.VMEM((bp, hp), jnp.float32),
                            pltpu.VMEM((bp, hp), jnp.float32)],
        ),
        compiler_params=pltpu.CompilerParams(
            dimension_semantics=("arbitrary",),           # time carries hidden state
            vmem_limit_bytes=vmem_limit),
    )(gx_f, gx_b, h0, w_hh)
    return out_f, out_b, h_n


# ---------------------------------------------------------------------------
# BiRNN forward: layer stacking + input-projection glue (plain JAX).
# ---------------------------------------------------------------------------
def birnn_forward(a_batch_of_seqs, initial_states, params, num_layers,
                  *, storage_dtype=jnp.bfloat16, time_block_cap=512):
    """Matches torch.nn.RNN(x, h0, num_layers, bidirectional=True) forward."""
    x = a_batch_of_seqs
    seq_len, batch, _ = x.shape
    hidden = initial_states.shape[-1]
    out_dtype = x.dtype

    store_bytes = jnp.dtype(storage_dtype).itemsize
    hp = _round_up(hidden, 128)                                 # lane-dense H
    bp = _round_up(batch, 16 if store_bytes == 2 else 8)        # sublane-dense B

    t_blk = _pick_time_block(seq_len, bp, hp, store_bytes, time_block_cap)
    n_tb = -(-seq_len // t_blk)
    t_pad = n_tb * t_blk
    vmem_limit = min(int(_tpu_vmem_capacity_bytes() * 0.9), 128 * 1024 * 1024)

    # zero-padding keeps padded lanes exactly zero through every layer
    def pad_cols(w):                    # (Din, H) -> (Din, Hp)
        return jnp.pad(w, ((0, 0), (0, hp - w.shape[1])))

    def pad_sq(w):                      # (H, H) -> (Hp, Hp)
        return jnp.pad(w, ((0, hp - w.shape[0]), (0, hp - w.shape[1])))

    def pad_bias(b):                    # (H,) -> (Hp,)
        return jnp.pad(b, (0, hp - b.shape[0]))

    if bp != batch:
        x = jnp.pad(x, ((0, 0), (0, bp - batch), (0, 0)))
    h0_all = jnp.pad(initial_states,
                     ((0, 0), (0, bp - batch), (0, hp - hidden))).astype(jnp.float32)

    prev_f = prev_b = None
    finals = []
    for l in range(num_layers):
        (wf_ih, wf_hh, bf), (wb_ih, wb_hh, bb) = params[l]
        w_hh = jnp.stack([pad_sq(wf_hh), pad_sq(wb_hh)]).astype(storage_dtype)
        bias_f = pad_bias(bf).astype(jnp.float32)
        bias_b = pad_bias(bb).astype(jnp.float32)
        h0 = h0_all[2 * l:2 * l + 2]

        if l == 0:
            # hoisted input projection: bf16 operands, f32 accumulation
            xin = x.astype(storage_dtype)
            gx_f = jnp.einsum('tbd,dh->tbh', xin,
                              pad_cols(wf_ih).astype(storage_dtype),
                              preferred_element_type=jnp.float32)
            gx_b = jnp.einsum('tbd,dh->tbh', xin,
                              pad_cols(wb_ih).astype(storage_dtype),
                              preferred_element_type=jnp.float32)
            need_t_pad = t_pad != seq_len
        else:
            # consume the previous layer's fwd/bwd halves directly
            # (no concat([out_f, out_b], -1) materialization)
            wf0 = pad_sq(wf_ih[:hidden]).astype(storage_dtype)
            wf1 = pad_sq(wf_ih[hidden:]).astype(storage_dtype)
            wb0 = pad_sq(wb_ih[:hidden]).astype(storage_dtype)
            wb1 = pad_sq(wb_ih[hidden:]).astype(storage_dtype)
            gx_f = (jnp.einsum('tbh,hk->tbk', prev_f, wf0,
                               preferred_element_type=jnp.float32)
                    + jnp.einsum('tbh,hk->tbk', prev_b, wf1,
                                 preferred_element_type=jnp.float32))
            gx_b = (jnp.einsum('tbh,hk->tbk', prev_f, wb0,
                               preferred_element_type=jnp.float32)
                    + jnp.einsum('tbh,hk->tbk', prev_b, wb1,
                                 preferred_element_type=jnp.float32))
            need_t_pad = False          # previous layer outputs already T_pad long

        gx_f = (gx_f + bias_f).astype(storage_dtype)
        gx_b = (gx_b + bias_b).astype(storage_dtype)
        if need_t_pad:
            gx_f = jnp.pad(gx_f, ((0, t_pad - seq_len), (0, 0), (0, 0)))
            gx_b = jnp.pad(gx_b, ((0, t_pad - seq_len), (0, 0), (0, 0)))

        prev_f, prev_b, h_n = _run_layer(gx_f, gx_b, h0, w_hh,
                                         t_valid=seq_len, t_blk=t_blk,
                                         vmem_limit=vmem_limit)
        finals.append(h_n)

    output = jnp.concatenate(
        [prev_f[:seq_len, :batch, :hidden], prev_b[:seq_len, :batch, :hidden]],
        axis=-1).astype(out_dtype)
    final_state = (jnp.concatenate(finals, axis=0)[:, :batch, :hidden]
                   .astype(out_dtype))
    return output, final_state


# ---------------------------------------------------------------------------
# Deterministic parameter init (PyTorch nn.RNN style: U(-1/sqrt(H), 1/sqrt(H))).
# ---------------------------------------------------------------------------
def init_params(key, xt_size, ht_size, num_layers, dtype=jnp.float32):
    k = 1.0 / math.sqrt(ht_size)
    params = []
    for l in range(num_layers):
        d_in = xt_size if l == 0 else 2 * ht_size
        dir_params = []
        for _ in range(2):  # forward, backward
            key, k1, k2, k3, k4 = jax.random.split(key, 5)
            w_ih = jax.random.uniform(k1, (ht_size, d_in), dtype, -k, k)
            w_hh = jax.random.uniform(k2, (ht_size, ht_size), dtype, -k, k)
            b_ih = jax.random.uniform(k3, (ht_size,), dtype, -k, k)
            b_hh = jax.random.uniform(k4, (ht_size,), dtype, -k, k)
            # pre-transpose weights, fuse biases (kernel layout)
            dir_params.append((w_ih.T, w_hh.T, b_ih + b_hh))
        params.append(tuple(dir_params))
    return params


# ---------------------------------------------------------------------------
# Pure-JAX reference (lax.scan) for correctness checking.
# ---------------------------------------------------------------------------
def birnn_reference(x, h0, params, num_layers):
    dotp = functools.partial(jnp.dot, precision=jax.lax.Precision.HIGHEST)
    layer_in = x
    finals = []
    for l in range(num_layers):
        def make_step(w_ih_t, w_hh_t, b):
            def step(h, xt):
                h_new = jnp.tanh(dotp(xt, w_ih_t) + dotp(h, w_hh_t) + b)
                return h_new, h_new
            return step

        (wf, uf, bf), (wb, ub, bb) = params[l]
        hf, out_f = lax.scan(make_step(wf, uf, bf), h0[2 * l], layer_in)
        hb, out_b_rev = lax.scan(make_step(wb, ub, bb), h0[2 * l + 1],
                                 jnp.flip(layer_in, axis=0))
        out_b = jnp.flip(out_b_rev, axis=0)
        layer_in = jnp.concatenate([out_f, out_b], axis=-1)
        finals.append(hf)
        finals.append(hb)
    return layer_in, jnp.stack(finals, axis=0)


if __name__ == "__main__":
    xt_size, ht_size, num_layers = 16, 32, 2
    seq_len, batch = 8, 2

    key = jax.random.PRNGKey(0)
    key, kx, kh = jax.random.split(key, 3)

    a_batch_of_seqs = jax.random.normal(kx, (seq_len, batch, xt_size),
                                        jnp.float32)
    initial_states = jax.random.normal(kh, (num_layers * 2, batch, ht_size),
                                       jnp.float32)
    params = init_params(key, xt_size, ht_size, num_layers)

    fwd = jax.jit(functools.partial(birnn_forward, num_layers=num_layers))
    output, final_state = fwd(a_batch_of_seqs, initial_states, params)
    jax.block_until_ready((output, final_state))

    # pure-JAX f32 reference; kernel uses bf16 slab/weight storage with f32
    # accumulation, so use a bf16-appropriate tolerance.
    ref_out, ref_final = birnn_reference(a_batch_of_seqs, initial_states,
                                         params, num_layers)
    assert output.shape == (seq_len, batch, 2 * ht_size)
    assert final_state.shape == (num_layers * 2, batch, ht_size)
    tol = dict(atol=3e-2, rtol=3e-2)
    assert jnp.allclose(output, ref_out, **tol), \
        float(jnp.max(jnp.abs(output - ref_out)))
    assert jnp.allclose(final_state, ref_final, **tol), \
        float(jnp.max(jnp.abs(final_state - ref_final)))

    # also exercise the masked-tail path (t_blk=3 does not divide T=8)
    fwd_tail = jax.jit(functools.partial(birnn_forward, num_layers=num_layers,
                                         time_block_cap=3))
    out2, fin2 = fwd_tail(a_batch_of_seqs, initial_states, params)
    jax.block_until_ready((out2, fin2))
    assert jnp.allclose(out2, ref_out, **tol), \
        float(jnp.max(jnp.abs(out2 - ref_out)))
    assert jnp.allclose(fin2, ref_final, **tol), \
        float(jnp.max(jnp.abs(fin2 - ref_final)))

    print("KERNEL_OK")
</pallas_src>

<mosaic_0001>
module attributes {stable_mosaic.version = 11 : i64} {
  func.func @_birnn_layer_kernel(%arg0: i32, %arg1: memref<8x16x128xbf16, #tpu.memory_space<vmem>>, %arg2: memref<8x16x128xbf16, #tpu.memory_space<vmem>>, %arg3: memref<2x16x128xf32, #tpu.memory_space<vmem>>, %arg4: memref<2x128x128xbf16, #tpu.memory_space<vmem>>, %arg5: memref<8x16x128xbf16, #tpu.memory_space<vmem>>, %arg6: memref<8x16x128xbf16, #tpu.memory_space<vmem>>, %arg7: memref<2x16x128xf32, #tpu.memory_space<vmem>>, %arg8: memref<16x128xf32, #tpu.memory_space<vmem>>, %arg9: memref<16x128xf32, #tpu.memory_space<vmem>>) attributes {dimension_semantics = [#tpu.dimension_semantics<arbitrary>], iteration_bounds = array<i64: 1>, scalar_prefetch = 0 : i64, scratch_operands = 2 : i64, tpu.core_type = #tpu.core_type<tc>, window_params = [{transform_indices = @transform_0, window_bounds = array<i64: 8, 16, 128>}, {transform_indices = @transform_1, window_bounds = array<i64: 8, 16, 128>}, {pipeline_mode = #tpu.pipeline_mode<synchronous>, transform_indices = @transform_2, window_bounds = array<i64: 2, 16, 128>}, {pipeline_mode = #tpu.pipeline_mode<synchronous>, transform_indices = @transform_3, window_bounds = array<i64: 2, 128, 128>}, {transform_indices = @transform_4, window_bounds = array<i64: 8, 16, 128>}, {transform_indices = @transform_5, window_bounds = array<i64: 8, 16, 128>}, {pipeline_mode = #tpu.pipeline_mode<synchronous>, transform_indices = @transform_6, window_bounds = array<i64: 2, 16, 128>}]} {
    %c0_i32 = arith.constant 0 : i32
    %0 = arith.cmpi eq, %arg0, %c0_i32 : i32
    %1 = arith.extui %0 : i1 to i32
    %c0_i32_0 = arith.constant 0 : i32
    %2 = arith.cmpi ne, %1, %c0_i32_0 : i32
    scf.if %2 {
      %c0_159 = arith.constant 0 : index
      %c0_160 = arith.constant 0 : index
      %c0_161 = arith.constant 0 : index
      %258 = vector.load %arg3[%c0_159, %c0_160, %c0_161] : memref<2x16x128xf32, #tpu.memory_space<vmem>>, vector<1x16x128xf32>
      %259 = vector.shape_cast %258 : vector<1x16x128xf32> to vector<16x128xf32>
      %c0_162 = arith.constant 0 : index
      %c0_163 = arith.constant 0 : index
      %260 = vector.load %arg8[%c0_162, %c0_163] : memref<16x128xf32, #tpu.memory_space<vmem>>, vector<16x128xf32>
      tpu.vector_store %arg8[%c0_162, %c0_163], %259 {strides = array<i32>} : memref<16x128xf32, #tpu.memory_space<vmem>>, vector<16x128xf32>,
      %c1_164 = arith.constant 1 : index
      %c0_165 = arith.constant 0 : index
      %c0_166 = arith.constant 0 : index
      %261 = vector.load %arg3[%c1_164, %c0_165, %c0_166] : memref<2x16x128xf32, #tpu.memory_space<vmem>>, vector<1x16x128xf32>
      %262 = vector.shape_cast %261 : vector<1x16x128xf32> to vector<16x128xf32>
      %c0_167 = arith.constant 0 : index
      %c0_168 = arith.constant 0 : index
      %263 = vector.load %arg9[%c0_167, %c0_168] : memref<16x128xf32, #tpu.memory_space<vmem>>, vector<16x128xf32>
      tpu.vector_store %arg9[%c0_167, %c0_168], %262 {strides = array<i32>} : memref<16x128xf32, #tpu.memory_space<vmem>>, vector<16x128xf32>,
    } else {
    }
    %c0 = arith.constant 0 : index
    %c0_1 = arith.constant 0 : index
    %c0_2 = arith.constant 0 : index
    %3 = vector.load %arg4[%c0, %c0_1, %c0_2] : memref<2x128x128xbf16, #tpu.memory_space<vmem>>, vector<1x128x128xbf16>
    %4 = vector.shape_cast %3 : vector<1x128x128xbf16> to vector<128x128xbf16>
    %c1 = arith.constant 1 : index
    %c0_3 = arith.constant 0 : index
    %c0_4 = arith.constant 0 : index
    %5 = vector.load %arg4[%c1, %c0_3, %c0_4] : memref<2x128x128xbf16, #tpu.memory_space<vmem>>, vector<1x128x128xbf16>
    %6 = vector.shape_cast %5 : vector<1x128x128xbf16> to vector<128x128xbf16>
    %c0_i32_5 = arith.constant 0 : i32
    %c0_6 = arith.constant 0 : index
    %c0_7 = arith.constant 0 : index
    %7 = vector.load %arg8[%c0_6, %c0_7] : memref<16x128xf32, #tpu.memory_space<vmem>>, vector<16x128xf32>
    %8 = arith.index_cast %c0_i32_5 : i32 to index
    %c0_8 = arith.constant 0 : index
    %c0_9 = arith.constant 0 : index
    %9 = vector.load %arg1[%8, %c0_8, %c0_9] : memref<8x16x128xbf16, #tpu.memory_space<vmem>>, vector<1x16x128xbf16>
    %10 = vector.shape_cast %9 : vector<1x16x128xbf16> to vector<16x128xbf16>
    %11 = arith.extf %10 : vector<16x128xbf16> to vector<16x128xf32>
    %12 = arith.truncf %7 : vector<16x128xf32> to vector<16x128xbf16>
    %cst = arith.constant dense<0.000000e+00> : vector<16x128xf32>
    %13 = tpu.matmul %12, %4, %cst {dimension_numbers = #tpu.dot_dimension_numbers<[1], [0], [0], [1], [0, 0, 1, 1], [], []>} : vector<16x128xbf16>, vector<128x128xbf16>, vector<16x128xf32> -> vector<16x128xf32>
    %14 = arith.addf %11, %13 : vector<16x128xf32>
    %15 = math.tanh %14 : vector<16x128xf32>
    %c0_10 = arith.constant 0 : index
    %c0_11 = arith.constant 0 : index
    %16 = vector.load %arg8[%c0_10, %c0_11] : memref<16x128xf32, #tpu.memory_space<vmem>>, vector<16x128xf32>
    tpu.vector_store %arg8[%c0_10, %c0_11], %15 {strides = array<i32>} : memref<16x128xf32, #tpu.memory_space<vmem>>, vector<16x128xf32>,
    %17 = arith.truncf %15 : vector<16x128xf32> to vector<16x128xbf16>
    %18 = arith.index_cast %c0_i32_5 : i32 to index
    %c0_12 = arith.constant 0 : index
    %c0_13 = arith.constant 0 : index
    %19 = vector.load %arg5[%18, %c0_12, %c0_13] : memref<8x16x128xbf16, #tpu.memory_space<vmem>>, vector<1x16x128xbf16>
    %20 = vector.shape_cast %19 : vector<1x16x128xbf16> to vector<16x128xbf16>
    %21 = vector.shape_cast %17 : vector<16x128xbf16> to vector<1x16x128xbf16>
    tpu.vector_store %arg5[%18, %c0_12, %c0_13], %21 {strides = array<i32>} : memref<8x16x128xbf16, #tpu.memory_space<vmem>>, vector<1x16x128xbf16>,
    %c7_i32 = arith.constant 7 : i32
    %22 = arith.subi %c7_i32, %c0_i32_5 : i32
    %c0_14 = arith.constant 0 : index
    %c0_15 = arith.constant 0 : index
    %23 = vector.load %arg9[%c0_14, %c0_15] : memref<16x128xf32, #tpu.memory_space<vmem>>, vector<16x128xf32>
    %24 = arith.index_cast %22 : i32 to index
    %c0_16 = arith.constant 0 : index
    %c0_17 = arith.constant 0 : index
    %25 = vector.load %arg2[%24, %c0_16, %c0_17] : memref<8x16x128xbf16, #tpu.memory_space<vmem>>, vector<1x16x128xbf16>
    %26 = vector.shape_cast %25 : vector<1x16x128xbf16> to vector<16x128xbf16>
    %27 = arith.extf %26 : vector<16x128xbf16> to vector<16x128xf32>
    %28 = arith.truncf %23 : vector<16x128xf32> to vector<16x128xbf16>
    %cst_18 = arith.constant dense<0.000000e+00> : vector<16x128xf32>
    %29 = tpu.matmul %28, %6, %cst_18 {dimension_numbers = #tpu.dot_dimension_numbers<[1], [0], [0], [1], [0, 0, 1, 1], [], []>} : vector<16x128xbf16>, vector<128x128xbf16>, vector<16x128xf32> -> vector<16x128xf32>
    %30 = arith.addf %27, %29 : vector<16x128xf32>
    %31 = math.tanh %30 : vector<16x128xf32>
    %c0_19 = arith.constant 0 : index
    %c0_20 = arith.constant 0 : index
    %32 = vector.load %arg9[%c0_19, %c0_20] : memref<16x128xf32, #tpu.memory_space<vmem>>, vector<16x128xf32>
    tpu.vector_store %arg9[%c0_19, %c0_20], %31 {strides = array<i32>} : memref<16x128xf32, #tpu.memory_space<vmem>>, vector<16x128xf32>,
    %33 = arith.truncf %31 : vector<16x128xf32> to vector<16x128xbf16>
    %34 = arith.index_cast %22 : i32 to index
    %c0_21 = arith.constant 0 : index
    %c0_22 = arith.constant 0 : index
    %35 = vector.load %arg6[%34, %c0_21, %c0_22] : memref<8x16x128xbf16, #tpu.memory_space<vmem>>, vector<1x16x128xbf16>
    %36 = vector.shape_cast %35 : vector<1x16x128xbf16> to vector<16x128xbf16>
    %37 = vector.shape_cast %33 : vector<16x128xbf16> to vector<1x16x128xbf16>
    tpu.vector_store %arg6[%34, %c0_21, %c0_22], %37 {strides = array<i32>} : memref<8x16x128xbf16, #tpu.memory_space<vmem>>, vector<1x16x128xbf16>,
    %c1_i32 = arith.constant 1 : i32
    %c0_23 = arith.constant 0 : index
    %c0_24 = arith.constant 0 : index
    %38 = vector.load %arg8[%c0_23, %c0_24] : memref<16x128xf32, #tpu.memory_space<vmem>>, vector<16x128xf32>
    %39 = arith.index_cast %c1_i32 : i32 to index
    %c0_25 = arith.constant 0 : index
    %c0_26 = arith.constant 0 : index
    %40 = vector.load %arg1[%39, %c0_25, %c0_26] : memref<8x16x128xbf16, #tpu.memory_space<vmem>>, vector<1x16x128xbf16>
    %41 = vector.shape_cast %40 : vector<1x16x128xbf16> to vector<16x128xbf16>
    %42 = arith.extf %41 : vector<16x128xbf16> to vector<16x128xf32>
    %43 = arith.truncf %38 : vector<16x128xf32> to vector<16x128xbf16>
    %cst_27 = arith.constant dense<0.000000e+00> : vector<16x128xf32>
    %44 = tpu.matmul %43, %4, %cst_27 {dimension_numbers = #tpu.dot_dimension_numbers<[1], [0], [0], [1], [0, 0, 1, 1], [], []>} : vector<16x128xbf16>, vector<128x128xbf16>, vector<16x128xf32> -> vector<16x128xf32>
    %45 = arith.addf %42, %44 : vector<16x128xf32>
    %46 = math.tanh %45 : vector<16x128xf32>
    %c0_28 = arith.constant 0 : index
    %c0_29 = arith.constant 0 : index
    %47 = vector.load %arg8[%c0_28, %c0_29] : memref<16x128xf32, #tpu.memory_space<vmem>>, vector<16x128xf32>
    tpu.vector_store %arg8[%c0_28, %c0_29], %46 {strides = array<i32>} : memref<16x128xf32, #tpu.memory_space<vmem>>, vector<16x128xf32>,
    %48 = arith.truncf %46 : vector<16x128xf32> to vector<16x128xbf16>
    %49 = arith.index_cast %c1_i32 : i32 to index
    %c0_30 = arith.constant 0 : index
    %c0_31 = arith.constant 0 : index
    %50 = vector.load %arg5[%49, %c0_30, %c0_31] : memref<8x16x128xbf16, #tpu.memory_space<vmem>>, vector<1x16x128xbf16>
    %51 = vector.shape_cast %50 : vector<1x16x128xbf16> to vector<16x128xbf16>
    %52 = vector.shape_cast %48 : vector<16x128xbf16> to vector<1x16x128xbf16>
    tpu.vector_store %arg5[%49, %c0_30, %c0_31], %52 {strides = array<i32>} : memref<8x16x128xbf16, #tpu.memory_space<vmem>>, vector<1x16x128xbf16>,
    %c7_i32_32 = arith.constant 7 : i32
    %53 = arith.subi %c7_i32_32, %c1_i32 : i32
    %c0_33 = arith.constant 0 : index
    %c0_34 = arith.constant 0 : index
    %54 = vector.load %arg9[%c0_33, %c0_34] : memref<16x128xf32, #tpu.memory_space<vmem>>, vector<16x128xf32>
    %55 = arith.index_cast %53 : i32 to index
    %c0_35 = arith.constant 0 : index
    %c0_36 = arith.constant 0 : index
    %56 = vector.load %arg2[%55, %c0_35, %c0_36] : memref<8x16x128xbf16, #tpu.memory_space<vmem>>, vector<1x16x128xbf16>
    %57 = vector.shape_cast %56 : vector<1x16x128xbf16> to vector<16x128xbf16>
    %58 = arith.extf %57 : vector<16x128xbf16> to vector<16x128xf32>
    %59 = arith.truncf %54 : vector<16x128xf32> to vector<16x128xbf16>
    %cst_37 = arith.constant dense<0.000000e+00> : vector<16x128xf32>
    %60 = tpu.matmul %59, %6, %cst_37 {dimension_numbers = #tpu.dot_dimension_numbers<[1], [0], [0], [1], [0, 0, 1, 1], [], []>} : vector<16x128xbf16>, vector<128x128xbf16>, vector<16x128xf32> -> vector<16x128xf32>
    %61 = arith.addf %58, %60 : vector<16x128xf32>
    %62 = math.tanh %61 : vector<16x128xf32>
    %c0_38 = arith.constant 0 : index
    %c0_39 = arith.constant 0 : index
    %63 = vector.load %arg9[%c0_38, %c0_39] : memref<16x128xf32, #tpu.memory_space<vmem>>, vector<16x128xf32>
    tpu.vector_store %arg9[%c0_38, %c0_39], %62 {strides = array<i32>} : memref<16x128xf32, #tpu.memory_space<vmem>>, vector<16x128xf32>,
    %64 = arith.truncf %62 : vector<16x128xf32> to vector<16x128xbf16>
    %65 = arith.index_cast %53 : i32 to index
    %c0_40 = arith.constant 0 : index
    %c0_41 = arith.constant 0 : index
    %66 = vector.load %arg6[%65, %c0_40, %c0_41] : memref<8x16x128xbf16, #tpu.memory_space<vmem>>, vector<1x16x128xbf16>
    %67 = vector.shape_cast %66 : vector<1x16x128xbf16> to vector<16x128xbf16>
    %68 = vector.shape_cast %64 : vector<16x128xbf16> to vector<1x16x128xbf16>
    tpu.vector_store %arg6[%65, %c0_40, %c0_41], %68 {strides = array<i32>} : memref<8x16x128xbf16, #tpu.memory_space<vmem>>, vector<1x16x128xbf16>,
    %c2_i32 = arith.constant 2 : i32
    %c0_42 = arith.constant 0 : index
    %c0_43 = arith.constant 0 : index
    %69 = vector.load %arg8[%c0_42, %c0_43] : memref<16x128xf32, #tpu.memory_space<vmem>>, vector<16x128xf32>
    %70 = arith.index_cast %c2_i32 : i32 to index
    %c0_44 = arith.constant 0 : index
    %c0_45 = arith.constant 0 : index
    %71 = vector.load %arg1[%70, %c0_44, %c0_45] : memref<8x16x128xbf16, #tpu.memory_space<vmem>>, vector<1x16x128xbf16>
    %72 = vector.shape_cast %71 : vector<1x16x128xbf16> to vector<16x128xbf16>
    %73 = arith.extf %72 : vector<16x128xbf16> to vector<16x128xf32>
    %74 = arith.truncf %69 : vector<16x128xf32> to vector<16x128xbf16>
    %cst_46 = arith.constant dense<0.000000e+00> : vector<16x128xf32>
    %75 = tpu.matmul %74, %4, %cst_46 {dimension_numbers = #tpu.dot_dimension_numbers<[1], [0], [0], [1], [0, 0, 1, 1], [], []>} : vector<16x128xbf16>, vector<128x128xbf16>, vector<16x128xf32> -> vector<16x128xf32>
    %76 = arith.addf %73, %75 : vector<16x128xf32>
    %77 = math.tanh %76 : vector<16x128xf32>
    %c0_47 = arith.constant 0 : index
    %c0_48 = arith.constant 0 : index
    %78 = vector.load %arg8[%c0_47, %c0_48] : memref<16x128xf32, #tpu.memory_space<vmem>>, vector<16x128xf32>
    tpu.vector_store %arg8[%c0_47, %c0_48], %77 {strides = array<i32>} : memref<16x128xf32, #tpu.memory_space<vmem>>, vector<16x128xf32>,
    %79 = arith.truncf %77 : vector<16x128xf32> to vector<16x128xbf16>
    %80 = arith.index_cast %c2_i32 : i32 to index
    %c0_49 = arith.constant 0 : index
    %c0_50 = arith.constant 0 : index
    %81 = vector.load %arg5[%80, %c0_49, %c0_50] : memref<8x16x128xbf16, #tpu.memory_space<vmem>>, vector<1x16x128xbf16>
    %82 = vector.shape_cast %81 : vector<1x16x128xbf16> to vector<16x128xbf16>
    %83 = vector.shape_cast %79 : vector<16x128xbf16> to vector<1x16x128xbf16>
    tpu.vector_store %arg5[%80, %c0_49, %c0_50], %83 {strides = array<i32>} : memref<8x16x128xbf16, #tpu.memory_space<vmem>>, vector<1x16x128xbf16>,
    %c7_i32_51 = arith.constant 7 : i32
    %84 = arith.subi %c7_i32_51, %c2_i32 : i32
    %c0_52 = arith.constant 0 : index
    %c0_53 = arith.constant 0 : index
    %85 = vector.load %arg9[%c0_52, %c0_53] : memref<16x128xf32, #tpu.memory_space<vmem>>, vector<16x128xf32>
    %86 = arith.index_cast %84 : i32 to index
    %c0_54 = arith.constant 0 : index
    %c0_55 = arith.constant 0 : index
    %87 = vector.load %arg2[%86, %c0_54, %c0_55] : memref<8x16x128xbf16, #tpu.memory_space<vmem>>, vector<1x16x128xbf16>
    %88 = vector.shape_cast %87 : vector<1x16x128xbf16> to vector<16x128xbf16>
    %89 = arith.extf %88 : vector<16x128xbf16> to vector<16x128xf32>
    %90 = arith.truncf %85 : vector<16x128xf32> to vector<16x128xbf16>
    %cst_56 = arith.constant dense<0.000000e+00> : vector<16x128xf32>
    %91 = tpu.matmul %90, %6, %cst_56 {dimension_numbers = #tpu.dot_dimension_numbers<[1], [0], [0], [1], [0, 0, 1, 1], [], []>} : vector<16x128xbf16>, vector<128x128xbf16>, vector<16x128xf32> -> vector<16x128xf32>
    %92 = arith.addf %89, %91 : vector<16x128xf32>
    %93 = math.tanh %92 : vector<16x128xf32>
    %c0_57 = arith.constant 0 : index
    %c0_58 = arith.constant 0 : index
    %94 = vector.load %arg9[%c0_57, %c0_58] : memref<16x128xf32, #tpu.memory_space<vmem>>, vector<16x128xf32>
    tpu.vector_store %arg9[%c0_57, %c0_58], %93 {strides = array<i32>} : memref<16x128xf32, #tpu.memory_space<vmem>>, vector<16x128xf32>,
    %95 = arith.truncf %93 : vector<16x128xf32> to vector<16x128xbf16>
    %96 = arith.index_cast %84 : i32 to index
    %c0_59 = arith.constant 0 : index
    %c0_60 = arith.constant 0 : index
    %97 = vector.load %arg6[%96, %c0_59, %c0_60] : memref<8x16x128xbf16, #tpu.memory_space<vmem>>, vector<1x16x128xbf16>
    %98 = vector.shape_cast %97 : vector<1x16x128xbf16> to vector<16x128xbf16>
    %99 = vector.shape_cast %95 : vector<16x128xbf16> to vector<1x16x128xbf16>
    tpu.vector_store %arg6[%96, %c0_59, %c0_60], %99 {strides = array<i32>} : memref<8x16x128xbf16, #tpu.memory_space<vmem>>, vector<1x16x128xbf16>,
    %c3_i32 = arith.constant 3 : i32
    %c0_61 = arith.constant 0 : index
    %c0_62 = arith.constant 0 : index
    %100 = vector.load %arg8[%c0_61, %c0_62] : memref<16x128xf32, #tpu.memory_space<vmem>>, vector<16x128xf32>
    %101 = arith.index_cast %c3_i32 : i32 to index
    %c0_63 = arith.constant 0 : index
    %c0_64 = arith.constant 0 : index
    %102 = vector.load %arg1[%101, %c0_63, %c0_64] : memref<8x16x128xbf16, #tpu.memory_space<vmem>>, vector<1x16x128xbf16>
    %103 = vector.shape_cast %102 : vector<1x16x128xbf16> to vector<16x128xbf16>
    %104 = arith.extf %103 : vector<16x128xbf16> to vector<16x128xf32>
    %105 = arith.truncf %100 : vector<16x128xf32> to vector<16x128xbf16>
    %cst_65 = arith.constant dense<0.000000e+00> : vector<16x128xf32>
    %106 = tpu.matmul %105, %4, %cst_65 {dimension_numbers = #tpu.dot_dimension_numbers<[1], [0], [0], [1], [0, 0, 1, 1], [], []>} : vector<16x128xbf16>, vector<128x128xbf16>, vector<16x128xf32> -> vector<16x128xf32>
    %107 = arith.addf %104, %106 : vector<16x128xf32>
    %108 = math.tanh %107 : vector<16x128xf32>
    %c0_66 = arith.constant 0 : index
    %c0_67 = arith.constant 0 : index
    %109 = vector.load %arg8[%c0_66, %c0_67] : memref<16x128xf32, #tpu.memory_space<vmem>>, vector<16x128xf32>
    tpu.vector_store %arg8[%c0_66, %c0_67], %108 {strides = array<i32>} : memref<16x128xf32, #tpu.memory_space<vmem>>, vector<16x128xf32>,
    %110 = arith.truncf %108 : vector<16x128xf32> to vector<16x128xbf16>
    %111 = arith.index_cast %c3_i32 : i32 to index
    %c0_68 = arith.constant 0 : index
    %c0_69 = arith.constant 0 : index
    %112 = vector.load %arg5[%111, %c0_68, %c0_69] : memref<8x16x128xbf16, #tpu.memory_space<vmem>>, vector<1x16x128xbf16>
    %113 = vector.shape_cast %112 : vector<1x16x128xbf16> to vector<16x128xbf16>
    %114 = vector.shape_cast %110 : vector<16x128xbf16> to vector<1x16x128xbf16>
    tpu.vector_store %arg5[%111, %c0_68, %c0_69], %114 {strides = array<i32>} : memref<8x16x128xbf16, #tpu.memory_space<vmem>>, vector<1x16x128xbf16>,
    %c7_i32_70 = arith.constant 7 : i32
    %115 = arith.subi %c7_i32_70, %c3_i32 : i32
    %c0_71 = arith.constant 0 : index
    %c0_72 = arith.constant 0 : index
    %116 = vector.load %arg9[%c0_71, %c0_72] : memref<16x128xf32, #tpu.memory_space<vmem>>, vector<16x128xf32>
    %117 = arith.index_cast %115 : i32 to index
    %c0_73 = arith.constant 0 : index
    %c0_74 = arith.constant 0 : index
    %118 = vector.load %arg2[%117, %c0_73, %c0_74] : memref<8x16x128xbf16, #tpu.memory_space<vmem>>, vector<1x16x128xbf16>
    %119 = vector.shape_cast %118 : vector<1x16x128xbf16> to vector<16x128xbf16>
    %120 = arith.extf %119 : vector<16x128xbf16> to vector<16x128xf32>
    %121 = arith.truncf %116 : vector<16x128xf32> to vector<16x128xbf16>
    %cst_75 = arith.constant dense<0.000000e+00> : vector<16x128xf32>
    %122 = tpu.matmul %121, %6, %cst_75 {dimension_numbers = #tpu.dot_dimension_numbers<[1], [0], [0], [1], [0, 0, 1, 1], [], []>} : vector<16x128xbf16>, vector<128x128xbf16>, vector<16x128xf32> -> vector<16x128xf32>
    %123 = arith.addf %120, %122 : vector<16x128xf32>
    %124 = math.tanh %123 : vector<16x128xf32>
    %c0_76 = arith.constant 0 : index
    %c0_77 = arith.constant 0 : index
    %125 = vector.load %arg9[%c0_76, %c0_77] : memref<16x128xf32, #tpu.memory_space<vmem>>, vector<16x128xf32>
    tpu.vector_store %arg9[%c0_76, %c0_77], %124 {strides = array<i32>} : memref<16x128xf32, #tpu.memory_space<vmem>>, vector<16x128xf32>,
    %126 = arith.truncf %124 : vector<16x128xf32> to vector<16x128xbf16>
    %127 = arith.index_cast %115 : i32 to index
    %c0_78 = arith.constant 0 : index
    %c0_79 = arith.constant 0 : index
    %128 = vector.load %arg6[%127, %c0_78, %c0_79] : memref<8x16x128xbf16, #tpu.memory_space<vmem>>, vector<1x16x128xbf16>
    %129 = vector.shape_cast %128 : vector<1x16x128xbf16> to vector<16x128xbf16>
    %130 = vector.shape_cast %126 : vector<16x128xbf16> to vector<1x16x128xbf16>
    tpu.vector_store %arg6[%127, %c0_78, %c0_79], %130 {strides = array<i32>} : memref<8x16x128xbf16, #tpu.memory_space<vmem>>, vector<1x16x128xbf16>,
    %c4_i32 = arith.constant 4 : i32
    %c0_80 = arith.constant 0 : index
    %c0_81 = arith.constant 0 : index
    %131 = vector.load %arg8[%c0_80, %c0_81] : memref<16x128xf32, #tpu.memory_space<vmem>>, vector<16x128xf32>
    %132 = arith.index_cast %c4_i32 : i32 to index
    %c0_82 = arith.constant 0 : index
    %c0_83 = arith.constant 0 : index
    %133 = vector.load %arg1[%132, %c0_82, %c0_83] : memref<8x16x128xbf16, #tpu.memory_space<vmem>>, vector<1x16x128xbf16>
    %134 = vector.shape_cast %133 : vector<1x16x128xbf16> to vector<16x128xbf16>
    %135 = arith.extf %134 : vector<16x128xbf16> to vector<16x128xf32>
    %136 = arith.truncf %131 : vector<16x128xf32> to vector<16x128xbf16>
    %cst_84 = arith.constant dense<0.000000e+00> : vector<16x128xf32>
    %137 = tpu.matmul %136, %4, %cst_84 {dimension_numbers = #tpu.dot_dimension_numbers<[1], [0], [0], [1], [0, 0, 1, 1], [], []>} : vector<16x128xbf16>, vector<128x128xbf16>, vector<16x128xf32> -> vector<16x128xf32>
    %138 = arith.addf %135, %137 : vector<16x128xf32>
    %139 = math.tanh %138 : vector<16x128xf32>
    %c0_85 = arith.constant 0 : index
    %c0_86 = arith.constant 0 : index
    %140 = vector.load %arg8[%c0_85, %c0_86] : memref<16x128xf32, #tpu.memory_space<vmem>>, vector<16x128xf32>
    tpu.vector_store %arg8[%c0_85, %c0_86], %139 {strides = array<i32>} : memref<16x128xf32, #tpu.memory_space<vmem>>, vector<16x128xf32>,
    %141 = arith.truncf %139 : vector<16x128xf32> to vector<16x128xbf16>
    %142 = arith.index_cast %c4_i32 : i32 to index
    %c0_87 = arith.constant 0 : index
    %c0_88 = arith.constant 0 : index
    %143 = vector.load %arg5[%142, %c0_87, %c0_88] : memref<8x16x128xbf16, #tpu.memory_space<vmem>>, vector<1x16x128xbf16>
    %144 = vector.shape_cast %143 : vector<1x16x128xbf16> to vector<16x128xbf16>
    %145 = vector.shape_cast %141 : vector<16x128xbf16> to vector<1x16x128xbf16>
    tpu.vector_store %arg5[%142, %c0_87, %c0_88], %145 {strides = array<i32>} : memref<8x16x128xbf16, #tpu.memory_space<vmem>>, vector<1x16x128xbf16>,
    %c7_i32_89 = arith.constant 7 : i32
    %146 = arith.subi %c7_i32_89, %c4_i32 : i32
    %c0_90 = arith.constant 0 : index
    %c0_91 = arith.constant 0 : index
    %147 = vector.load %arg9[%c0_90, %c0_91] : memref<16x128xf32, #tpu.memory_space<vmem>>, vector<16x128xf32>
    %148 = arith.index_cast %146 : i32 to index
    %c0_92 = arith.constant 0 : index
    %c0_93 = arith.constant 0 : index
    %149 = vector.load %arg2[%148, %c0_92, %c0_93] : memref<8x16x128xbf16, #tpu.memory_space<vmem>>, vector<1x16x128xbf16>
    %150 = vector.shape_cast %149 : vector<1x16x128xbf16> to vector<16x128xbf16>
    %151 = arith.extf %150 : vector<16x128xbf16> to vector<16x128xf32>
    %152 = arith.truncf %147 : vector<16x128xf32> to vector<16x128xbf16>
    %cst_94 = arith.constant dense<0.000000e+00> : vector<16x128xf32>
    %153 = tpu.matmul %152, %6, %cst_94 {dimension_numbers = #tpu.dot_dimension_numbers<[1], [0], [0], [1], [0, 0, 1, 1], [], []>} : vector<16x128xbf16>, vector<128x128xbf16>, vector<16x128xf32> -> vector<16x128xf32>
    %154 = arith.addf %151, %153 : vector<16x128xf32>
    %155 = math.tanh %154 : vector<16x128xf32>
    %c0_95 = arith.constant 0 : index
    %c0_96 = arith.constant 0 : index
    %156 = vector.load %arg9[%c0_95, %c0_96] : memref<16x128xf32, #tpu.memory_space<vmem>>, vector<16x128xf32>
    tpu.vector_store %arg9[%c0_95, %c0_96], %155 {strides = array<i32>} : memref<16x128xf32, #tpu.memory_space<vmem>>, vector<16x128xf32>,
    %157 = arith.truncf %155 : vector<16x128xf32> to vector<16x128xbf16>
    %158 = arith.index_cast %146 : i32 to index
    %c0_97 = arith.constant 0 : index
    %c0_98 = arith.constant 0 : index
    %159 = vector.load %arg6[%158, %c0_97, %c0_98] : memref<8x16x128xbf16, #tpu.memory_space<vmem>>, vector<1x16x128xbf16>
    %160 = vector.shape_cast %159 : vector<1x16x128xbf16> to vector<16x128xbf16>
    %161 = vector.shape_cast %157 : vector<16x128xbf16> to vector<1x16x128xbf16>
    tpu.vector_store %arg6[%158, %c0_97, %c0_98], %161 {strides = array<i32>} : memref<8x16x128xbf16, #tpu.memory_space<vmem>>, vector<1x16x128xbf16>,
    %c5_i32 = arith.constant 5 : i32
    %c0_99 = arith.constant 0 : index
    %c0_100 = arith.constant 0 : index
    %162 = vector.load %arg8[%c0_99, %c0_100] : memref<16x128xf32, #tpu.memory_space<vmem>>, vector<16x128xf32>
    %163 = arith.index_cast %c5_i32 : i32 to index
    %c0_101 = arith.constant 0 : index
    %c0_102 = arith.constant 0 : index
    %164 = vector.load %arg1[%163, %c0_101, %c0_102] : memref<8x16x128xbf16, #tpu.memory_space<vmem>>, vector<1x16x128xbf16>
    %165 = vector.shape_cast %164 : vector<1x16x128xbf16> to vector<16x128xbf16>
    %166 = arith.extf %165 : vector<16x128xbf16> to vector<16x128xf32>
    %167 = arith.truncf %162 : vector<16x128xf32> to vector<16x128xbf16>
    %cst_103 = arith.constant dense<0.000000e+00> : vector<16x128xf32>
    %168 = tpu.matmul %167, %4, %cst_103 {dimension_numbers = #tpu.dot_dimension_numbers<[1], [0], [0], [1], [0, 0, 1, 1], [], []>} : vector<16x128xbf16>, vector<128x128xbf16>, vector<16x128xf32> -> vector<16x128xf32>
    %169 = arith.addf %166, %168 : vector<16x128xf32>
    %170 = math.tanh %169 : vector<16x128xf32>
    %c0_104 = arith.constant 0 : index
    %c0_105 = arith.constant 0 : index
    %171 = vector.load %arg8[%c0_104, %c0_105] : memref<16x128xf32, #tpu.memory_space<vmem>>, vector<16x128xf32>
    tpu.vector_store %arg8[%c0_104, %c0_105], %170 {strides = array<i32>} : memref<16x128xf32, #tpu.memory_space<vmem>>, vector<16x128xf32>,
    %172 = arith.truncf %170 : vector<16x128xf32> to vector<16x128xbf16>
    %173 = arith.index_cast %c5_i32 : i32 to index
    %c0_106 = arith.constant 0 : index
    %c0_107 = arith.constant 0 : index
    %174 = vector.load %arg5[%173, %c0_106, %c0_107] : memref<8x16x128xbf16, #tpu.memory_space<vmem>>, vector<1x16x128xbf16>
    %175 = vector.shape_cast %174 : vector<1x16x128xbf16> to vector<16x128xbf16>
    %176 = vector.shape_cast %172 : vector<16x128xbf16> to vector<1x16x128xbf16>
    tpu.vector_store %arg5[%173, %c0_106, %c0_107], %176 {strides = array<i32>} : memref<8x16x128xbf16, #tpu.memory_space<vmem>>, vector<1x16x128xbf16>,
    %c7_i32_108 = arith.constant 7 : i32
    %177 = arith.subi %c7_i32_108, %c5_i32 : i32
    %c0_109 = arith.constant 0 : index
    %c0_110 = arith.constant 0 : index
    %178 = vector.load %arg9[%c0_109, %c0_110] : memref<16x128xf32, #tpu.memory_space<vmem>>, vector<16x128xf32>
    %179 = arith.index_cast %177 : i32 to index
    %c0_111 = arith.constant 0 : index
    %c0_112 = arith.constant 0 : index
    %180 = vector.load %arg2[%179, %c0_111, %c0_112] : memref<8x16x128xbf16, #tpu.memory_space<vmem>>, vector<1x16x128xbf16>
    %181 = vector.shape_cast %180 : vector<1x16x128xbf16> to vector<16x128xbf16>
    %182 = arith.extf %181 : vector<16x128xbf16> to vector<16x128xf32>
    %183 = arith.truncf %178 : vector<16x128xf32> to vector<16x128xbf16>
    %cst_113 = arith.constant dense<0.000000e+00> : vector<16x128xf32>
    %184 = tpu.matmul %183, %6, %cst_113 {dimension_numbers = #tpu.dot_dimension_numbers<[1], [0], [0], [1], [0, 0, 1, 1], [], []>} : vector<16x128xbf16>, vector<128x128xbf16>, vector<16x128xf32> -> vector<16x128xf32>
    %185 = arith.addf %182, %184 : vector<16x128xf32>
    %186 = math.tanh %185 : vector<16x128xf32>
    %c0_114 = arith.constant 0 : index
    %c0_115 = arith.constant 0 : index
    %187 = vector.load %arg9[%c0_114, %c0_115] : memref<16x128xf32, #tpu.memory_space<vmem>>, vector<16x128xf32>
    tpu.vector_store %arg9[%c0_114, %c0_115], %186 {strides = array<i32>} : memref<16x128xf32, #tpu.memory_space<vmem>>, vector<16x128xf32>,
    %188 = arith.truncf %186 : vector<16x128xf32> to vector<16x128xbf16>
    %189 = arith.index_cast %177 : i32 to index
    %c0_116 = arith.constant 0 : index
    %c0_117 = arith.constant 0 : index
    %190 = vector.load %arg6[%189, %c0_116, %c0_117] : memref<8x16x128xbf16, #tpu.memory_space<vmem>>, vector<1x16x128xbf16>
    %191 = vector.shape_cast %190 : vector<1x16x128xbf16> to vector<16x128xbf16>
    %192 = vector.shape_cast %188 : vector<16x128xbf16> to vector<1x16x128xbf16>
    tpu.vector_store %arg6[%189, %c0_116, %c0_117], %192 {strides = array<i32>} : memref<8x16x128xbf16, #tpu.memory_space<vmem>>, vector<1x16x128xbf16>,
    %c6_i32 = arith.constant 6 : i32
    %c0_118 = arith.constant 0 : index
    %c0_119 = arith.constant 0 : index
    %193 = vector.load %arg8[%c0_118, %c0_119] : memref<16x128xf32, #tpu.memory_space<vmem>>, vector<16x128xf32>
    %194 = arith.index_cast %c6_i32 : i32 to index
    %c0_120 = arith.constant 0 : index
    %c0_121 = arith.constant 0 : index
    %195 = vector.load %arg1[%194, %c0_120, %c0_121] : memref<8x16x128xbf16, #tpu.memory_space<vmem>>, vector<1x16x128xbf16>
    %196 = vector.shape_cast %195 : vector<1x16x128xbf16> to vector<16x128xbf16>
    %197 = arith.extf %196 : vector<16x128xbf16> to vector<16x128xf32>
    %198 = arith.truncf %193 : vector<16x128xf32> to vector<16x128xbf16>
    %cst_122 = arith.constant dense<0.000000e+00> : vector<16x128xf32>
    %199 = tpu.matmul %198, %4, %cst_122 {dimension_numbers = #tpu.dot_dimension_numbers<[1], [0], [0], [1], [0, 0, 1, 1], [], []>} : vector<16x128xbf16>, vector<128x128xbf16>, vector<16x128xf32> -> vector<16x128xf32>
    %200 = arith.addf %197, %199 : vector<16x128xf32>
    %201 = math.tanh %200 : vector<16x128xf32>
    %c0_123 = arith.constant 0 : index
    %c0_124 = arith.constant 0 : index
    %202 = vector.load %arg8[%c0_123, %c0_124] : memref<16x128xf32, #tpu.memory_space<vmem>>, vector<16x128xf32>
    tpu.vector_store %arg8[%c0_123, %c0_124], %201 {strides = array<i32>} : memref<16x128xf32, #tpu.memory_space<vmem>>, vector<16x128xf32>,
    %203 = arith.truncf %201 : vector<16x128xf32> to vector<16x128xbf16>
    %204 = arith.index_cast %c6_i32 : i32 to index
    %c0_125 = arith.constant 0 : index
    %c0_126 = arith.constant 0 : index
    %205 = vector.load %arg5[%204, %c0_125, %c0_126] : memref<8x16x128xbf16, #tpu.memory_space<vmem>>, vector<1x16x128xbf16>
    %206 = vector.shape_cast %205 : vector<1x16x128xbf16> to vector<16x128xbf16>
    %207 = vector.shape_cast %203 : vector<16x128xbf16> to vector<1x16x128xbf16>
    tpu.vector_store %arg5[%204, %c0_125, %c0_126], %207 {strides = array<i32>} : memref<8x16x128xbf16, #tpu.memory_space<vmem>>, vector<1x16x128xbf16>,
    %c7_i32_127 = arith.constant 7 : i32
    %208 = arith.subi %c7_i32_127, %c6_i32 : i32
    %c0_128 = arith.constant 0 : index
    %c0_129 = arith.constant 0 : index
    %209 = vector.load %arg9[%c0_128, %c0_129] : memref<16x128xf32, #tpu.memory_space<vmem>>, vector<16x128xf32>
    %210 = arith.index_cast %208 : i32 to index
    %c0_130 = arith.constant 0 : index
    %c0_131 = arith.constant 0 : index
    %211 = vector.load %arg2[%210, %c0_130, %c0_131] : memref<8x16x128xbf16, #tpu.memory_space<vmem>>, vector<1x16x128xbf16>
    %212 = vector.shape_cast %211 : vector<1x16x128xbf16> to vector<16x128xbf16>
    %213 = arith.extf %212 : vector<16x128xbf16> to vector<16x128xf32>
    %214 = arith.truncf %209 : vector<16x128xf32> to vector<16x128xbf16>
    %cst_132 = arith.constant dense<0.000000e+00> : vector<16x128xf32>
    %215 = tpu.matmul %214, %6, %cst_132 {dimension_numbers = #tpu.dot_dimension_numbers<[1], [0], [0], [1], [0, 0, 1, 1], [], []>} : vector<16x128xbf16>, vector<128x128xbf16>, vector<16x128xf32> -> vector<16x128xf32>
    %216 = arith.addf %213, %215 : vector<16x128xf32>
    %217 = math.tanh %216 : vector<16x128xf32>
    %c0_133 = arith.constant 0 : index
    %c0_134 = arith.constant 0 : index
    %218 = vector.load %arg9[%c0_133, %c0_134] : memref<16x128xf32, #tpu.memory_space<vmem>>, vector<16x128xf32>
    tpu.vector_store %arg9[%c0_133, %c0_134], %217 {strides = array<i32>} : memref<16x128xf32, #tpu.memory_space<vmem>>, vector<16x128xf32>,
    %219 = arith.truncf %217 : vector<16x128xf32> to vector<16x128xbf16>
    %220 = arith.index_cast %208 : i32 to index
    %c0_135 = arith.constant 0 : index
    %c0_136 = arith.constant 0 : index
    %221 = vector.load %arg6[%220, %c0_135, %c0_136] : memref<8x16x128xbf16, #tpu.memory_space<vmem>>, vector<1x16x128xbf16>
    %222 = vector.shape_cast %221 : vector<1x16x128xbf16> to vector<16x128xbf16>
    %223 = vector.shape_cast %219 : vector<16x128xbf16> to vector<1x16x128xbf16>
    tpu.vector_store %arg6[%220, %c0_135, %c0_136], %223 {strides = array<i32>} : memref<8x16x128xbf16, #tpu.memory_space<vmem>>, vector<1x16x128xbf16>,
    %c7_i32_137 = arith.constant 7 : i32
    %c0_138 = arith.constant 0 : index
    %c0_139 = arith.constant 0 : index
    %224 = vector.load %arg8[%c0_138, %c0_139] : memref<16x128xf32, #tpu.memory_space<vmem>>, vector<16x128xf32>
    %225 = arith.index_cast %c7_i32_137 : i32 to index
    %c0_140 = arith.constant 0 : index
    %c0_141 = arith.constant 0 : index
    %226 = vector.load %arg1[%225, %c0_140, %c0_141] : memref<8x16x128xbf16, #tpu.memory_space<vmem>>, vector<1x16x128xbf16>
    %227 = vector.shape_cast %226 : vector<1x16x128xbf16> to vector<16x128xbf16>
    %228 = arith.extf %227 : vector<16x128xbf16> to vector<16x128xf32>
    %229 = arith.truncf %224 : vector<16x128xf32> to vector<16x128xbf16>
    %cst_142 = arith.constant dense<0.000000e+00> : vector<16x128xf32>
    %230 = tpu.matmul %229, %4, %cst_142 {dimension_numbers = #tpu.dot_dimension_numbers<[1], [0], [0], [1], [0, 0, 1, 1], [], []>} : vector<16x128xbf16>, vector<128x128xbf16>, vector<16x128xf32> -> vector<16x128xf32>
    %231 = arith.addf %228, %230 : vector<16x128xf32>
    %232 = math.tanh %231 : vector<16x128xf32>
    %c0_143 = arith.constant 0 : index
    %c0_144 = arith.constant 0 : index
    %233 = vector.load %arg8[%c0_143, %c0_144] : memref<16x128xf32, #tpu.memory_space<vmem>>, vector<16x128xf32>
    tpu.vector_store %arg8[%c0_143, %c0_144], %232 {strides = array<i32>} : memref<16x128xf32, #tpu.memory_space<vmem>>, vector<16x128xf32>,
    %234 = arith.truncf %232 : vector<16x128xf32> to vector<16x128xbf16>
    %235 = arith.index_cast %c7_i32_137 : i32 to index
    %c0_145 = arith.constant 0 : index
    %c0_146 = arith.constant 0 : index
    %236 = vector.load %arg5[%235, %c0_145, %c0_146] : memref<8x16x128xbf16, #tpu.memory_space<vmem>>, vector<1x16x128xbf16>
    %237 = vector.shape_cast %236 : vector<1x16x128xbf16> to vector<16x128xbf16>
    %238 = vector.shape_cast %234 : vector<16x128xbf16> to vector<1x16x128xbf16>
    tpu.vector_store %arg5[%235, %c0_145, %c0_146], %238 {strides = array<i32>} : memref<8x16x128xbf16, #tpu.memory_space<vmem>>, vector<1x16x128xbf16>,
    %c7_i32_147 = arith.constant 7 : i32
    %239 = arith.subi %c7_i32_147, %c7_i32_137 : i32
    %c0_148 = arith.constant 0 : index
    %c0_149 = arith.constant 0 : index
    %240 = vector.load %arg9[%c0_148, %c0_149] : memref<16x128xf32, #tpu.memory_space<vmem>>, vector<16x128xf32>
    %241 = arith.index_cast %239 : i32 to index
    %c0_150 = arith.constant 0 : index
    %c0_151 = arith.constant 0 : index
    %242 = vector.load %arg2[%241, %c0_150, %c0_151] : memref<8x16x128xbf16, #tpu.memory_space<vmem>>, vector<1x16x128xbf16>
    %243 = vector.shape_cast %242 : vector<1x16x128xbf16> to vector<16x128xbf16>
    %244 = arith.extf %243 : vector<16x128xbf16> to vector<16x128xf32>
    %245 = arith.truncf %240 : vector<16x128xf32> to vector<16x128xbf16>
    %cst_152 = arith.constant dense<0.000000e+00> : vector<16x128xf32>
    %246 = tpu.matmul %245, %6, %cst_152 {dimension_numbers = #tpu.dot_dimension_numbers<[1], [0], [0], [1], [0, 0, 1, 1], [], []>} : vector<16x128xbf16>, vector<128x128xbf16>, vector<16x128xf32> -> vector<16x128xf32>
    %247 = arith.addf %244, %246 : vector<16x128xf32>
    %248 = math.tanh %247 : vector<16x128xf32>
    %c0_153 = arith.constant 0 : index
    %c0_154 = arith.constant 0 : index
    %249 = vector.load %arg9[%c0_153, %c0_154] : memref<16x128xf32, #tpu.memory_space<vmem>>, vector<16x128xf32>
    tpu.vector_store %arg9[%c0_153, %c0_154], %248 {strides = array<i32>} : memref<16x128xf32, #tpu.memory_space<vmem>>, vector<16x128xf32>,
    %250 = arith.truncf %248 : vector<16x128xf32> to vector<16x128xbf16>
    %251 = arith.index_cast %239 : i32 to index
    %c0_155 = arith.constant 0 : index
    %c0_156 = arith.constant 0 : index
    %252 = vector.load %arg6[%251, %c0_155, %c0_156] : memref<8x16x128xbf16, #tpu.memory_space<vmem>>, vector<1x16x128xbf16>
    %253 = vector.shape_cast %252 : vector<1x16x128xbf16> to vector<16x128xbf16>
    %254 = vector.shape_cast %250 : vector<16x128xbf16> to vector<1x16x128xbf16>
    tpu.vector_store %arg6[%251, %c0_155, %c0_156], %254 {strides = array<i32>} : memref<8x16x128xbf16, #tpu.memory_space<vmem>>, vector<1x16x128xbf16>,
    %c8_i32 = arith.constant 8 : i32
    %c0_i32_157 = arith.constant 0 : i32
    %255 = arith.cmpi eq, %arg0, %c0_i32_157 : i32
    %256 = arith.extui %255 : i1 to i32
    %c0_i32_158 = arith.constant 0 : i32
    %257 = arith.cmpi ne, %256, %c0_i32_158 : i32
    scf.if %257 {
      %c0_159 = arith.constant 0 : index
      %c0_160 = arith.constant 0 : index
      %258 = vector.load %arg8[%c0_159, %c0_160] : memref<16x128xf32, #tpu.memory_space<vmem>>, vector<16x128xf32>
      %c0_161 = arith.constant 0 : index
      %c0_162 = arith.constant 0 : index
      %c0_163 = arith.constant 0 : index
      %259 = vector.load %arg7[%c0_161, %c0_162, %c0_163] : memref<2x16x128xf32, #tpu.memory_space<vmem>>, vector<1x16x128xf32>
      %260 = vector.shape_cast %259 : vector<1x16x128xf32> to vector<16x128xf32>
      %261 = vector.shape_cast %258 : vector<16x128xf32> to vector<1x16x128xf32>
      tpu.vector_store %arg7[%c0_161, %c0_162, %c0_163], %261 {strides = array<i32>} : memref<2x16x128xf32, #tpu.memory_space<vmem>>, vector<1x16x128xf32>,
      %c0_164 = arith.constant 0 : index
      %c0_165 = arith.constant 0 : index
      %262 = vector.load %arg9[%c0_164, %c0_165] : memref<16x128xf32, #tpu.memory_space<vmem>>, vector<16x128xf32>
      %c1_166 = arith.constant 1 : index
      %c0_167 = arith.constant 0 : index
      %c0_168 = arith.constant 0 : index
      %263 = vector.load %arg7[%c1_166, %c0_167, %c0_168] : memref<2x16x128xf32, #tpu.memory_space<vmem>>, vector<1x16x128xf32>
      %264 = vector.shape_cast %263 : vector<1x16x128xf32> to vector<16x128xf32>
      %265 = vector.shape_cast %262 : vector<16x128xf32> to vector<1x16x128xf32>
      tpu.vector_store %arg7[%c1_166, %c0_167, %c0_168], %265 {strides = array<i32>} : memref<2x16x128xf32, #tpu.memory_space<vmem>>, vector<1x16x128xf32>,
    } else {
    }
    return
  }
  func.func @transform_0(%arg0: i32) -> (i32, i32, i32) {
    %c0_i32 = arith.constant 0 : i32
    %c0_i32_0 = arith.constant 0 : i32
    %c0_i32_1 = arith.constant 0 : i32
    return %arg0, %c0_i32, %c0_i32_0 : i32, i32, i32
  }
  func.func @transform_1(%arg0: i32) -> (i32, i32, i32) {
    %c0_i32 = arith.constant 0 : i32
    %0 = arith.subi %c0_i32, %arg0 : i32
    %c0_i32_0 = arith.constant 0 : i32
    %c0_i32_1 = arith.constant 0 : i32
    %c0_i32_2 = arith.constant 0 : i32
    return %0, %c0_i32_0, %c0_i32_1 : i32, i32, i32
  }
  func.func @transform_2(%arg0: i32) -> (i32, i32, i32) {
    %c0_i32 = arith.constant 0 : i32
    %c0_i32_0 = arith.constant 0 : i32
    %c0_i32_1 = arith.constant 0 : i32
    %c0_i32_2 = arith.constant 0 : i32
    return %c0_i32, %c0_i32_0, %c0_i32_1 : i32, i32, i32
  }
  func.func @transform_3(%arg0: i32) -> (i32, i32, i32) {
    %c0_i32 = arith.constant 0 : i32
    %c0_i32_0 = arith.constant 0 : i32
    %c0_i32_1 = arith.constant 0 : i32
    %c0_i32_2 = arith.constant 0 : i32
    return %c0_i32, %c0_i32_0, %c0_i32_1 : i32, i32, i32
  }
  func.func @transform_4(%arg0: i32) -> (i32, i32, i32) {
    %c0_i32 = arith.constant 0 : i32
    %c0_i32_0 = arith.constant 0 : i32
    %c0_i32_1 = arith.constant 0 : i32
    return %arg0, %c0_i32, %c0_i32_0 : i32, i32, i32
  }
  func.func @transform_5(%arg0: i32) -> (i32, i32, i32) {
    %c0_i32 = arith.constant 0 : i32
    %0 = arith.subi %c0_i32, %arg0 : i32
    %c0_i32_0 = arith.constant 0 : i32
    %c0_i32_1 = arith.constant 0 : i32
    %c0_i32_2 = arith.constant 0 : i32
    return %0, %c0_i32_0, %c0_i32_1 : i32, i32, i32
  }
  func.func @transform_6(%arg0: i32) -> (i32, i32, i32) {
    %c0_i32 = arith.constant 0 : i32
    %c0_i32_0 = arith.constant 0 : i32
    %c0_i32_1 = arith.constant 0 : i32
    %c0_i32_2 = arith.constant 0 : i32
    return %c0_i32, %c0_i32_0, %c0_i32_1 : i32, i32, i32
  }
}

module attributes {stable_mosaic.version = 11 : i64} {
  func.func @_birnn_layer_kernel(%arg0: i32, %arg1: memref<8x16x128xbf16, #tpu.memory_space<vmem>>, %arg2: memref<8x16x128xbf16, #tpu.memory_space<vmem>>, %arg3: memref<2x16x128xf32, #tpu.memory_space<vmem>>, %arg4: memref<2x128x128xbf16, #tpu.memory_space<vmem>>, %arg5: memref<8x16x128xbf16, #tpu.memory_space<vmem>>, %arg6: memref<8x16x128xbf16, #tpu.memory_space<vmem>>, %arg7: memref<2x16x128xf32, #tpu.memory_space<vmem>>, %arg8: memref<16x128xf32, #tpu.memory_space<vmem>>, %arg9: memref<16x128xf32, #tpu.memory_space<vmem>>) attributes {dimension_semantics = [#tpu.dimension_semantics<arbitrary>], iteration_bounds = array<i64: 1>, scalar_prefetch = 0 : i64, scratch_operands = 2 : i64, tpu.core_type = #tpu.core_type<tc>, window_params = [{transform_indices = @transform_0, window_bounds = array<i64: 8, 16, 128>}, {transform_indices = @transform_1, window_bounds = array<i64: 8, 16, 128>}, {pipeline_mode = #tpu.pipeline_mode<synchronous>, transform_indices = @transform_2, window_bounds = array<i64: 2, 16, 128>}, {pipeline_mode = #tpu.pipeline_mode<synchronous>, transform_indices = @transform_3, window_bounds = array<i64: 2, 128, 128>}, {transform_indices = @transform_4, window_bounds = array<i64: 8, 16, 128>}, {transform_indices = @transform_5, window_bounds = array<i64: 8, 16, 128>}, {pipeline_mode = #tpu.pipeline_mode<synchronous>, transform_indices = @transform_6, window_bounds = array<i64: 2, 16, 128>}]} {
    %c0_i32 = arith.constant 0 : i32
    %0 = arith.cmpi eq, %arg0, %c0_i32 : i32
    %1 = arith.extui %0 : i1 to i32
    %c0_i32_0 = arith.constant 0 : i32
    %2 = arith.cmpi ne, %1, %c0_i32_0 : i32
    scf.if %2 {
      %c0_159 = arith.constant 0 : index
      %c0_160 = arith.constant 0 : index
      %c0_161 = arith.constant 0 : index
      %258 = vector.load %arg3[%c0_159, %c0_160, %c0_161] : memref<2x16x128xf32, #tpu.memory_space<vmem>>, vector<1x16x128xf32>
      %259 = vector.shape_cast %258 : vector<1x16x128xf32> to vector<16x128xf32>
      %c0_162 = arith.constant 0 : index
      %c0_163 = arith.constant 0 : index
      %260 = vector.load %arg8[%c0_162, %c0_163] : memref<16x128xf32, #tpu.memory_space<vmem>>, vector<16x128xf32>
      tpu.vector_store %arg8[%c0_162, %c0_163], %259 {strides = array<i32>} : memref<16x128xf32, #tpu.memory_space<vmem>>, vector<16x128xf32>,
      %c1_164 = arith.constant 1 : index
      %c0_165 = arith.constant 0 : index
      %c0_166 = arith.constant 0 : index
      %261 = vector.load %arg3[%c1_164, %c0_165, %c0_166] : memref<2x16x128xf32, #tpu.memory_space<vmem>>, vector<1x16x128xf32>
      %262 = vector.shape_cast %261 : vector<1x16x128xf32> to vector<16x128xf32>
      %c0_167 = arith.constant 0 : index
      %c0_168 = arith.constant 0 : index
      %263 = vector.load %arg9[%c0_167, %c0_168] : memref<16x128xf32, #tpu.memory_space<vmem>>, vector<16x128xf32>
      tpu.vector_store %arg9[%c0_167, %c0_168], %262 {strides = array<i32>} : memref<16x128xf32, #tpu.memory_space<vmem>>, vector<16x128xf32>,
    } else {
    }
    %c0 = arith.constant 0 : index
    %c0_1 = arith.constant 0 : index
    %c0_2 = arith.constant 0 : index
    %3 = vector.load %arg4[%c0, %c0_1, %c0_2] : memref<2x128x128xbf16, #tpu.memory_space<vmem>>, vector<1x128x128xbf16>
    %4 = vector.shape_cast %3 : vector<1x128x128xbf16> to vector<128x128xbf16>
    %c1 = arith.constant 1 : index
    %c0_3 = arith.constant 0 : index
    %c0_4 = arith.constant 0 : index
    %5 = vector.load %arg4[%c1, %c0_3, %c0_4] : memref<2x128x128xbf16, #tpu.memory_space<vmem>>, vector<1x128x128xbf16>
    %6 = vector.shape_cast %5 : vector<1x128x128xbf16> to vector<128x128xbf16>
    %c0_i32_5 = arith.constant 0 : i32
    %c0_6 = arith.constant 0 : index
    %c0_7 = arith.constant 0 : index
    %7 = vector.load %arg8[%c0_6, %c0_7] : memref<16x128xf32, #tpu.memory_space<vmem>>, vector<16x128xf32>
    %8 = arith.index_cast %c0_i32_5 : i32 to index
    %c0_8 = arith.constant 0 : index
    %c0_9 = arith.constant 0 : index
    %9 = vector.load %arg1[%8, %c0_8, %c0_9] : memref<8x16x128xbf16, #tpu.memory_space<vmem>>, vector<1x16x128xbf16>
    %10 = vector.shape_cast %9 : vector<1x16x128xbf16> to vector<16x128xbf16>
    %11 = arith.extf %10 : vector<16x128xbf16> to vector<16x128xf32>
    %12 = arith.truncf %7 : vector<16x128xf32> to vector<16x128xbf16>
    %cst = arith.constant dense<0.000000e+00> : vector<16x128xf32>
    %13 = tpu.matmul %12, %4, %cst {dimension_numbers = #tpu.dot_dimension_numbers<[1], [0], [0], [1], [0, 0, 1, 1], [], []>} : vector<16x128xbf16>, vector<128x128xbf16>, vector<16x128xf32> -> vector<16x128xf32>
    %14 = arith.addf %11, %13 : vector<16x128xf32>
    %15 = math.tanh %14 : vector<16x128xf32>
    %c0_10 = arith.constant 0 : index
    %c0_11 = arith.constant 0 : index
    %16 = vector.load %arg8[%c0_10, %c0_11] : memref<16x128xf32, #tpu.memory_space<vmem>>, vector<16x128xf32>
    tpu.vector_store %arg8[%c0_10, %c0_11], %15 {strides = array<i32>} : memref<16x128xf32, #tpu.memory_space<vmem>>, vector<16x128xf32>,
    %17 = arith.truncf %15 : vector<16x128xf32> to vector<16x128xbf16>
    %18 = arith.index_cast %c0_i32_5 : i32 to index
    %c0_12 = arith.constant 0 : index
    %c0_13 = arith.constant 0 : index
    %19 = vector.load %arg5[%18, %c0_12, %c0_13] : memref<8x16x128xbf16, #tpu.memory_space<vmem>>, vector<1x16x128xbf16>
    %20 = vector.shape_cast %19 : vector<1x16x128xbf16> to vector<16x128xbf16>
    %21 = vector.shape_cast %17 : vector<16x128xbf16> to vector<1x16x128xbf16>
    tpu.vector_store %arg5[%18, %c0_12, %c0_13], %21 {strides = array<i32>} : memref<8x16x128xbf16, #tpu.memory_space<vmem>>, vector<1x16x128xbf16>,
    %c7_i32 = arith.constant 7 : i32
    %22 = arith.subi %c7_i32, %c0_i32_5 : i32
    %c0_14 = arith.constant 0 : index
    %c0_15 = arith.constant 0 : index
    %23 = vector.load %arg9[%c0_14, %c0_15] : memref<16x128xf32, #tpu.memory_space<vmem>>, vector<16x128xf32>
    %24 = arith.index_cast %22 : i32 to index
    %c0_16 = arith.constant 0 : index
    %c0_17 = arith.constant 0 : index
    %25 = vector.load %arg2[%24, %c0_16, %c0_17] : memref<8x16x128xbf16, #tpu.memory_space<vmem>>, vector<1x16x128xbf16>
    %26 = vector.shape_cast %25 : vector<1x16x128xbf16> to vector<16x128xbf16>
    %27 = arith.extf %26 : vector<16x128xbf16> to vector<16x128xf32>
    %28 = arith.truncf %23 : vector<16x128xf32> to vector<16x128xbf16>
    %cst_18 = arith.constant dense<0.000000e+00> : vector<16x128xf32>
    %29 = tpu.matmul %28, %6, %cst_18 {dimension_numbers = #tpu.dot_dimension_numbers<[1], [0], [0], [1], [0, 0, 1, 1], [], []>} : vector<16x128xbf16>, vector<128x128xbf16>, vector<16x128xf32> -> vector<16x128xf32>
    %30 = arith.addf %27, %29 : vector<16x128xf32>
    %31 = math.tanh %30 : vector<16x128xf32>
    %c0_19 = arith.constant 0 : index
    %c0_20 = arith.constant 0 : index
    %32 = vector.load %arg9[%c0_19, %c0_20] : memref<16x128xf32, #tpu.memory_space<vmem>>, vector<16x128xf32>
    tpu.vector_store %arg9[%c0_19, %c0_20], %31 {strides = array<i32>} : memref<16x128xf32, #tpu.memory_space<vmem>>, vector<16x128xf32>,
    %33 = arith.truncf %31 : vector<16x128xf32> to vector<16x128xbf16>
    %34 = arith.index_cast %22 : i32 to index
    %c0_21 = arith.constant 0 : index
    %c0_22 = arith.constant 0 : index
    %35 = vector.load %arg6[%34, %c0_21, %c0_22] : memref<8x16x128xbf16, #tpu.memory_space<vmem>>, vector<1x16x128xbf16>
    %36 = vector.shape_cast %35 : vector<1x16x128xbf16> to vector<16x128xbf16>
    %37 = vector.shape_cast %33 : vector<16x128xbf16> to vector<1x16x128xbf16>
    tpu.vector_store %arg6[%34, %c0_21, %c0_22], %37 {strides = array<i32>} : memref<8x16x128xbf16, #tpu.memory_space<vmem>>, vector<1x16x128xbf16>,
    %c1_i32 = arith.constant 1 : i32
    %c0_23 = arith.constant 0 : index
    %c0_24 = arith.constant 0 : index
    %38 = vector.load %arg8[%c0_23, %c0_24] : memref<16x128xf32, #tpu.memory_space<vmem>>, vector<16x128xf32>
    %39 = arith.index_cast %c1_i32 : i32 to index
    %c0_25 = arith.constant 0 : index
    %c0_26 = arith.constant 0 : index
    %40 = vector.load %arg1[%39, %c0_25, %c0_26] : memref<8x16x128xbf16, #tpu.memory_space<vmem>>, vector<1x16x128xbf16>
    %41 = vector.shape_cast %40 : vector<1x16x128xbf16> to vector<16x128xbf16>
    %42 = arith.extf %41 : vector<16x128xbf16> to vector<16x128xf32>
    %43 = arith.truncf %38 : vector<16x128xf32> to vector<16x128xbf16>
    %cst_27 = arith.constant dense<0.000000e+00> : vector<16x128xf32>
    %44 = tpu.matmul %43, %4, %cst_27 {dimension_numbers = #tpu.dot_dimension_numbers<[1], [0], [0], [1], [0, 0, 1, 1], [], []>} : vector<16x128xbf16>, vector<128x128xbf16>, vector<16x128xf32> -> vector<16x128xf32>
    %45 = arith.addf %42, %44 : vector<16x128xf32>
    %46 = math.tanh %45 : vector<16x128xf32>
    %c0_28 = arith.constant 0 : index
    %c0_29 = arith.constant 0 : index
    %47 = vector.load %arg8[%c0_28, %c0_29] : memref<16x128xf32, #tpu.memory_space<vmem>>, vector<16x128xf32>
    tpu.vector_store %arg8[%c0_28, %c0_29], %46 {strides = array<i32>} : memref<16x128xf32, #tpu.memory_space<vmem>>, vector<16x128xf32>,
    %48 = arith.truncf %46 : vector<16x128xf32> to vector<16x128xbf16>
    %49 = arith.index_cast %c1_i32 : i32 to index
    %c0_30 = arith.constant 0 : index
    %c0_31 = arith.constant 0 : index
    %50 = vector.load %arg5[%49, %c0_30, %c0_31] : memref<8x16x128xbf16, #tpu.memory_space<vmem>>, vector<1x16x128xbf16>
    %51 = vector.shape_cast %50 : vector<1x16x128xbf16> to vector<16x128xbf16>
    %52 = vector.shape_cast %48 : vector<16x128xbf16> to vector<1x16x128xbf16>
    tpu.vector_store %arg5[%49, %c0_30, %c0_31], %52 {strides = array<i32>} : memref<8x16x128xbf16, #tpu.memory_space<vmem>>, vector<1x16x128xbf16>,
    %c7_i32_32 = arith.constant 7 : i32
    %53 = arith.subi %c7_i32_32, %c1_i32 : i32
    %c0_33 = arith.constant 0 : index
    %c0_34 = arith.constant 0 : index
    %54 = vector.load %arg9[%c0_33, %c0_34] : memref<16x128xf32, #tpu.memory_space<vmem>>, vector<16x128xf32>
    %55 = arith.index_cast %53 : i32 to index
    %c0_35 = arith.constant 0 : index
    %c0_36 = arith.constant 0 : index
    %56 = vector.load %arg2[%55, %c0_35, %c0_36] : memref<8x16x128xbf16, #tpu.memory_space<vmem>>, vector<1x16x128xbf16>
    %57 = vector.shape_cast %56 : vector<1x16x128xbf16> to vector<16x128xbf16>
    %58 = arith.extf %57 : vector<16x128xbf16> to vector<16x128xf32>
    %59 = arith.truncf %54 : vector<16x128xf32> to vector<16x128xbf16>
    %cst_37 = arith.constant dense<0.000000e+00> : vector<16x128xf32>
    %60 = tpu.matmul %59, %6, %cst_37 {dimension_numbers = #tpu.dot_dimension_numbers<[1], [0], [0], [1], [0, 0, 1, 1], [], []>} : vector<16x128xbf16>, vector<128x128xbf16>, vector<16x128xf32> -> vector<16x128xf32>
    %61 = arith.addf %58, %60 : vector<16x128xf32>
    %62 = math.tanh %61 : vector<16x128xf32>
    %c0_38 = arith.constant 0 : index
    %c0_39 = arith.constant 0 : index
    %63 = vector.load %arg9[%c0_38, %c0_39] : memref<16x128xf32, #tpu.memory_space<vmem>>, vector<16x128xf32>
    tpu.vector_store %arg9[%c0_38, %c0_39], %62 {strides = array<i32>} : memref<16x128xf32, #tpu.memory_space<vmem>>, vector<16x128xf32>,
    %64 = arith.truncf %62 : vector<16x128xf32> to vector<16x128xbf16>
    %65 = arith.index_cast %53 : i32 to index
    %c0_40 = arith.constant 0 : index
    %c0_41 = arith.constant 0 : index
    %66 = vector.load %arg6[%65, %c0_40, %c0_41] : memref<8x16x128xbf16, #tpu.memory_space<vmem>>, vector<1x16x128xbf16>
    %67 = vector.shape_cast %66 : vector<1x16x128xbf16> to vector<16x128xbf16>
    %68 = vector.shape_cast %64 : vector<16x128xbf16> to vector<1x16x128xbf16>
    tpu.vector_store %arg6[%65, %c0_40, %c0_41], %68 {strides = array<i32>} : memref<8x16x128xbf16, #tpu.memory_space<vmem>>, vector<1x16x128xbf16>,
    %c2_i32 = arith.constant 2 : i32
    %c0_42 = arith.constant 0 : index
    %c0_43 = arith.constant 0 : index
    %69 = vector.load %arg8[%c0_42, %c0_43] : memref<16x128xf32, #tpu.memory_space<vmem>>, vector<16x128xf32>
    %70 = arith.index_cast %c2_i32 : i32 to index
    %c0_44 = arith.constant 0 : index
    %c0_45 = arith.constant 0 : index
    %71 = vector.load %arg1[%70, %c0_44, %c0_45] : memref<8x16x128xbf16, #tpu.memory_space<vmem>>, vector<1x16x128xbf16>
    %72 = vector.shape_cast %71 : vector<1x16x128xbf16> to vector<16x128xbf16>
    %73 = arith.extf %72 : vector<16x128xbf16> to vector<16x128xf32>
    %74 = arith.truncf %69 : vector<16x128xf32> to vector<16x128xbf16>
    %cst_46 = arith.constant dense<0.000000e+00> : vector<16x128xf32>
    %75 = tpu.matmul %74, %4, %cst_46 {dimension_numbers = #tpu.dot_dimension_numbers<[1], [0], [0], [1], [0, 0, 1, 1], [], []>} : vector<16x128xbf16>, vector<128x128xbf16>, vector<16x128xf32> -> vector<16x128xf32>
    %76 = arith.addf %73, %75 : vector<16x128xf32>
    %77 = math.tanh %76 : vector<16x128xf32>
    %c0_47 = arith.constant 0 : index
    %c0_48 = arith.constant 0 : index
    %78 = vector.load %arg8[%c0_47, %c0_48] : memref<16x128xf32, #tpu.memory_space<vmem>>, vector<16x128xf32>
    tpu.vector_store %arg8[%c0_47, %c0_48], %77 {strides = array<i32>} : memref<16x128xf32, #tpu.memory_space<vmem>>, vector<16x128xf32>,
    %79 = arith.truncf %77 : vector<16x128xf32> to vector<16x128xbf16>
    %80 = arith.index_cast %c2_i32 : i32 to index
    %c0_49 = arith.constant 0 : index
    %c0_50 = arith.constant 0 : index
    %81 = vector.load %arg5[%80, %c0_49, %c0_50] : memref<8x16x128xbf16, #tpu.memory_space<vmem>>, vector<1x16x128xbf16>
    %82 = vector.shape_cast %81 : vector<1x16x128xbf16> to vector<16x128xbf16>
    %83 = vector.shape_cast %79 : vector<16x128xbf16> to vector<1x16x128xbf16>
    tpu.vector_store %arg5[%80, %c0_49, %c0_50], %83 {strides = array<i32>} : memref<8x16x128xbf16, #tpu.memory_space<vmem>>, vector<1x16x128xbf16>,
    %c7_i32_51 = arith.constant 7 : i32
    %84 = arith.subi %c7_i32_51, %c2_i32 : i32
    %c0_52 = arith.constant 0 : index
    %c0_53 = arith.constant 0 : index
    %85 = vector.load %arg9[%c0_52, %c0_53] : memref<16x128xf32, #tpu.memory_space<vmem>>, vector<16x128xf32>
    %86 = arith.index_cast %84 : i32 to index
    %c0_54 = arith.constant 0 : index
    %c0_55 = arith.constant 0 : index
    %87 = vector.load %arg2[%86, %c0_54, %c0_55] : memref<8x16x128xbf16, #tpu.memory_space<vmem>>, vector<1x16x128xbf16>
    %88 = vector.shape_cast %87 : vector<1x16x128xbf16> to vector<16x128xbf16>
    %89 = arith.extf %88 : vector<16x128xbf16> to vector<16x128xf32>
    %90 = arith.truncf %85 : vector<16x128xf32> to vector<16x128xbf16>
    %cst_56 = arith.constant dense<0.000000e+00> : vector<16x128xf32>
    %91 = tpu.matmul %90, %6, %cst_56 {dimension_numbers = #tpu.dot_dimension_numbers<[1], [0], [0], [1], [0, 0, 1, 1], [], []>} : vector<16x128xbf16>, vector<128x128xbf16>, vector<16x128xf32> -> vector<16x128xf32>
    %92 = arith.addf %89, %91 : vector<16x128xf32>
    %93 = math.tanh %92 : vector<16x128xf32>
    %c0_57 = arith.constant 0 : index
    %c0_58 = arith.constant 0 : index
    %94 = vector.load %arg9[%c0_57, %c0_58] : memref<16x128xf32, #tpu.memory_space<vmem>>, vector<16x128xf32>
    tpu.vector_store %arg9[%c0_57, %c0_58], %93 {strides = array<i32>} : memref<16x128xf32, #tpu.memory_space<vmem>>, vector<16x128xf32>,
    %95 = arith.truncf %93 : vector<16x128xf32> to vector<16x128xbf16>
    %96 = arith.index_cast %84 : i32 to index
    %c0_59 = arith.constant 0 : index
    %c0_60 = arith.constant 0 : index
    %97 = vector.load %arg6[%96, %c0_59, %c0_60] : memref<8x16x128xbf16, #tpu.memory_space<vmem>>, vector<1x16x128xbf16>
    %98 = vector.shape_cast %97 : vector<1x16x128xbf16> to vector<16x128xbf16>
    %99 = vector.shape_cast %95 : vector<16x128xbf16> to vector<1x16x128xbf16>
    tpu.vector_store %arg6[%96, %c0_59, %c0_60], %99 {strides = array<i32>} : memref<8x16x128xbf16, #tpu.memory_space<vmem>>, vector<1x16x128xbf16>,
    %c3_i32 = arith.constant 3 : i32
    %c0_61 = arith.constant 0 : index
    %c0_62 = arith.constant 0 : index
    %100 = vector.load %arg8[%c0_61, %c0_62] : memref<16x128xf32, #tpu.memory_space<vmem>>, vector<16x128xf32>
    %101 = arith.index_cast %c3_i32 : i32 to index
    %c0_63 = arith.constant 0 : index
    %c0_64 = arith.constant 0 : index
    %102 = vector.load %arg1[%101, %c0_63, %c0_64] : memref<8x16x128xbf16, #tpu.memory_space<vmem>>, vector<1x16x128xbf16>
    %103 = vector.shape_cast %102 : vector<1x16x128xbf16> to vector<16x128xbf16>
    %104 = arith.extf %103 : vector<16x128xbf16> to vector<16x128xf32>
    %105 = arith.truncf %100 : vector<16x128xf32> to vector<16x128xbf16>
    %cst_65 = arith.constant dense<0.000000e+00> : vector<16x128xf32>
    %106 = tpu.matmul %105, %4, %cst_65 {dimension_numbers = #tpu.dot_dimension_numbers<[1], [0], [0], [1], [0, 0, 1, 1], [], []>} : vector<16x128xbf16>, vector<128x128xbf16>, vector<16x128xf32> -> vector<16x128xf32>
    %107 = arith.addf %104, %106 : vector<16x128xf32>
    %108 = math.tanh %107 : vector<16x128xf32>
    %c0_66 = arith.constant 0 : index
    %c0_67 = arith.constant 0 : index
    %109 = vector.load %arg8[%c0_66, %c0_67] : memref<16x128xf32, #tpu.memory_space<vmem>>, vector<16x128xf32>
    tpu.vector_store %arg8[%c0_66, %c0_67], %108 {strides = array<i32>} : memref<16x128xf32, #tpu.memory_space<vmem>>, vector<16x128xf32>,
    %110 = arith.truncf %108 : vector<16x128xf32> to vector<16x128xbf16>
    %111 = arith.index_cast %c3_i32 : i32 to index
    %c0_68 = arith.constant 0 : index
    %c0_69 = arith.constant 0 : index
    %112 = vector.load %arg5[%111, %c0_68, %c0_69] : memref<8x16x128xbf16, #tpu.memory_space<vmem>>, vector<1x16x128xbf16>
    %113 = vector.shape_cast %112 : vector<1x16x128xbf16> to vector<16x128xbf16>
    %114 = vector.shape_cast %110 : vector<16x128xbf16> to vector<1x16x128xbf16>
    tpu.vector_store %arg5[%111, %c0_68, %c0_69], %114 {strides = array<i32>} : memref<8x16x128xbf16, #tpu.memory_space<vmem>>, vector<1x16x128xbf16>,
    %c7_i32_70 = arith.constant 7 : i32
    %115 = arith.subi %c7_i32_70, %c3_i32 : i32
    %c0_71 = arith.constant 0 : index
    %c0_72 = arith.constant 0 : index
    %116 = vector.load %arg9[%c0_71, %c0_72] : memref<16x128xf32, #tpu.memory_space<vmem>>, vector<16x128xf32>
    %117 = arith.index_cast %115 : i32 to index
    %c0_73 = arith.constant 0 : index
    %c0_74 = arith.constant 0 : index
    %118 = vector.load %arg2[%117, %c0_73, %c0_74] : memref<8x16x128xbf16, #tpu.memory_space<vmem>>, vector<1x16x128xbf16>
    %119 = vector.shape_cast %118 : vector<1x16x128xbf16> to vector<16x128xbf16>
    %120 = arith.extf %119 : vector<16x128xbf16> to vector<16x128xf32>
    %121 = arith.truncf %116 : vector<16x128xf32> to vector<16x128xbf16>
    %cst_75 = arith.constant dense<0.000000e+00> : vector<16x128xf32>
    %122 = tpu.matmul %121, %6, %cst_75 {dimension_numbers = #tpu.dot_dimension_numbers<[1], [0], [0], [1], [0, 0, 1, 1], [], []>} : vector<16x128xbf16>, vector<128x128xbf16>, vector<16x128xf32> -> vector<16x128xf32>
    %123 = arith.addf %120, %122 : vector<16x128xf32>
    %124 = math.tanh %123 : vector<16x128xf32>
    %c0_76 = arith.constant 0 : index
    %c0_77 = arith.constant 0 : index
    %125 = vector.load %arg9[%c0_76, %c0_77] : memref<16x128xf32, #tpu.memory_space<vmem>>, vector<16x128xf32>
    tpu.vector_store %arg9[%c0_76, %c0_77], %124 {strides = array<i32>} : memref<16x128xf32, #tpu.memory_space<vmem>>, vector<16x128xf32>,
    %126 = arith.truncf %124 : vector<16x128xf32> to vector<16x128xbf16>
    %127 = arith.index_cast %115 : i32 to index
    %c0_78 = arith.constant 0 : index
    %c0_79 = arith.constant 0 : index
    %128 = vector.load %arg6[%127, %c0_78, %c0_79] : memref<8x16x128xbf16, #tpu.memory_space<vmem>>, vector<1x16x128xbf16>
    %129 = vector.shape_cast %128 : vector<1x16x128xbf16> to vector<16x128xbf16>
    %130 = vector.shape_cast %126 : vector<16x128xbf16> to vector<1x16x128xbf16>
    tpu.vector_store %arg6[%127, %c0_78, %c0_79], %130 {strides = array<i32>} : memref<8x16x128xbf16, #tpu.memory_space<vmem>>, vector<1x16x128xbf16>,
    %c4_i32 = arith.constant 4 : i32
    %c0_80 = arith.constant 0 : index
    %c0_81 = arith.constant 0 : index
    %131 = vector.load %arg8[%c0_80, %c0_81] : memref<16x128xf32, #tpu.memory_space<vmem>>, vector<16x128xf32>
    %132 = arith.index_cast %c4_i32 : i32 to index
    %c0_82 = arith.constant 0 : index
    %c0_83 = arith.constant 0 : index
    %133 = vector.load %arg1[%132, %c0_82, %c0_83] : memref<8x16x128xbf16, #tpu.memory_space<vmem>>, vector<1x16x128xbf16>
    %134 = vector.shape_cast %133 : vector<1x16x128xbf16> to vector<16x128xbf16>
    %135 = arith.extf %134 : vector<16x128xbf16> to vector<16x128xf32>
    %136 = arith.truncf %131 : vector<16x128xf32> to vector<16x128xbf16>
    %cst_84 = arith.constant dense<0.000000e+00> : vector<16x128xf32>
    %137 = tpu.matmul %136, %4, %cst_84 {dimension_numbers = #tpu.dot_dimension_numbers<[1], [0], [0], [1], [0, 0, 1, 1], [], []>} : vector<16x128xbf16>, vector<128x128xbf16>, vector<16x128xf32> -> vector<16x128xf32>
    %138 = arith.addf %135, %137 : vector<16x128xf32>
    %139 = math.tanh %138 : vector<16x128xf32>
    %c0_85 = arith.constant 0 : index
    %c0_86 = arith.constant 0 : index
    %140 = vector.load %arg8[%c0_85, %c0_86] : memref<16x128xf32, #tpu.memory_space<vmem>>, vector<16x128xf32>
    tpu.vector_store %arg8[%c0_85, %c0_86], %139 {strides = array<i32>} : memref<16x128xf32, #tpu.memory_space<vmem>>, vector<16x128xf32>,
    %141 = arith.truncf %139 : vector<16x128xf32> to vector<16x128xbf16>
    %142 = arith.index_cast %c4_i32 : i32 to index
    %c0_87 = arith.constant 0 : index
    %c0_88 = arith.constant 0 : index
    %143 = vector.load %arg5[%142, %c0_87, %c0_88] : memref<8x16x128xbf16, #tpu.memory_space<vmem>>, vector<1x16x128xbf16>
    %144 = vector.shape_cast %143 : vector<1x16x128xbf16> to vector<16x128xbf16>
    %145 = vector.shape_cast %141 : vector<16x128xbf16> to vector<1x16x128xbf16>
    tpu.vector_store %arg5[%142, %c0_87, %c0_88], %145 {strides = array<i32>} : memref<8x16x128xbf16, #tpu.memory_space<vmem>>, vector<1x16x128xbf16>,
    %c7_i32_89 = arith.constant 7 : i32
    %146 = arith.subi %c7_i32_89, %c4_i32 : i32
    %c0_90 = arith.constant 0 : index
    %c0_91 = arith.constant 0 : index
    %147 = vector.load %arg9[%c0_90, %c0_91] : memref<16x128xf32, #tpu.memory_space<vmem>>, vector<16x128xf32>
    %148 = arith.index_cast %146 : i32 to index
    %c0_92 = arith.constant 0 : index
    %c0_93 = arith.constant 0 : index
    %149 = vector.load %arg2[%148, %c0_92, %c0_93] : memref<8x16x128xbf16, #tpu.memory_space<vmem>>, vector<1x16x128xbf16>
    %150 = vector.shape_cast %149 : vector<1x16x128xbf16> to vector<16x128xbf16>
    %151 = arith.extf %150 : vector<16x128xbf16> to vector<16x128xf32>
    %152 = arith.truncf %147 : vector<16x128xf32> to vector<16x128xbf16>
    %cst_94 = arith.constant dense<0.000000e+00> : vector<16x128xf32>
    %153 = tpu.matmul %152, %6, %cst_94 {dimension_numbers = #tpu.dot_dimension_numbers<[1], [0], [0], [1], [0, 0, 1, 1], [], []>} : vector<16x128xbf16>, vector<128x128xbf16>, vector<16x128xf32> -> vector<16x128xf32>
    %154 = arith.addf %151, %153 : vector<16x128xf32>
    %155 = math.tanh %154 : vector<16x128xf32>
    %c0_95 = arith.constant 0 : index
    %c0_96 = arith.constant 0 : index
    %156 = vector.load %arg9[%c0_95, %c0_96] : memref<16x128xf32, #tpu.memory_space<vmem>>, vector<16x128xf32>
    tpu.vector_store %arg9[%c0_95, %c0_96], %155 {strides = array<i32>} : memref<16x128xf32, #tpu.memory_space<vmem>>, vector<16x128xf32>,
    %157 = arith.truncf %155 : vector<16x128xf32> to vector<16x128xbf16>
    %158 = arith.index_cast %146 : i32 to index
    %c0_97 = arith.constant 0 : index
    %c0_98 = arith.constant 0 : index
    %159 = vector.load %arg6[%158, %c0_97, %c0_98] : memref<8x16x128xbf16, #tpu.memory_space<vmem>>, vector<1x16x128xbf16>
    %160 = vector.shape_cast %159 : vector<1x16x128xbf16> to vector<16x128xbf16>
    %161 = vector.shape_cast %157 : vector<16x128xbf16> to vector<1x16x128xbf16>
    tpu.vector_store %arg6[%158, %c0_97, %c0_98], %161 {strides = array<i32>} : memref<8x16x128xbf16, #tpu.memory_space<vmem>>, vector<1x16x128xbf16>,
    %c5_i32 = arith.constant 5 : i32
    %c0_99 = arith.constant 0 : index
    %c0_100 = arith.constant 0 : index
    %162 = vector.load %arg8[%c0_99, %c0_100] : memref<16x128xf32, #tpu.memory_space<vmem>>, vector<16x128xf32>
    %163 = arith.index_cast %c5_i32 : i32 to index
    %c0_101 = arith.constant 0 : index
    %c0_102 = arith.constant 0 : index
    %164 = vector.load %arg1[%163, %c0_101, %c0_102] : memref<8x16x128xbf16, #tpu.memory_space<vmem>>, vector<1x16x128xbf16>
    %165 = vector.shape_cast %164 : vector<1x16x128xbf16> to vector<16x128xbf16>
    %166 = arith.extf %165 : vector<16x128xbf16> to vector<16x128xf32>
    %167 = arith.truncf %162 : vector<16x128xf32> to vector<16x128xbf16>
    %cst_103 = arith.constant dense<0.000000e+00> : vector<16x128xf32>
    %168 = tpu.matmul %167, %4, %cst_103 {dimension_numbers = #tpu.dot_dimension_numbers<[1], [0], [0], [1], [0, 0, 1, 1], [], []>} : vector<16x128xbf16>, vector<128x128xbf16>, vector<16x128xf32> -> vector<16x128xf32>
    %169 = arith.addf %166, %168 : vector<16x128xf32>
    %170 = math.tanh %169 : vector<16x128xf32>
    %c0_104 = arith.constant 0 : index
    %c0_105 = arith.constant 0 : index
    %171 = vector.load %arg8[%c0_104, %c0_105] : memref<16x128xf32, #tpu.memory_space<vmem>>, vector<16x128xf32>
    tpu.vector_store %arg8[%c0_104, %c0_105], %170 {strides = array<i32>} : memref<16x128xf32, #tpu.memory_space<vmem>>, vector<16x128xf32>,
    %172 = arith.truncf %170 : vector<16x128xf32> to vector<16x128xbf16>
    %173 = arith.index_cast %c5_i32 : i32 to index
    %c0_106 = arith.constant 0 : index
    %c0_107 = arith.constant 0 : index
    %174 = vector.load %arg5[%173, %c0_106, %c0_107] : memref<8x16x128xbf16, #tpu.memory_space<vmem>>, vector<1x16x128xbf16>
    %175 = vector.shape_cast %174 : vector<1x16x128xbf16> to vector<16x128xbf16>
    %176 = vector.shape_cast %172 : vector<16x128xbf16> to vector<1x16x128xbf16>
    tpu.vector_store %arg5[%173, %c0_106, %c0_107], %176 {strides = array<i32>} : memref<8x16x128xbf16, #tpu.memory_space<vmem>>, vector<1x16x128xbf16>,
    %c7_i32_108 = arith.constant 7 : i32
    %177 = arith.subi %c7_i32_108, %c5_i32 : i32
    %c0_109 = arith.constant 0 : index
    %c0_110 = arith.constant 0 : index
    %178 = vector.load %arg9[%c0_109, %c0_110] : memref<16x128xf32, #tpu.memory_space<vmem>>, vector<16x128xf32>
    %179 = arith.index_cast %177 : i32 to index
    %c0_111 = arith.constant 0 : index
    %c0_112 = arith.constant 0 : index
    %180 = vector.load %arg2[%179, %c0_111, %c0_112] : memref<8x16x128xbf16, #tpu.memory_space<vmem>>, vector<1x16x128xbf16>
    %181 = vector.shape_cast %180 : vector<1x16x128xbf16> to vector<16x128xbf16>
    %182 = arith.extf %181 : vector<16x128xbf16> to vector<16x128xf32>
    %183 = arith.truncf %178 : vector<16x128xf32> to vector<16x128xbf16>
    %cst_113 = arith.constant dense<0.000000e+00> : vector<16x128xf32>
    %184 = tpu.matmul %183, %6, %cst_113 {dimension_numbers = #tpu.dot_dimension_numbers<[1], [0], [0], [1], [0, 0, 1, 1], [], []>} : vector<16x128xbf16>, vector<128x128xbf16>, vector<16x128xf32> -> vector<16x128xf32>
    %185 = arith.addf %182, %184 : vector<16x128xf32>
    %186 = math.tanh %185 : vector<16x128xf32>
    %c0_114 = arith.constant 0 : index
    %c0_115 = arith.constant 0 : index
    %187 = vector.load %arg9[%c0_114, %c0_115] : memref<16x128xf32, #tpu.memory_space<vmem>>, vector<16x128xf32>
    tpu.vector_store %arg9[%c0_114, %c0_115], %186 {strides = array<i32>} : memref<16x128xf32, #tpu.memory_space<vmem>>, vector<16x128xf32>,
    %188 = arith.truncf %186 : vector<16x128xf32> to vector<16x128xbf16>
    %189 = arith.index_cast %177 : i32 to index
    %c0_116 = arith.constant 0 : index
    %c0_117 = arith.constant 0 : index
    %190 = vector.load %arg6[%189, %c0_116, %c0_117] : memref<8x16x128xbf16, #tpu.memory_space<vmem>>, vector<1x16x128xbf16>
    %191 = vector.shape_cast %190 : vector<1x16x128xbf16> to vector<16x128xbf16>
    %192 = vector.shape_cast %188 : vector<16x128xbf16> to vector<1x16x128xbf16>
    tpu.vector_store %arg6[%189, %c0_116, %c0_117], %192 {strides = array<i32>} : memref<8x16x128xbf16, #tpu.memory_space<vmem>>, vector<1x16x128xbf16>,
    %c6_i32 = arith.constant 6 : i32
    %c0_118 = arith.constant 0 : index
    %c0_119 = arith.constant 0 : index
    %193 = vector.load %arg8[%c0_118, %c0_119] : memref<16x128xf32, #tpu.memory_space<vmem>>, vector<16x128xf32>
    %194 = arith.index_cast %c6_i32 : i32 to index
    %c0_120 = arith.constant 0 : index
    %c0_121 = arith.constant 0 : index
    %195 = vector.load %arg1[%194, %c0_120, %c0_121] : memref<8x16x128xbf16, #tpu.memory_space<vmem>>, vector<1x16x128xbf16>
    %196 = vector.shape_cast %195 : vector<1x16x128xbf16> to vector<16x128xbf16>
    %197 = arith.extf %196 : vector<16x128xbf16> to vector<16x128xf32>
    %198 = arith.truncf %193 : vector<16x128xf32> to vector<16x128xbf16>
    %cst_122 = arith.constant dense<0.000000e+00> : vector<16x128xf32>
    %199 = tpu.matmul %198, %4, %cst_122 {dimension_numbers = #tpu.dot_dimension_numbers<[1], [0], [0], [1], [0, 0, 1, 1], [], []>} : vector<16x128xbf16>, vector<128x128xbf16>, vector<16x128xf32> -> vector<16x128xf32>
    %200 = arith.addf %197, %199 : vector<16x128xf32>
    %201 = math.tanh %200 : vector<16x128xf32>
    %c0_123 = arith.constant 0 : index
    %c0_124 = arith.constant 0 : index
    %202 = vector.load %arg8[%c0_123, %c0_124] : memref<16x128xf32, #tpu.memory_space<vmem>>, vector<16x128xf32>
    tpu.vector_store %arg8[%c0_123, %c0_124], %201 {strides = array<i32>} : memref<16x128xf32, #tpu.memory_space<vmem>>, vector<16x128xf32>,
    %203 = arith.truncf %201 : vector<16x128xf32> to vector<16x128xbf16>
    %204 = arith.index_cast %c6_i32 : i32 to index
    %c0_125 = arith.constant 0 : index
    %c0_126 = arith.constant 0 : index
    %205 = vector.load %arg5[%204, %c0_125, %c0_126] : memref<8x16x128xbf16, #tpu.memory_space<vmem>>, vector<1x16x128xbf16>
    %206 = vector.shape_cast %205 : vector<1x16x128xbf16> to vector<16x128xbf16>
    %207 = vector.shape_cast %203 : vector<16x128xbf16> to vector<1x16x128xbf16>
    tpu.vector_store %arg5[%204, %c0_125, %c0_126], %207 {strides = array<i32>} : memref<8x16x128xbf16, #tpu.memory_space<vmem>>, vector<1x16x128xbf16>,
    %c7_i32_127 = arith.constant 7 : i32
    %208 = arith.subi %c7_i32_127, %c6_i32 : i32
    %c0_128 = arith.constant 0 : index
    %c0_129 = arith.constant 0 : index
    %209 = vector.load %arg9[%c0_128, %c0_129] : memref<16x128xf32, #tpu.memory_space<vmem>>, vector<16x128xf32>
    %210 = arith.index_cast %208 : i32 to index
    %c0_130 = arith.constant 0 : index
    %c0_131 = arith.constant 0 : index
    %211 = vector.load %arg2[%210, %c0_130, %c0_131] : memref<8x16x128xbf16, #tpu.memory_space<vmem>>, vector<1x16x128xbf16>
    %212 = vector.shape_cast %211 : vector<1x16x128xbf16> to vector<16x128xbf16>
    %213 = arith.extf %212 : vector<16x128xbf16> to vector<16x128xf32>
    %214 = arith.truncf %209 : vector<16x128xf32> to vector<16x128xbf16>
    %cst_132 = arith.constant dense<0.000000e+00> : vector<16x128xf32>
    %215 = tpu.matmul %214, %6, %cst_132 {dimension_numbers = #tpu.dot_dimension_numbers<[1], [0], [0], [1], [0, 0, 1, 1], [], []>} : vector<16x128xbf16>, vector<128x128xbf16>, vector<16x128xf32> -> vector<16x128xf32>
    %216 = arith.addf %213, %215 : vector<16x128xf32>
    %217 = math.tanh %216 : vector<16x128xf32>
    %c0_133 = arith.constant 0 : index
    %c0_134 = arith.constant 0 : index
    %218 = vector.load %arg9[%c0_133, %c0_134] : memref<16x128xf32, #tpu.memory_space<vmem>>, vector<16x128xf32>
    tpu.vector_store %arg9[%c0_133, %c0_134], %217 {strides = array<i32>} : memref<16x128xf32, #tpu.memory_space<vmem>>, vector<16x128xf32>,
    %219 = arith.truncf %217 : vector<16x128xf32> to vector<16x128xbf16>
    %220 = arith.index_cast %208 : i32 to index
    %c0_135 = arith.constant 0 : index
    %c0_136 = arith.constant 0 : index
    %221 = vector.load %arg6[%220, %c0_135, %c0_136] : memref<8x16x128xbf16, #tpu.memory_space<vmem>>, vector<1x16x128xbf16>
    %222 = vector.shape_cast %221 : vector<1x16x128xbf16> to vector<16x128xbf16>
    %223 = vector.shape_cast %219 : vector<16x128xbf16> to vector<1x16x128xbf16>
    tpu.vector_store %arg6[%220, %c0_135, %c0_136], %223 {strides = array<i32>} : memref<8x16x128xbf16, #tpu.memory_space<vmem>>, vector<1x16x128xbf16>,
    %c7_i32_137 = arith.constant 7 : i32
    %c0_138 = arith.constant 0 : index
    %c0_139 = arith.constant 0 : index
    %224 = vector.load %arg8[%c0_138, %c0_139] : memref<16x128xf32, #tpu.memory_space<vmem>>, vector<16x128xf32>
    %225 = arith.index_cast %c7_i32_137 : i32 to index
    %c0_140 = arith.constant 0 : index
    %c0_141 = arith.constant 0 : index
    %226 = vector.load %arg1[%225, %c0_140, %c0_141] : memref<8x16x128xbf16, #tpu.memory_space<vmem>>, vector<1x16x128xbf16>
    %227 = vector.shape_cast %226 : vector<1x16x128xbf16> to vector<16x128xbf16>
    %228 = arith.extf %227 : vector<16x128xbf16> to vector<16x128xf32>
    %229 = arith.truncf %224 : vector<16x128xf32> to vector<16x128xbf16>
    %cst_142 = arith.constant dense<0.000000e+00> : vector<16x128xf32>
    %230 = tpu.matmul %229, %4, %cst_142 {dimension_numbers = #tpu.dot_dimension_numbers<[1], [0], [0], [1], [0, 0, 1, 1], [], []>} : vector<16x128xbf16>, vector<128x128xbf16>, vector<16x128xf32> -> vector<16x128xf32>
    %231 = arith.addf %228, %230 : vector<16x128xf32>
    %232 = math.tanh %231 : vector<16x128xf32>
    %c0_143 = arith.constant 0 : index
    %c0_144 = arith.constant 0 : index
    %233 = vector.load %arg8[%c0_143, %c0_144] : memref<16x128xf32, #tpu.memory_space<vmem>>, vector<16x128xf32>
    tpu.vector_store %arg8[%c0_143, %c0_144], %232 {strides = array<i32>} : memref<16x128xf32, #tpu.memory_space<vmem>>, vector<16x128xf32>,
    %234 = arith.truncf %232 : vector<16x128xf32> to vector<16x128xbf16>
    %235 = arith.index_cast %c7_i32_137 : i32 to index
    %c0_145 = arith.constant 0 : index
    %c0_146 = arith.constant 0 : index
    %236 = vector.load %arg5[%235, %c0_145, %c0_146] : memref<8x16x128xbf16, #tpu.memory_space<vmem>>, vector<1x16x128xbf16>
    %237 = vector.shape_cast %236 : vector<1x16x128xbf16> to vector<16x128xbf16>
    %238 = vector.shape_cast %234 : vector<16x128xbf16> to vector<1x16x128xbf16>
    tpu.vector_store %arg5[%235, %c0_145, %c0_146], %238 {strides = array<i32>} : memref<8x16x128xbf16, #tpu.memory_space<vmem>>, vector<1x16x128xbf16>,
    %c7_i32_147 = arith.constant 7 : i32
    %239 = arith.subi %c7_i32_147, %c7_i32_137 : i32
    %c0_148 = arith.constant 0 : index
    %c0_149 = arith.constant 0 : index
    %240 = vector.load %arg9[%c0_148, %c0_149] : memref<16x128xf32, #tpu.memory_space<vmem>>, vector<16x128xf32>
    %241 = arith.index_cast %239 : i32 to index
    %c0_150 = arith.constant 0 : index
    %c0_151 = arith.constant 0 : index
    %242 = vector.load %arg2[%241, %c0_150, %c0_151] : memref<8x16x128xbf16, #tpu.memory_space<vmem>>, vector<1x16x128xbf16>
    %243 = vector.shape_cast %242 : vector<1x16x128xbf16> to vector<16x128xbf16>
    %244 = arith.extf %243 : vector<16x128xbf16> to vector<16x128xf32>
    %245 = arith.truncf %240 : vector<16x128xf32> to vector<16x128xbf16>
    %cst_152 = arith.constant dense<0.000000e+00> : vector<16x128xf32>
    %246 = tpu.matmul %245, %6, %cst_152 {dimension_numbers = #tpu.dot_dimension_numbers<[1], [0], [0], [1], [0, 0, 1, 1], [], []>} : vector<16x128xbf16>, vector<128x128xbf16>, vector<16x128xf32> -> vector<16x128xf32>
    %247 = arith.addf %244, %246 : vector<16x128xf32>
    %248 = math.tanh %247 : vector<16x128xf32>
    %c0_153 = arith.constant 0 : index
    %c0_154 = arith.constant 0 : index
    %249 = vector.load %arg9[%c0_153, %c0_154] : memref<16x128xf32, #tpu.memory_space<vmem>>, vector<16x128xf32>
    tpu.vector_store %arg9[%c0_153, %c0_154], %248 {strides = array<i32>} : memref<16x128xf32, #tpu.memory_space<vmem>>, vector<16x128xf32>,
    %250 = arith.truncf %248 : vector<16x128xf32> to vector<16x128xbf16>
    %251 = arith.index_cast %239 : i32 to index
    %c0_155 = arith.constant 0 : index
    %c0_156 = arith.constant 0 : index
    %252 = vector.load %arg6[%251, %c0_155, %c0_156] : memref<8x16x128xbf16, #tpu.memory_space<vmem>>, vector<1x16x128xbf16>
    %253 = vector.shape_cast %252 : vector<1x16x128xbf16> to vector<16x128xbf16>
    %254 = vector.shape_cast %250 : vector<16x128xbf16> to vector<1x16x128xbf16>
    tpu.vector_store %arg6[%251, %c0_155, %c0_156], %254 {strides = array<i32>} : memref<8x16x128xbf16, #tpu.memory_space<vmem>>, vector<1x16x128xbf16>,
    %c8_i32 = arith.constant 8 : i32
    %c0_i32_157 = arith.constant 0 : i32
    %255 = arith.cmpi eq, %arg0, %c0_i32_157 : i32
    %256 = arith.extui %255 : i1 to i32
    %c0_i32_158 = arith.constant 0 : i32
    %257 = arith.cmpi ne, %256, %c0_i32_158 : i32
    scf.if %257 {
      %c0_159 = arith.constant 0 : index
      %c0_160 = arith.constant 0 : index
      %258 = vector.load %arg8[%c0_159, %c0_160] : memref<16x128xf32, #tpu.memory_space<vmem>>, vector<16x128xf32>
      %c0_161 = arith.constant 0 : index
      %c0_162 = arith.constant 0 : index
      %c0_163 = arith.constant 0 : index
      %259 = vector.load %arg7[%c0_161, %c0_162, %c0_163] : memref<2x16x128xf32, #tpu.memory_space<vmem>>, vector<1x16x128xf32>
      %260 = vector.shape_cast %259 : vector<1x16x128xf32> to vector<16x128xf32>
      %261 = vector.shape_cast %258 : vector<16x128xf32> to vector<1x16x128xf32>
      tpu.vector_store %arg7[%c0_161, %c0_162, %c0_163], %261 {strides = array<i32>} : memref<2x16x128xf32, #tpu.memory_space<vmem>>, vector<1x16x128xf32>,
      %c0_164 = arith.constant 0 : index
      %c0_165 = arith.constant 0 : index
      %262 = vector.load %arg9[%c0_164, %c0_165] : memref<16x128xf32, #tpu.memory_space<vmem>>, vector<16x128xf32>
      %c1_166 = arith.constant 1 : index
      %c0_167 = arith.constant 0 : index
      %c0_168 = arith.constant 0 : index
      %263 = vector.load %arg7[%c1_166, %c0_167, %c0_168] : memref<2x16x128xf32, #tpu.memory_space<vmem>>, vector<1x16x128xf32>
      %264 = vector.shape_cast %263 : vector<1x16x128xf32> to vector<16x128xf32>
      %265 = vector.shape_cast %262 : vector<16x128xf32> to vector<1x16x128xf32>
      tpu.vector_store %arg7[%c1_166, %c0_167, %c0_168], %265 {strides = array<i32>} : memref<2x16x128xf32, #tpu.memory_space<vmem>>, vector<1x16x128xf32>,
    } else {
    }
    return
  }
  func.func @transform_0(%arg0: i32) -> (i32, i32, i32) {
    %c0_i32 = arith.constant 0 : i32
    %c0_i32_0 = arith.constant 0 : i32
    %c0_i32_1 = arith.constant 0 : i32
    return %arg0, %c0_i32, %c0_i32_0 : i32, i32, i32
  }
  func.func @transform_1(%arg0: i32) -> (i32, i32, i32) {
    %c0_i32 = arith.constant 0 : i32
    %0 = arith.subi %c0_i32, %arg0 : i32
    %c0_i32_0 = arith.constant 0 : i32
    %c0_i32_1 = arith.constant 0 : i32
    %c0_i32_2 = arith.constant 0 : i32
    return %0, %c0_i32_0, %c0_i32_1 : i32, i32, i32
  }
  func.func @transform_2(%arg0: i32) -> (i32, i32, i32) {
    %c0_i32 = arith.constant 0 : i32
    %c0_i32_0 = arith.constant 0 : i32
    %c0_i32_1 = arith.constant 0 : i32
    %c0_i32_2 = arith.constant 0 : i32
    return %c0_i32, %c0_i32_0, %c0_i32_1 : i32, i32, i32
  }
  func.func @transform_3(%arg0: i32) -> (i32, i32, i32) {
    %c0_i32 = arith.constant 0 : i32
    %c0_i32_0 = arith.constant 0 : i32
    %c0_i32_1 = arith.constant 0 : i32
    %c0_i32_2 = arith.constant 0 : i32
    return %c0_i32, %c0_i32_0, %c0_i32_1 : i32, i32, i32
  }
  func.func @transform_4(%arg0: i32) -> (i32, i32, i32) {
    %c0_i32 = arith.constant 0 : i32
    %c0_i32_0 = arith.constant 0 : i32
    %c0_i32_1 = arith.constant 0 : i32
    return %arg0, %c0_i32, %c0_i32_0 : i32, i32, i32
  }
  func.func @transform_5(%arg0: i32) -> (i32, i32, i32) {
    %c0_i32 = arith.constant 0 : i32
    %0 = arith.subi %c0_i32, %arg0 : i32
    %c0_i32_0 = arith.constant 0 : i32
    %c0_i32_1 = arith.constant 0 : i32
    %c0_i32_2 = arith.constant 0 : i32
    return %0, %c0_i32_0, %c0_i32_1 : i32, i32, i32
  }
  func.func @transform_6(%arg0: i32) -> (i32, i32, i32) {
    %c0_i32 = arith.constant 0 : i32
    %c0_i32_0 = arith.constant 0 : i32
    %c0_i32_1 = arith.constant 0 : i32
    %c0_i32_2 = arith.constant 0 : i32
    return %c0_i32, %c0_i32_0, %c0_i32_1 : i32, i32, i32
  }
}

</mosaic_0001>

<llo_original>
// kernel: birnn_forward.2
$region0: #{birnn_forward.2}
  #allocation0 [shape = 'u32[]', space=smem, size = 0x4, offset = 0x4, fixed_abs, tag = 'smem constant byte address 0x4 - core index']
  #allocation1 [shape = 'u32[144,128]{1,0:T(1,128)}', space=vmem, size = 0x12000, scoped, tag = 'internal scratch']
  #allocation2 [shape = 'f32[16,128]{1,0:T(8,128)}', space=vmem, size = 0x2000, scoped, tag = 'scratch operand']
  #allocation3 [shape = 'f32[16,128]{1,0:T(8,128)}', space=vmem, size = 0x2000, scoped, tag = 'scratch operand']
  %s0 = inlined_call_operand.vmem [shape: bf16[8,16,128], index: 0, kind: input, shape index: {}]
  %s1 = inlined_call_operand.vmem [shape: bf16[8,16,128], index: 1, kind: input, shape index: {}]
  %s2 = inlined_call_operand.vmem [shape: f32[2,16,128], index: 2, kind: input, shape index: {}]
  %s3 = inlined_call_operand.vmem [shape: bf16[2,128,128], index: 3, kind: input, shape index: {}]
  %s4 = inlined_call_operand.vmem [shape: bf16[8,16,128], index: 4, kind: output, shape index: {0}]
  %s5 = inlined_call_operand.vmem [shape: bf16[8,16,128], index: 5, kind: output, shape index: {1}]
  %s6 = inlined_call_operand.vmem [shape: f32[2,16,128], index: 6, kind: output, shape index: {2}]
  %7 = xla_tuple %s4, %s5, %s6
  %s8 = sld [smem:[#allocation0]]
  $region50: #{birnn_forward.2} parent=0
    _
  %s10 = ssub.s32 1, %s8
  %s11 = scalar_select 0, %s10, %s8
  // Predicated region
  $region2: #{birnn_forward.2} parent=0 // pred_check
    _
  $region3: #{birnn_forward.2} parent=0 // pred_check_branch
    %13 = sbr.rel (0) target = $region5
  $region4: #{birnn_forward.2} parent=0 // pred_region
    _
  $region5: #{birnn_forward.2} parent=0 // pred_fallthru
    _
  // Predicated region
  $region6: #{birnn_forward.2} parent=0 // pred_check
    _
  $region7: #{birnn_forward.2} parent=0 // pred_check_branch
    %15 = sbr.rel (0) target = $region9
  $region8: #{birnn_forward.2} parent=0 // pred_region
    %s16 = ssub.s32 0, 0
    %s17 = smul.u32 8, %s16
    %p18 = scmp.lt.s32.totalorder %s17, 7
    %s19 = scalar_select %p18, %s17, 7
    %s20 = smul.addr %s19, 2
    %s21 = smul.addr %s20, 4
    %s22 = scalar_lea.vmem %s1, %s21
    %s23 = ssub.s32 0, 0
    %s24 = smul.u32 8, %s23
  $region9: #{birnn_forward.2} parent=0 // pred_fallthru
    _
  // Predicated region
  $region10: #{birnn_forward.2} parent=0 // pred_check
    _
  $region11: #{birnn_forward.2} parent=0 // pred_check_branch
    %26 = sbr.rel (0) target = $region13
  $region12: #{birnn_forward.2} parent=0 // pred_region
    _
  $region13: #{birnn_forward.2} parent=0 // pred_fallthru
    _
  // Predicated region
  $region14: #{birnn_forward.2} parent=0 // pred_check
    _
  $region15: #{birnn_forward.2} parent=0 // pred_check_branch
    %28 = sbr.rel (0) target = $region17
  $region16: #{birnn_forward.2} parent=0 // pred_region
    _
  $region17: #{birnn_forward.2} parent=0 // pred_fallthru
    _
  %s29 = ssub.s32 0, 0
  %s30 = smul.u32 8, %s29
  %p31 = scmp.lt.s32.totalorder %s30, 7
  %s32 = scalar_select %p31, %s30, 7
  %s33 = smul.addr %s32, 2
  %s34 = smul.addr %s33, 4
  %s35 = scalar_lea.vmem %s1, %s34
  %s36 = ssub.s32 0, 0
  %s37 = smul.u32 8, %s36
  %p38 = scmp.lt.s32.totalorder %s37, 7
  %s39 = scalar_select %p38, %s37, 7
  %s40 = smul.addr %s39, 8
  %s41 = scalar_lea.vmem %s5, %s40
  %s42 = ssub.s32 0, 0
  %s43 = smul.u32 8, %s42
  %p44 = scmp.lt.s32.totalorder %s43, 7
  %s45 = scalar_select %p44, %s43, 7
  %s46 = smul.addr %s45, 2
  %s47 = smul.addr %s46, 4
  %s48 = scalar_lea.vmem %s1, %s47
  %s49 = ssub.s32 0, 0
  %s50 = smul.u32 8, %s49
  %s51 = ssub.s32 0, 0
  %s52 = smul.u32 8, %s51
  %p53 = scmp.lt.s32.totalorder %s52, 7
  %s54 = scalar_select %p53, %s52, 7
  %s55 = smul.addr %s54, 8
  %s56 = scalar_lea.vmem %s5, %s55
  %s57 = ssub.s32 0, 0
  %s58 = smul.u32 8, %s57
  %p60 = scmp.eq.s32.totalorder 0, 0
  // Predicated region
  $region18: #{birnn_forward.2} parent=0 // pred_check
    %p61 = pneg %p60
  $region19: #{birnn_forward.2} parent=0 // pred_check_branch
    %63 = sbr.rel (%p61) target = $region21
  $region20: #{birnn_forward.2} parent=0 // pred_region
    %v64 = vld [vmem:[%s2] sm:$0xff]
    %v65 = vld [vmem:[%s2 + $0x8] sm:$0xff]
    %66 = vst [vmem:[#allocation2] sm:$0xff] %v64
    %67 = vst [vmem:[#allocation2 + $0x8] sm:$0xff] %v65
    %s68 = scalar_lea.vmem %s2, 16
    %v69 = vld [vmem:[%s68] sm:$0xff]
    %v70 = vld [vmem:[%s68 + $0x8] sm:$0xff]
    %71 = vst [vmem:[#allocation3] sm:$0xff] %v69
    %72 = vst [vmem:[#allocation3 + $0x8] sm:$0xff] %v70
  $region21: #{birnn_forward.2} parent=0 // pred_fallthru
    _
  %v73 = vld [vmem:[%s3] sm:$0xf]
  %v74 = vld [vmem:[%s3 + $0x4] sm:$0xf]
  %v75 = vld [vmem:[%s3 + $0x8] sm:$0xf]
  %v76 = vld [vmem:[%s3 + $0xc] sm:$0xf]
  %v77 = vld [vmem:[%s3 + $0x10] sm:$0xf]
  %v78 = vld [vmem:[%s3 + $0x14] sm:$0xf]
  %v79 = vld [vmem:[%s3 + $0x18] sm:$0xf]
  %v80 = vld [vmem:[%s3 + $0x1c] sm:$0xf]
  %v81 = vld [vmem:[%s3 + $0x20] sm:$0xf]
  %v82 = vld [vmem:[%s3 + $0x24] sm:$0xf]
  %v83 = vld [vmem:[%s3 + $0x28] sm:$0xf]
  %v84 = vld [vmem:[%s3 + $0x2c] sm:$0xf]
  %v85 = vld [vmem:[%s3 + $0x30] sm:$0xf]
  %v86 = vld [vmem:[%s3 + $0x34] sm:$0xf]
  %v87 = vld [vmem:[%s3 + $0x38] sm:$0xf]
  %v88 = vld [vmem:[%s3 + $0x3c] sm:$0xf]
  %s89 = scalar_lea.vmem %s3, 64
  %v90 = vld [vmem:[%s89] sm:$0xf]
  %v91 = vld [vmem:[%s89 + $0x4] sm:$0xf]
  %v92 = vld [vmem:[%s89 + $0x8] sm:$0xf]
  %v93 = vld [vmem:[%s89 + $0xc] sm:$0xf]
  %v94 = vld [vmem:[%s89 + $0x10] sm:$0xf]
  %v95 = vld [vmem:[%s89 + $0x14] sm:$0xf]
  %v96 = vld [vmem:[%s89 + $0x18] sm:$0xf]
  %v97 = vld [vmem:[%s89 + $0x1c] sm:$0xf]
  %v98 = vld [vmem:[%s89 + $0x20] sm:$0xf]
  %v99 = vld [vmem:[%s89 + $0x24] sm:$0xf]
  %v100 = vld [vmem:[%s89 + $0x28] sm:$0xf]
  %v101 = vld [vmem:[%s89 + $0x2c] sm:$0xf]
  %v102 = vld [vmem:[%s89 + $0x30] sm:$0xf]
  %v103 = vld [vmem:[%s89 + $0x34] sm:$0xf]
  %v104 = vld [vmem:[%s89 + $0x38] sm:$0xf]
  %v105 = vld [vmem:[%s89 + $0x3c] sm:$0xf]
  %v106 = vld [vmem:[#allocation2] sm:$0xff]
  %v107 = vld [vmem:[#allocation2 + $0x8] sm:$0xff]
  %v108 = vld [vmem:[%s0] sm:$0xf]
  %v109 = vld [vmem:[%s0 + $0x4] sm:$0xf]
  %v110 = vunpack.c.l.bf16 %v108
  %v111 = vunpack.c.l.bf16 %v109
  %v112 = vpack.c.bf16 %v107, %v106
  %v129 = vunpack.c.l.b16 %v73
  %v130 = vunpack.c.l.b16 %v74
  %v131 = vunpack.c.l.b16 %v75
  %v132 = vunpack.c.l.b16 %v76
  %v133 = vunpack.c.l.b16 %v77
  %v134 = vunpack.c.l.b16 %v78
  %v135 = vunpack.c.l.b16 %v79
  %v136 = vunpack.c.l.b16 %v80
  %v137 = vunpack.c.l.b16 %v81
  %v138 = vunpack.c.l.b16 %v82
  %v139 = vunpack.c.l.b16 %v83
  %v140 = vunpack.c.l.b16 %v84
  %v141 = vunpack.c.l.b16 %v85
  %v142 = vunpack.c.l.b16 %v86
  %v143 = vunpack.c.l.b16 %v87
  %v144 = vunpack.c.l.b16 %v88
  %v145 = vpack.c.b16 %v130, %v129
  %v146 = vpack.c.b16 %v132, %v131
  %v147 = vpack.c.b16 %v134, %v133
  %v148 = vpack.c.b16 %v136, %v135
  %v149 = vpack.c.b16 %v138, %v137
  %v150 = vpack.c.b16 %v140, %v139
  %v151 = vpack.c.b16 %v142, %v141
  %v152 = vpack.c.b16 %v144, %v143
  %161 = vmatprep.subr.bf16.mxu0 0
  %162 = vmatpush1.bf16.msra.mxu0 %v145
  %163 = vmatprep.subr.bf16.mxu0 0
  %164 = vmatpush1.bf16.msra.mxu0 %v146
  %165 = vmatprep.subr.bf16.mxu0 0
  %166 = vmatpush1.bf16.msra.mxu0 %v147
  %167 = vmatprep.subr.bf16.mxu0 0
  %168 = vmatpush1.bf16.msra.mxu0 %v148
  %169 = vmatprep.subr.bf16.mxu0 0
  %170 = vmatpush1.bf16.msra.mxu0 %v149
  %171 = vmatprep.subr.bf16.mxu0 0
  %172 = vmatpush1.bf16.msra.mxu0 %v150
  %173 = vmatprep.subr.bf16.mxu0 0
  %174 = vmatpush1.bf16.msra.mxu0 %v151
  %175 = vmatprep.subr.bf16.mxu0 0
  %176 = vmatpush1.bf16.msra.mxu0 %v152
  %177 = vmatprep.subr.bf16.mxu0 0
  %178 = vmatpush1.bf16.msra.mxu0 0
  %179 = vmatprep.subr.bf16.mxu0 0
  %180 = vmatpush1.bf16.msra.mxu0 0
  %181 = vmatprep.subr.bf16.mxu0 0
  %182 = vmatpush1.bf16.msra.mxu0 0
  %183 = vmatprep.subr.bf16.mxu0 0
  %184 = vmatpush1.bf16.msra.mxu0 0
  %185 = vmatprep.subr.bf16.mxu0 0
  %186 = vmatpush1.bf16.msra.mxu0 0
  %187 = vmatprep.subr.bf16.mxu0 0
  %188 = vmatpush1.bf16.msra.mxu0 0
  %189 = vmatprep.subr.bf16.mxu0 0
  %190 = vmatpush1.bf16.msra.mxu0 0
  %191 = vmatprep.subr.bf16.mxu0 0
  %192 = vmatpush1.bf16.msra.mxu0 0
  %193 = vmatprep.mubr.bf16.mxu0 0
  %194 = vmatmul.mubr.bf16.gmra.mrb[0].mxu0 %v112
  %v195 = vpop.f32.mrb[0].mxu0
  %v196 = vadd.f32 0.0, %v195
  %v197 = vpop.f32.mrb[0].mxu0
  %v198 = vpop.f32.mrb[0].mxu0
  %v199 = vadd.f32 0.0, %v198
  %v200 = vpop.f32.mrb[0].mxu0
  %201 = vdwg.mxu0
  %v202 = vadd.f32 %v110, %v196
  %v203 = vadd.f32 %v111, %v199
  %v204 = vtanh.pop %v202
  %v205 = vtanh.pop %v203
  %206 = vst [vmem:[#allocation2] sm:$0xff] %v204
  %207 = vst [vmem:[#allocation2 + $0x8] sm:$0xff] %v205
  %v208 = vpack.c.bf16 %v205, %v204
  %209 = vst [vmem:[%s4] sm:$0xff] %v208
  %v210 = vld [vmem:[#allocation3] sm:$0xff]
  %v211 = vld [vmem:[#allocation3 + $0x8] sm:$0xff]
  %s212 = scalar_lea.vmem %s48, 56
  %v213 = vld [vmem:[%s212] sm:$0xf]
  %v214 = vld [vmem:[%s212 + $0x4] sm:$0xf]
  %v215 = vunpack.c.l.bf16 %v213
  %v216 = vunpack.c.l.bf16 %v214
  %v217 = vpack.c.bf16 %v211, %v210
  %v234 = vunpack.c.l.b16 %v90
  %v235 = vunpack.c.l.b16 %v91
  %v236 = vunpack.c.l.b16 %v92
  %v237 = vunpack.c.l.b16 %v93
  %v238 = vunpack.c.l.b16 %v94
  %v239 = vunpack.c.l.b16 %v95
  %v240 = vunpack.c.l.b16 %v96
  %v241 = vunpack.c.l.b16 %v97
  %v242 = vunpack.c.l.b16 %v98
  %v243 = vunpack.c.l.b16 %v99
  %v244 = vunpack.c.l.b16 %v100
  %v245 = vunpack.c.l.b16 %v101
  %v246 = vunpack.c.l.b16 %v102
  %v247 = vunpack.c.l.b16 %v103
  %v248 = vunpack.c.l.b16 %v104
  %v249 = vunpack.c.l.b16 %v105
  %v250 = vpack.c.b16 %v235, %v234
  %v251 = vpack.c.b16 %v237, %v236
  %v252 = vpack.c.b16 %v239, %v238
  %v253 = vpack.c.b16 %v241, %v240
  %v254 = vpack.c.b16 %v243, %v242
  %v255 = vpack.c.b16 %v245, %v244
  %v256 = vpack.c.b16 %v247, %v246
  %v257 = vpack.c.b16 %v249, %v248
  %266 = vmatprep.subr.bf16.mxu0 0
  %267 = vmatpush1.bf16.msra.mxu0 %v250
  %268 = vmatprep.subr.bf16.mxu0 0
  %269 = vmatpush1.bf16.msra.mxu0 %v251
  %270 = vmatprep.subr.bf16.mxu0 0
  %271 = vmatpush1.bf16.msra.mxu0 %v252
  %272 = vmatprep.subr.bf16.mxu0 0
  %273 = vmatpush1.bf16.msra.mxu0 %v253
  %274 = vmatprep.subr.bf16.mxu0 0
  %275 = vmatpush1.bf16.msra.mxu0 %v254
  %276 = vmatprep.subr.bf16.mxu0 0
  %277 = vmatpush1.bf16.msra.mxu0 %v255
  %278 = vmatprep.subr.bf16.mxu0 0
  %279 = vmatpush1.bf16.msra.mxu0 %v256
  %280 = vmatprep.subr.bf16.mxu0 0
  %281 = vmatpush1.bf16.msra.mxu0 %v257
  %282 = vmatprep.subr.bf16.mxu0 0
  %283 = vmatpush1.bf16.msra.mxu0 0
  %284 = vmatprep.subr.bf16.mxu0 0
  %285 = vmatpush1.bf16.msra.mxu0 0
  %286 = vmatprep.subr.bf16.mxu0 0
  %287 = vmatpush1.bf16.msra.mxu0 0
  %288 = vmatprep.subr.bf16.mxu0 0
  %289 = vmatpush1.bf16.msra.mxu0 0
  %290 = vmatprep.subr.bf16.mxu0 0
  %291 = vmatpush1.bf16.msra.mxu0 0
  %292 = vmatprep.subr.bf16.mxu0 0
  %293 = vmatpush1.bf16.msra.mxu0 0
  %294 = vmatprep.subr.bf16.mxu0 0
  %295 = vmatpush1.bf16.msra.mxu0 0
  %296 = vmatprep.subr.bf16.mxu0 0
  %297 = vmatpush1.bf16.msra.mxu0 0
  %298 = vmatprep.mubr.bf16.mxu0 0
  %299 = vmatmul.mubr.bf16.gmra.mrb[0].mxu0 %v217
  %v300 = vpop.f32.mrb[0].mxu0
  %v301 = vadd.f32 0.0, %v300
  %v302 = vpop.f32.mrb[0].mxu0
  %v303 = vpop.f32.mrb[0].mxu0
  %v304 = vadd.f32 0.0, %v303
  %v305 = vpop.f32.mrb[0].mxu0
  %306 = vdwg.mxu0
  %v307 = vadd.f32 %v215, %v301
  %v308 = vadd.f32 %v216, %v304
  %v309 = vtanh.pop %v307
  %v310 = vtanh.pop %v308
  %311 = vst [vmem:[#allocation3] sm:$0xff] %v309
  %312 = vst [vmem:[#allocation3 + $0x8] sm:$0xff] %v310
  %v313 = vpack.c.bf16 %v310, %v309
  %s314 = scalar_lea.vmem %s56, 56
  %315 = vst [vmem:[%s314] sm:$0xff] %v313
  %v316 = vld [vmem:[#allocation2] sm:$0xff]
  %v317 = vld [vmem:[#allocation2 + $0x8] sm:$0xff]
  %s318 = scalar_lea.vmem %s0, 8
  %v319 = vld [vmem:[%s318] sm:$0xf]
  %v320 = vld [vmem:[%s318 + $0x4] sm:$0xf]
  %v321 = vunpack.c.l.bf16 %v319
  %v322 = vunpack.c.l.bf16 %v320
  %v323 = vpack.c.bf16 %v317, %v316
  %324 = vmatprep.subr.bf16.mxu0 0
  %325 = vmatpush1.bf16.msra.mxu0 %v145
  %326 = vmatprep.subr.bf16.mxu0 0
  %327 = vmatpush1.bf16.msra.mxu0 %v146
  %328 = vmatprep.subr.bf16.mxu0 0
  %329 = vmatpush1.bf16.msra.mxu0 %v147
  %330 = vmatprep.subr.bf16.mxu0 0
  %331 = vmatpush1.bf16.msra.mxu0 %v148
  %332 = vmatprep.subr.bf16.mxu0 0
  %333 = vmatpush1.bf16.msra.mxu0 %v149
  %334 = vmatprep.subr.bf16.mxu0 0
  %335 = vmatpush1.bf16.msra.mxu0 %v150
  %336 = vmatprep.subr.bf16.mxu0 0
  %337 = vmatpush1.bf16.msra.mxu0 %v151
  %338 = vmatprep.subr.bf16.mxu0 0
  %339 = vmatpush1.bf16.msra.mxu0 %v152
  %340 = vmatprep.subr.bf16.mxu0 0
  %341 = vmatpush1.bf16.msra.mxu0 0
  %342 = vmatprep.subr.bf16.mxu0 0
  %343 = vmatpush1.bf16.msra.mxu0 0
  %344 = vmatprep.subr.bf16.mxu0 0
  %345 = vmatpush1.bf16.msra.mxu0 0
  %346 = vmatprep.subr.bf16.mxu0 0
  %347 = vmatpush1.bf16.msra.mxu0 0
  %348 = vmatprep.subr.bf16.mxu0 0
  %349 = vmatpush1.bf16.msra.mxu0 0
  %350 = vmatprep.subr.bf16.mxu0 0
  %351 = vmatpush1.bf16.msra.mxu0 0
  %352 = vmatprep.subr.bf16.mxu0 0
  %353 = vmatpush1.bf16.msra.mxu0 0
  %354 = vmatprep.subr.bf16.mxu0 0
  %355 = vmatpush1.bf16.msra.mxu0 0
  %356 = vmatprep.mubr.bf16.mxu0 0
  %357 = vmatmul.mubr.bf16.gmra.mrb[0].mxu0 %v323
  %v358 = vpop.f32.mrb[0].mxu0
  %v359 = vadd.f32 0.0, %v358
  %v360 = vpop.f32.mrb[0].mxu0
  %v361 = vpop.f32.mrb[0].mxu0
  %v362 = vadd.f32 0.0, %v361
  %v363 = vpop.f32.mrb[0].mxu0
  %364 = vdwg.mxu0
  %v365 = vadd.f32 %v321, %v359
  %v366 = vadd.f32 %v322, %v362
  %v367 = vtanh.pop %v365
  %v368 = vtanh.pop %v366
  %369 = vst [vmem:[#allocation2] sm:$0xff] %v367
  %370 = vst [vmem:[#allocation2 + $0x8] sm:$0xff] %v368
  %v371 = vpack.c.bf16 %v368, %v367
  %s372 = scalar_lea.vmem %s4, 8
  %373 = vst [vmem:[%s372] sm:$0xff] %v371
  %v374 = vld [vmem:[#allocation3] sm:$0xff]
  %v375 = vld [vmem:[#allocation3 + $0x8] sm:$0xff]
  %s376 = scalar_lea.vmem %s48, 48
  %v377 = vld [vmem:[%s376] sm:$0xf]
  %v378 = vld [vmem:[%s376 + $0x4] sm:$0xf]
  %v379 = vunpack.c.l.bf16 %v377
  %v380 = vunpack.c.l.bf16 %v378
  %v381 = vpack.c.bf16 %v375, %v374
  %382 = vmatprep.subr.bf16.mxu0 0
  %383 = vmatpush1.bf16.msra.mxu0 %v250
  %384 = vmatprep.subr.bf16.mxu0 0
  %385 = vmatpush1.bf16.msra.mxu0 %v251
  %386 = vmatprep.subr.bf16.mxu0 0
  %387 = vmatpush1.bf16.msra.mxu0 %v252
  %388 = vmatprep.subr.bf16.mxu0 0
  %389 = vmatpush1.bf16.msra.mxu0 %v253
  %390 = vmatprep.subr.bf16.mxu0 0
  %391 = vmatpush1.bf16.msra.mxu0 %v254
  %392 = vmatprep.subr.bf16.mxu0 0
  %393 = vmatpush1.bf16.msra.mxu0 %v255
  %394 = vmatprep.subr.bf16.mxu0 0
  %395 = vmatpush1.bf16.msra.mxu0 %v256
  %396 = vmatprep.subr.bf16.mxu0 0
  %397 = vmatpush1.bf16.msra.mxu0 %v257
  %398 = vmatprep.subr.bf16.mxu0 0
  %399 = vmatpush1.bf16.msra.mxu0 0
  %400 = vmatprep.subr.bf16.mxu0 0
  %401 = vmatpush1.bf16.msra.mxu0 0
  %402 = vmatprep.subr.bf16.mxu0 0
  %403 = vmatpush1.bf16.msra.mxu0 0
  %404 = vmatprep.subr.bf16.mxu0 0
  %405 = vmatpush1.bf16.msra.mxu0 0
  %406 = vmatprep.subr.bf16.mxu0 0
  %407 = vmatpush1.bf16.msra.mxu0 0
  %408 = vmatprep.subr.bf16.mxu0 0
  %409 = vmatpush1.bf16.msra.mxu0 0
  %410 = vmatprep.subr.bf16.mxu0 0
  %411 = vmatpush1.bf16.msra.mxu0 0
  %412 = vmatprep.subr.bf16.mxu0 0
  %413 = vmatpush1.bf16.msra.mxu0 0
  %414 = vmatprep.mubr.bf16.mxu0 0
  %415 = vmatmul.mubr.bf16.gmra.mrb[0].mxu0 %v381
  %v416 = vpop.f32.mrb[0].mxu0
  %v417 = vadd.f32 0.0, %v416
  %v418 = vpop.f32.mrb[0].mxu0
  %v419 = vpop.f32.mrb[0].mxu0
  %v420 = vadd.f32 0.0, %v419
  %v421 = vpop.f32.mrb[0].mxu0
  %422 = vdwg.mxu0
  %v423 = vadd.f32 %v379, %v417
  %v424 = vadd.f32 %v380, %v420
  %v425 = vtanh.pop %v423
  %v426 = vtanh.pop %v424
  %427 = vst [vmem:[#allocation3] sm:$0xff] %v425
  %428 = vst [vmem:[#allocation3 + $0x8] sm:$0xff] %v426
  %v429 = vpack.c.bf16 %v426, %v425
  %s430 = scalar_lea.vmem %s56, 48
  %431 = vst [vmem:[%s430] sm:$0xff] %v429
  %v432 = vld [vmem:[#allocation2] sm:$0xff]
  %v433 = vld [vmem:[#allocation2 + $0x8] sm:$0xff]
  %s434 = scalar_lea.vmem %s0, 16
  %v435 = vld [vmem:[%s434] sm:$0xf]
  %v436 = vld [vmem:[%s434 + $0x4] sm:$0xf]
  %v437 = vunpack.c.l.bf16 %v435
  %v438 = vunpack.c.l.bf16 %v436
  %v439 = vpack.c.bf16 %v433, %v432
  %440 = vmatprep.subr.bf16.mxu0 0
  %441 = vmatpush1.bf16.msra.mxu0 %v145
  %442 = vmatprep.subr.bf16.mxu0 0
  %443 = vmatpush1.bf16.msra.mxu0 %v146
  %444 = vmatprep.subr.bf16.mxu0 0
  %445 = vmatpush1.bf16.msra.mxu0 %v147
  %446 = vmatprep.subr.bf16.mxu0 0
  %447 = vmatpush1.bf16.msra.mxu0 %v148
  %448 = vmatprep.subr.bf16.mxu0 0
  %449 = vmatpush1.bf16.msra.mxu0 %v149
  %450 = vmatprep.subr.bf16.mxu0 0
  %451 = vmatpush1.bf16.msra.mxu0 %v150
  %452 = vmatprep.subr.bf16.mxu0 0
  %453 = vmatpush1.bf16.msra.mxu0 %v151
  %454 = vmatprep.subr.bf16.mxu0 0
  %455 = vmatpush1.bf16.msra.mxu0 %v152
  %456 = vmatprep.subr.bf16.mxu0 0
  %457 = vmatpush1.bf16.msra.mxu0 0
  %458 = vmatprep.subr.bf16.mxu0 0
  %459 = vmatpush1.bf16.msra.mxu0 0
  %460 = vmatprep.subr.bf16.mxu0 0
  %461 = vmatpush1.bf16.msra.mxu0 0
  %462 = vmatprep.subr.bf16.mxu0 0
  %463 = vmatpush1.bf16.msra.mxu0 0
  %464 = vmatprep.subr.bf16.mxu0 0
  %465 = vmatpush1.bf16.msra.mxu0 0
  %466 = vmatprep.subr.bf16.mxu0 0
  %467 = vmatpush1.bf16.msra.mxu0 0
  %468 = vmatprep.subr.bf16.mxu0 0
  %469 = vmatpush1.bf16.msra.mxu0 0
  %470 = vmatprep.subr.bf16.mxu0 0
  %471 = vmatpush1.bf16.msra.mxu0 0
  %472 = vmatprep.mubr.bf16.mxu0 0
  %473 = vmatmul.mubr.bf16.gmra.mrb[0].mxu0 %v439
  %v474 = vpop.f32.mrb[0].mxu0
  %v475 = vadd.f32 0.0, %v474
  %v476 = vpop.f32.mrb[0].mxu0
  %v477 = vpop.f32.mrb[0].mxu0
  %v478 = vadd.f32 0.0, %v477
  %v479 = vpop.f32.mrb[0].mxu0
  %480 = vdwg.mxu0
  %v481 = vadd.f32 %v437, %v475
  %v482 = vadd.f32 %v438, %v478
  %v483 = vtanh.pop %v481
  %v484 = vtanh.pop %v482
  %485 = vst [vmem:[#allocation2] sm:$0xff] %v483
  %486 = vst [vmem:[#allocation2 + $0x8] sm:$0xff] %v484
  %v487 = vpack.c.bf16 %v484, %v483
  %s488 = scalar_lea.vmem %s4, 16
  %489 = vst [vmem:[%s488] sm:$0xff] %v487
  %v490 = vld [vmem:[#allocation3] sm:$0xff]
  %v491 = vld [vmem:[#allocation3 + $0x8] sm:$0xff]
  %s492 = scalar_lea.vmem %s48, 40
  %v493 = vld [vmem:[%s492] sm:$0xf]
  %v494 = vld [vmem:[%s492 + $0x4] sm:$0xf]
  %v495 = vunpack.c.l.bf16 %v493
  %v496 = vunpack.c.l.bf16 %v494
  %v497 = vpack.c.bf16 %v491, %v490
  %498 = vmatprep.subr.bf16.mxu0 0
  %499 = vmatpush1.bf16.msra.mxu0 %v250
  %500 = vmatprep.subr.bf16.mxu0 0
  %501 = vmatpush1.bf16.msra.mxu0 %v251
  %502 = vmatprep.subr.bf16.mxu0 0
  %503 = vmatpush1.bf16.msra.mxu0 %v252
  %504 = vmatprep.subr.bf16.mxu0 0
  %505 = vmatpush1.bf16.msra.mxu0 %v253
  %506 = vmatprep.subr.bf16.mxu0 0
  %507 = vmatpush1.bf16.msra.mxu0 %v254
  %508 = vmatprep.subr.bf16.mxu0 0
  %509 = vmatpush1.bf16.msra.mxu0 %v255
  %510 = vmatprep.subr.bf16.mxu0 0
  %511 = vmatpush1.bf16.msra.mxu0 %v256
  %512 = vmatprep.subr.bf16.mxu0 0
  %513 = vmatpush1.bf16.msra.mxu0 %v257
  %514 = vmatprep.subr.bf16.mxu0 0
  %515 = vmatpush1.bf16.msra.mxu0 0
  %516 = vmatprep.subr.bf16.mxu0 0
  %517 = vmatpush1.bf16.msra.mxu0 0
  %518 = vmatprep.subr.bf16.mxu0 0
  %519 = vmatpush1.bf16.msra.mxu0 0
  %520 = vmatprep.subr.bf16.mxu0 0
  %521 = vmatpush1.bf16.msra.mxu0 0
  %522 = vmatprep.subr.bf16.mxu0 0
  %523 = vmatpush1.bf16.msra.mxu0 0
  %524 = vmatprep.subr.bf16.mxu0 0
  %525 = vmatpush1.bf16.msra.mxu0 0
  %526 = vmatprep.subr.bf16.mxu0 0
  %527 = vmatpush1.bf16.msra.mxu0 0
  %528 = vmatprep.subr.bf16.mxu0 0
  %529 = vmatpush1.bf16.msra.mxu0 0
  %530 = vmatprep.mubr.bf16.mxu0 0
  %531 = vmatmul.mubr.bf16.gmra.mrb[0].mxu0 %v497
  %v532 = vpop.f32.mrb[0].mxu0
  %v533 = vadd.f32 0.0, %v532
  %v534 = vpop.f32.mrb[0].mxu0
  %v535 = vpop.f32.mrb[0].mxu0
  %v536 = vadd.f32 0.0, %v535
  %v537 = vpop.f32.mrb[0].mxu0
  %538 = vdwg.mxu0
  %v539 = vadd.f32 %v495, %v533
  %v540 = vadd.f32 %v496, %v536
  %v541 = vtanh.pop %v539
  %v542 = vtanh.pop %v540
  %543 = vst [vmem:[#allocation3] sm:$0xff] %v541
  %544 = vst [vmem:[#allocation3 + $0x8] sm:$0xff] %v542
  %v545 = vpack.c.bf16 %v542, %v541
  %s546 = scalar_lea.vmem %s56, 40
  %547 = vst [vmem:[%s546] sm:$0xff] %v545
  %v548 = vld [vmem:[#allocation2] sm:$0xff]
  %v549 = vld [vmem:[#allocation2 + $0x8] sm:$0xff]
  %s550 = scalar_lea.vmem %s0, 24
  %v551 = vld [vmem:[%s550] sm:$0xf]
  %v552 = vld [vmem:[%s550 + $0x4] sm:$0xf]
  %v553 = vunpack.c.l.bf16 %v551
  %v554 = vunpack.c.l.bf16 %v552
  %v555 = vpack.c.bf16 %v549, %v548
  %556 = vmatprep.subr.bf16.mxu0 0
  %557 = vmatpush1.bf16.msra.mxu0 %v145
  %558 = vmatprep.subr.bf16.mxu0 0
  %559 = vmatpush1.bf16.msra.mxu0 %v146
  %560 = vmatprep.subr.bf16.mxu0 0
  %561 = vmatpush1.bf16.msra.mxu0 %v147
  %562 = vmatprep.subr.bf16.mxu0 0
  %563 = vmatpush1.bf16.msra.mxu0 %v148
  %564 = vmatprep.subr.bf16.mxu0 0
  %565 = vmatpush1.bf16.msra.mxu0 %v149
  %566 = vmatprep.subr.bf16.mxu0 0
  %567 = vmatpush1.bf16.msra.mxu0 %v150
  %568 = vmatprep.subr.bf16.mxu0 0
  %569 = vmatpush1.bf16.msra.mxu0 %v151
  %570 = vmatprep.subr.bf16.mxu0 0
  %571 = vmatpush1.bf16.msra.mxu0 %v152
  %572 = vmatprep.subr.bf16.mxu0 0
  %573 = vmatpush1.bf16.msra.mxu0 0
  %574 = vmatprep.subr.bf16.mxu0 0
  %575 = vmatpush1.bf16.msra.mxu0 0
  %576 = vmatprep.subr.bf16.mxu0 0
  %577 = vmatpush1.bf16.msra.mxu0 0
  %578 = vmatprep.subr.bf16.mxu0 0
  %579 = vmatpush1.bf16.msra.mxu0 0
  %580 = vmatprep.subr.bf16.mxu0 0
  %581 = vmatpush1.bf16.msra.mxu0 0
  %582 = vmatprep.subr.bf16.mxu0 0
  %583 = vmatpush1.bf16.msra.mxu0 0
  %584 = vmatprep.subr.bf16.mxu0 0
  %585 = vmatpush1.bf16.msra.mxu0 0
  %586 = vmatprep.subr.bf16.mxu0 0
  %587 = vmatpush1.bf16.msra.mxu0 0
  %588 = vmatprep.mubr.bf16.mxu0 0
  %589 = vmatmul.mubr.bf16.gmra.mrb[0].mxu0 %v555
  %v590 = vpop.f32.mrb[0].mxu0
  %v591 = vadd.f32 0.0, %v590
  %v592 = vpop.f32.mrb[0].mxu0
  %v593 = vpop.f32.mrb[0].mxu0
  %v594 = vadd.f32 0.0, %v593
  %v595 = vpop.f32.mrb[0].mxu0
  %596 = vdwg.mxu0
  %v597 = vadd.f32 %v553, %v591
  %v598 = vadd.f32 %v554, %v594
  %v599 = vtanh.pop %v597
  %v600 = vtanh.pop %v598
  %601 = vst [vmem:[#allocation2] sm:$0xff] %v599
  %602 = vst [vmem:[#allocation2 + $0x8] sm:$0xff] %v600
  %v603 = vpack.c.bf16 %v600, %v599
  %s604 = scalar_lea.vmem %s4, 24
  %605 = vst [vmem:[%s604] sm:$0xff] %v603
  %v606 = vld [vmem:[#allocation3] sm:$0xff]
  %v607 = vld [vmem:[#allocation3 + $0x8] sm:$0xff]
  %s608 = scalar_lea.vmem %s48, 32
  %v609 = vld [vmem:[%s608] sm:$0xf]
  %v610 = vld [vmem:[%s608 + $0x4] sm:$0xf]
  %v611 = vunpack.c.l.bf16 %v609
  %v612 = vunpack.c.l.bf16 %v610
  %v613 = vpack.c.bf16 %v607, %v606
  %614 = vmatprep.subr.bf16.mxu0 0
  %615 = vmatpush1.bf16.msra.mxu0 %v250
  %616 = vmatprep.subr.bf16.mxu0 0
  %617 = vmatpush1.bf16.msra.mxu0 %v251
  %618 = vmatprep.subr.bf16.mxu0 0
  %619 = vmatpush1.bf16.msra.mxu0 %v252
  %620 = vmatprep.subr.bf16.mxu0 0
  %621 = vmatpush1.bf16.msra.mxu0 %v253
  %622 = vmatprep.subr.bf16.mxu0 0
  %623 = vmatpush1.bf16.msra.mxu0 %v254
  %624 = vmatprep.subr.bf16.mxu0 0
  %625 = vmatpush1.bf16.msra.mxu0 %v255
  %626 = vmatprep.subr.bf16.mxu0 0
  %627 = vmatpush1.bf16.msra.mxu0 %v256
  %628 = vmatprep.subr.bf16.mxu0 0
  %629 = vmatpush1.bf16.msra.mxu0 %v257
  %630 = vmatprep.subr.bf16.mxu0 0
  %631 = vmatpush1.bf16.msra.mxu0 0
  %632 = vmatprep.subr.bf16.mxu0 0
  %633 = vmatpush1.bf16.msra.mxu0 0
  %634 = vmatprep.subr.bf16.mxu0 0
  %635 = vmatpush1.bf16.msra.mxu0 0
  %636 = vmatprep.subr.bf16.mxu0 0
  %637 = vmatpush1.bf16.msra.mxu0 0
  %638 = vmatprep.subr.bf16.mxu0 0
  %639 = vmatpush1.bf16.msra.mxu0 0
  %640 = vmatprep.subr.bf16.mxu0 0
  %641 = vmatpush1.bf16.msra.mxu0 0
  %642 = vmatprep.subr.bf16.mxu0 0
  %643 = vmatpush1.bf16.msra.mxu0 0
  %644 = vmatprep.subr.bf16.mxu0 0
  %645 = vmatpush1.bf16.msra.mxu0 0
  %646 = vmatprep.mubr.bf16.mxu0 0
  %647 = vmatmul.mubr.bf16.gmra.mrb[0].mxu0 %v613
  %v648 = vpop.f32.mrb[0].mxu0
  %v649 = vadd.f32 0.0, %v648
  %v650 = vpop.f32.mrb[0].mxu0
  %v651 = vpop.f32.mrb[0].mxu0
  %v652 = vadd.f32 0.0, %v651
  %v653 = vpop.f32.mrb[0].mxu0
  %654 = vdwg.mxu0
  %v655 = vadd.f32 %v611, %v649
  %v656 = vadd.f32 %v612, %v652
  %v657 = vtanh.pop %v655
  %v658 = vtanh.pop %v656
  %659 = vst [vmem:[#allocation3] sm:$0xff] %v657
  %660 = vst [vmem:[#allocation3 + $0x8] sm:$0xff] %v658
  %v661 = vpack.c.bf16 %v658, %v657
  %s662 = scalar_lea.vmem %s56, 32
  %663 = vst [vmem:[%s662] sm:$0xff] %v661
  %v664 = vld [vmem:[#allocation2] sm:$0xff]
  %v665 = vld [vmem:[#allocation2 + $0x8] sm:$0xff]
  %s666 = scalar_lea.vmem %s0, 32
  %v667 = vld [vmem:[%s666] sm:$0xf]
  %v668 = vld [vmem:[%s666 + $0x4] sm:$0xf]
  %v669 = vunpack.c.l.bf16 %v667
  %v670 = vunpack.c.l.bf16 %v668
  %v671 = vpack.c.bf16 %v665, %v664
  %672 = vmatprep.subr.bf16.mxu0 0
  %673 = vmatpush1.bf16.msra.mxu0 %v145
  %674 = vmatprep.subr.bf16.mxu0 0
  %675 = vmatpush1.bf16.msra.mxu0 %v146
  %676 = vmatprep.subr.bf16.mxu0 0
  %677 = vmatpush1.bf16.msra.mxu0 %v147
  %678 = vmatprep.subr.bf16.mxu0 0
  %679 = vmatpush1.bf16.msra.mxu0 %v148
  %680 = vmatprep.subr.bf16.mxu0 0
  %681 = vmatpush1.bf16.msra.mxu0 %v149
  %682 = vmatprep.subr.bf16.mxu0 0
  %683 = vmatpush1.bf16.msra.mxu0 %v150
  %684 = vmatprep.subr.bf16.mxu0 0
  %685 = vmatpush1.bf16.msra.mxu0 %v151
  %686 = vmatprep.subr.bf16.mxu0 0
  %687 = vmatpush1.bf16.msra.mxu0 %v152
  %688 = vmatprep.subr.bf16.mxu0 0
  %689 = vmatpush1.bf16.msra.mxu0 0
  %690 = vmatprep.subr.bf16.mxu0 0
  %691 = vmatpush1.bf16.msra.mxu0 0
  %692 = vmatprep.subr.bf16.mxu0 0
  %693 = vmatpush1.bf16.msra.mxu0 0
  %694 = vmatprep.subr.bf16.mxu0 0
  %695 = vmatpush1.bf16.msra.mxu0 0
  %696 = vmatprep.subr.bf16.mxu0 0
  %697 = vmatpush1.bf16.msra.mxu0 0
  %698 = vmatprep.subr.bf16.mxu0 0
  %699 = vmatpush1.bf16.msra.mxu0 0
  %700 = vmatprep.subr.bf16.mxu0 0
  %701 = vmatpush1.bf16.msra.mxu0 0
  %702 = vmatprep.subr.bf16.mxu0 0
  %703 = vmatpush1.bf16.msra.mxu0 0
  %704 = vmatprep.mubr.bf16.mxu0 0
  %705 = vmatmul.mubr.bf16.gmra.mrb[0].mxu0 %v671
  %v706 = vpop.f32.mrb[0].mxu0
  %v707 = vadd.f32 0.0, %v706
  %v708 = vpop.f32.mrb[0].mxu0
  %v709 = vpop.f32.mrb[0].mxu0
  %v710 = vadd.f32 0.0, %v709
  %v711 = vpop.f32.mrb[0].mxu0
  %712 = vdwg.mxu0
  %v713 = vadd.f32 %v669, %v707
  %v714 = vadd.f32 %v670, %v710
  %v715 = vtanh.pop %v713
  %v716 = vtanh.pop %v714
  %717 = vst [vmem:[#allocation2] sm:$0xff] %v715
  %718 = vst [vmem:[#allocation2 + $0x8] sm:$0xff] %v716
  %v719 = vpack.c.bf16 %v716, %v715
  %s720 = scalar_lea.vmem %s4, 32
  %721 = vst [vmem:[%s720] sm:$0xff] %v719
  %v722 = vld [vmem:[#allocation3] sm:$0xff]
  %v723 = vld [vmem:[#allocation3 + $0x8] sm:$0xff]
  %s724 = scalar_lea.vmem %s48, 24
  %v725 = vld [vmem:[%s724] sm:$0xf]
  %v726 = vld [vmem:[%s724 + $0x4] sm:$0xf]
  %v727 = vunpack.c.l.bf16 %v725
  %v728 = vunpack.c.l.bf16 %v726
  %v729 = vpack.c.bf16 %v723, %v722
  %730 = vmatprep.subr.bf16.mxu0 0
  %731 = vmatpush1.bf16.msra.mxu0 %v250
  %732 = vmatprep.subr.bf16.mxu0 0
  %733 = vmatpush1.bf16.msra.mxu0 %v251
  %734 = vmatprep.subr.bf16.mxu0 0
  %735 = vmatpush1.bf16.msra.mxu0 %v252
  %736 = vmatprep.subr.bf16.mxu0 0
  %737 = vmatpush1.bf16.msra.mxu0 %v253
  %738 = vmatprep.subr.bf16.mxu0 0
  %739 = vmatpush1.bf16.msra.mxu0 %v254
  %740 = vmatprep.subr.bf16.mxu0 0
  %741 = vmatpush1.bf16.msra.mxu0 %v255
  %742 = vmatprep.subr.bf16.mxu0 0
  %743 = vmatpush1.bf16.msra.mxu0 %v256
  %744 = vmatprep.subr.bf16.mxu0 0
  %745 = vmatpush1.bf16.msra.mxu0 %v257
  %746 = vmatprep.subr.bf16.mxu0 0
  %747 = vmatpush1.bf16.msra.mxu0 0
  %748 = vmatprep.subr.bf16.mxu0 0
  %749 = vmatpush1.bf16.msra.mxu0 0
  %750 = vmatprep.subr.bf16.mxu0 0
  %751 = vmatpush1.bf16.msra.mxu0 0
  %752 = vmatprep.subr.bf16.mxu0 0
  %753 = vmatpush1.bf16.msra.mxu0 0
  %754 = vmatprep.subr.bf16.mxu0 0
  %755 = vmatpush1.bf16.msra.mxu0 0
  %756 = vmatprep.subr.bf16.mxu0 0
  %757 = vmatpush1.bf16.msra.mxu0 0
  %758 = vmatprep.subr.bf16.mxu0 0
  %759 = vmatpush1.bf16.msra.mxu0 0
  %760 = vmatprep.subr.bf16.mxu0 0
  %761 = vmatpush1.bf16.msra.mxu0 0
  %762 = vmatprep.mubr.bf16.mxu0 0
  %763 = vmatmul.mubr.bf16.gmra.mrb[0].mxu0 %v729
  %v764 = vpop.f32.mrb[0].mxu0
  %v765 = vadd.f32 0.0, %v764
  %v766 = vpop.f32.mrb[0].mxu0
  %v767 = vpop.f32.mrb[0].mxu0
  %v768 = vadd.f32 0.0, %v767
  %v769 = vpop.f32.mrb[0].mxu0
  %770 = vdwg.mxu0
  %v771 = vadd.f32 %v727, %v765
  %v772 = vadd.f32 %v728, %v768
  %v773 = vtanh.pop %v771
  %v774 = vtanh.pop %v772
  %775 = vst [vmem:[#allocation3] sm:$0xff] %v773
  %776 = vst [vmem:[#allocation3 + $0x8] sm:$0xff] %v774
  %v777 = vpack.c.bf16 %v774, %v773
  %s778 = scalar_lea.vmem %s56, 24
  %779 = vst [vmem:[%s778] sm:$0xff] %v777
  %v780 = vld [vmem:[#allocation2] sm:$0xff]
  %v781 = vld [vmem:[#allocation2 + $0x8] sm:$0xff]
  %s782 = scalar_lea.vmem %s0, 40
  %v783 = vld [vmem:[%s782] sm:$0xf]
  %v784 = vld [vmem:[%s782 + $0x4] sm:$0xf]
  %v785 = vunpack.c.l.bf16 %v783
  %v786 = vunpack.c.l.bf16 %v784
  %v787 = vpack.c.bf16 %v781, %v780
  %788 = vmatprep.subr.bf16.mxu0 0
  %789 = vmatpush1.bf16.msra.mxu0 %v145
  %790 = vmatprep.subr.bf16.mxu0 0
  %791 = vmatpush1.bf16.msra.mxu0 %v146
  %792 = vmatprep.subr.bf16.mxu0 0
  %793 = vmatpush1.bf16.msra.mxu0 %v147
  %794 = vmatprep.subr.bf16.mxu0 0
  %795 = vmatpush1.bf16.msra.mxu0 %v148
  %796 = vmatprep.subr.bf16.mxu0 0
  %797 = vmatpush1.bf16.msra.mxu0 %v149
  %798 = vmatprep.subr.bf16.mxu0 0
  %799 = vmatpush1.bf16.msra.mxu0 %v150
  %800 = vmatprep.subr.bf16.mxu0 0
  %801 = vmatpush1.bf16.msra.mxu0 %v151
  %802 = vmatprep.subr.bf16.mxu0 0
  %803 = vmatpush1.bf16.msra.mxu0 %v152
  %804 = vmatprep.subr.bf16.mxu0 0
  %805 = vmatpush1.bf16.msra.mxu0 0
  %806 = vmatprep.subr.bf16.mxu0 0
  %807 = vmatpush1.bf16.msra.mxu0 0
  %808 = vmatprep.subr.bf16.mxu0 0
  %809 = vmatpush1.bf16.msra.mxu0 0
  %810 = vmatprep.subr.bf16.mxu0 0
  %811 = vmatpush1.bf16.msra.mxu0 0
  %812 = vmatprep.subr.bf16.mxu0 0
  %813 = vmatpush1.bf16.msra.mxu0 0
  %814 = vmatprep.subr.bf16.mxu0 0
  %815 = vmatpush1.bf16.msra.mxu0 0
  %816 = vmatprep.subr.bf16.mxu0 0
  %817 = vmatpush1.bf16.msra.mxu0 0
  %818 = vmatprep.subr.bf16.mxu0 0
  %819 = vmatpush1.bf16.msra.mxu0 0
  %820 = vmatprep.mubr.bf16.mxu0 0
  %821 = vmatmul.mubr.bf16.gmra.mrb[0].mxu0 %v787
  %v822 = vpop.f32.mrb[0].mxu0
  %v823 = vadd.f32 0.0, %v822
  %v824 = vpop.f32.mrb[0].mxu0
  %v825 = vpop.f32.mrb[0].mxu0
  %v826 = vadd.f32 0.0, %v825
  %v827 = vpop.f32.mrb[0].mxu0
  %828 = vdwg.mxu0
  %v829 = vadd.f32 %v785, %v823
  %v830 = vadd.f32 %v786, %v826
  %v831 = vtanh.pop %v829
  %v832 = vtanh.pop %v830
  %833 = vst [vmem:[#allocation2] sm:$0xff] %v831
  %834 = vst [vmem:[#allocation2 + $0x8] sm:$0xff] %v832
  %v835 = vpack.c.bf16 %v832, %v831
  %s836 = scalar_lea.vmem %s4, 40
  %837 = vst [vmem:[%s836] sm:$0xff] %v835
  %v838 = vld [vmem:[#allocation3] sm:$0xff]
  %v839 = vld [vmem:[#allocation3 + $0x8] sm:$0xff]
  %s840 = scalar_lea.vmem %s48, 16
  %v841 = vld [vmem:[%s840] sm:$0xf]
  %v842 = vld [vmem:[%s840 + $0x4] sm:$0xf]
  %v843 = vunpack.c.l.bf16 %v841
  %v844 = vunpack.c.l.bf16 %v842
  %v845 = vpack.c.bf16 %v839, %v838
  %846 = vmatprep.subr.bf16.mxu0 0
  %847 = vmatpush1.bf16.msra.mxu0 %v250
  %848 = vmatprep.subr.bf16.mxu0 0
  %849 = vmatpush1.bf16.msra.mxu0 %v251
  %850 = vmatprep.subr.bf16.mxu0 0
  %851 = vmatpush1.bf16.msra.mxu0 %v252
  %852 = vmatprep.subr.bf16.mxu0 0
  %853 = vmatpush1.bf16.msra.mxu0 %v253
  %854 = vmatprep.subr.bf16.mxu0 0
  %855 = vmatpush1.bf16.msra.mxu0 %v254
  %856 = vmatprep.subr.bf16.mxu0 0
  %857 = vmatpush1.bf16.msra.mxu0 %v255
  %858 = vmatprep.subr.bf16.mxu0 0
  %859 = vmatpush1.bf16.msra.mxu0 %v256
  %860 = vmatprep.subr.bf16.mxu0 0
  %861 = vmatpush1.bf16.msra.mxu0 %v257
  %862 = vmatprep.subr.bf16.mxu0 0
  %863 = vmatpush1.bf16.msra.mxu0 0
  %864 = vmatprep.subr.bf16.mxu0 0
  %865 = vmatpush1.bf16.msra.mxu0 0
  %866 = vmatprep.subr.bf16.mxu0 0
  %867 = vmatpush1.bf16.msra.mxu0 0
  %868 = vmatprep.subr.bf16.mxu0 0
  %869 = vmatpush1.bf16.msra.mxu0 0
  %870 = vmatprep.subr.bf16.mxu0 0
  %871 = vmatpush1.bf16.msra.mxu0 0
  %872 = vmatprep.subr.bf16.mxu0 0
  %873 = vmatpush1.bf16.msra.mxu0 0
  %874 = vmatprep.subr.bf16.mxu0 0
  %875 = vmatpush1.bf16.msra.mxu0 0
  %876 = vmatprep.subr.bf16.mxu0 0
  %877 = vmatpush1.bf16.msra.mxu0 0
  %878 = vmatprep.mubr.bf16.mxu0 0
  %879 = vmatmul.mubr.bf16.gmra.mrb[0].mxu0 %v845
  %v880 = vpop.f32.mrb[0].mxu0
  %v881 = vadd.f32 0.0, %v880
  %v882 = vpop.f32.mrb[0].mxu0
  %v883 = vpop.f32.mrb[0].mxu0
  %v884 = vadd.f32 0.0, %v883
  %v885 = vpop.f32.mrb[0].mxu0
  %886 = vdwg.mxu0
  %v887 = vadd.f32 %v843, %v881
  %v888 = vadd.f32 %v844, %v884
  %v889 = vtanh.pop %v887
  %v890 = vtanh.pop %v888
  %891 = vst [vmem:[#allocation3] sm:$0xff] %v889
  %892 = vst [vmem:[#allocation3 + $0x8] sm:$0xff] %v890
  %v893 = vpack.c.bf16 %v890, %v889
  %s894 = scalar_lea.vmem %s56, 16
  %895 = vst [vmem:[%s894] sm:$0xff] %v893
  %v896 = vld [vmem:[#allocation2] sm:$0xff]
  %v897 = vld [vmem:[#allocation2 + $0x8] sm:$0xff]
  %s898 = scalar_lea.vmem %s0, 48
  %v899 = vld [vmem:[%s898] sm:$0xf]
  %v900 = vld [vmem:[%s898 + $0x4] sm:$0xf]
  %v901 = vunpack.c.l.bf16 %v899
  %v902 = vunpack.c.l.bf16 %v900
  %v903 = vpack.c.bf16 %v897, %v896
  %904 = vmatprep.subr.bf16.mxu0 0
  %905 = vmatpush1.bf16.msra.mxu0 %v145
  %906 = vmatprep.subr.bf16.mxu0 0
  %907 = vmatpush1.bf16.msra.mxu0 %v146
  %908 = vmatprep.subr.bf16.mxu0 0
  %909 = vmatpush1.bf16.msra.mxu0 %v147
  %910 = vmatprep.subr.bf16.mxu0 0
  %911 = vmatpush1.bf16.msra.mxu0 %v148
  %912 = vmatprep.subr.bf16.mxu0 0
  %913 = vmatpush1.bf16.msra.mxu0 %v149
  %914 = vmatprep.subr.bf16.mxu0 0
  %915 = vmatpush1.bf16.msra.mxu0 %v150
  %916 = vmatprep.subr.bf16.mxu0 0
  %917 = vmatpush1.bf16.msra.mxu0 %v151
  %918 = vmatprep.subr.bf16.mxu0 0
  %919 = vmatpush1.bf16.msra.mxu0 %v152
  %920 = vmatprep.subr.bf16.mxu0 0
  %921 = vmatpush1.bf16.msra.mxu0 0
  %922 = vmatprep.subr.bf16.mxu0 0
  %923 = vmatpush1.bf16.msra.mxu0 0
  %924 = vmatprep.subr.bf16.mxu0 0
  %925 = vmatpush1.bf16.msra.mxu0 0
  %926 = vmatprep.subr.bf16.mxu0 0
  %927 = vmatpush1.bf16.msra.mxu0 0
  %928 = vmatprep.subr.bf16.mxu0 0
  %929 = vmatpush1.bf16.msra.mxu0 0
  %930 = vmatprep.subr.bf16.mxu0 0
  %931 = vmatpush1.bf16.msra.mxu0 0
  %932 = vmatprep.subr.bf16.mxu0 0
  %933 = vmatpush1.bf16.msra.mxu0 0
  %934 = vmatprep.subr.bf16.mxu0 0
  %935 = vmatpush1.bf16.msra.mxu0 0
  %936 = vmatprep.mubr.bf16.mxu0 0
  %937 = vmatmul.mubr.bf16.gmra.mrb[0].mxu0 %v903
  %v938 = vpop.f32.mrb[0].mxu0
  %v939 = vadd.f32 0.0, %v938
  %v940 = vpop.f32.mrb[0].mxu0
  %v941 = vpop.f32.mrb[0].mxu0
  %v942 = vadd.f32 0.0, %v941
  %v943 = vpop.f32.mrb[0].mxu0
  %944 = vdwg.mxu0
  %v945 = vadd.f32 %v901, %v939
  %v946 = vadd.f32 %v902, %v942
  %v947 = vtanh.pop %v945
  %v948 = vtanh.pop %v946
  %949 = vst [vmem:[#allocation2] sm:$0xff] %v947
  %950 = vst [vmem:[#allocation2 + $0x8] sm:$0xff] %v948
  %v951 = vpack.c.bf16 %v948, %v947
  %s952 = scalar_lea.vmem %s4, 48
  %953 = vst [vmem:[%s952] sm:$0xff] %v951
  %v954 = vld [vmem:[#allocation3] sm:$0xff]
  %v955 = vld [vmem:[#allocation3 + $0x8] sm:$0xff]
  %s956 = scalar_lea.vmem %s48, 8
  %v957 = vld [vmem:[%s956] sm:$0xf]
  %v958 = vld [vmem:[%s956 + $0x4] sm:$0xf]
  %v959 = vunpack.c.l.bf16 %v957
  %v960 = vunpack.c.l.bf16 %v958
  %v961 = vpack.c.bf16 %v955, %v954
  %962 = vmatprep.subr.bf16.mxu0 0
  %963 = vmatpush1.bf16.msra.mxu0 %v250
  %964 = vmatprep.subr.bf16.mxu0 0
  %965 = vmatpush1.bf16.msra.mxu0 %v251
  %966 = vmatprep.subr.bf16.mxu0 0
  %967 = vmatpush1.bf16.msra.mxu0 %v252
  %968 = vmatprep.subr.bf16.mxu0 0
  %969 = vmatpush1.bf16.msra.mxu0 %v253
  %970 = vmatprep.subr.bf16.mxu0 0
  %971 = vmatpush1.bf16.msra.mxu0 %v254
  %972 = vmatprep.subr.bf16.mxu0 0
  %973 = vmatpush1.bf16.msra.mxu0 %v255
  %974 = vmatprep.subr.bf16.mxu0 0
  %975 = vmatpush1.bf16.msra.mxu0 %v256
  %976 = vmatprep.subr.bf16.mxu0 0
  %977 = vmatpush1.bf16.msra.mxu0 %v257
  %978 = vmatprep.subr.bf16.mxu0 0
  %979 = vmatpush1.bf16.msra.mxu0 0
  %980 = vmatprep.subr.bf16.mxu0 0
  %981 = vmatpush1.bf16.msra.mxu0 0
  %982 = vmatprep.subr.bf16.mxu0 0
  %983 = vmatpush1.bf16.msra.mxu0 0
  %984 = vmatprep.subr.bf16.mxu0 0
  %985 = vmatpush1.bf16.msra.mxu0 0
  %986 = vmatprep.subr.bf16.mxu0 0
  %987 = vmatpush1.bf16.msra.mxu0 0
  %988 = vmatprep.subr.bf16.mxu0 0
  %989 = vmatpush1.bf16.msra.mxu0 0
  %990 = vmatprep.subr.bf16.mxu0 0
  %991 = vmatpush1.bf16.msra.mxu0 0
  %992 = vmatprep.subr.bf16.mxu0 0
  %993 = vmatpush1.bf16.msra.mxu0 0
  %994 = vmatprep.mubr.bf16.mxu0 0
  %995 = vmatmul.mubr.bf16.gmra.mrb[0].mxu0 %v961
  %v996 = vpop.f32.mrb[0].mxu0
  %v997 = vadd.f32 0.0, %v996
  %v998 = vpop.f32.mrb[0].mxu0
  %v999 = vpop.f32.mrb[0].mxu0
  %v1000 = vadd.f32 0.0, %v999
  %v1001 = vpop.f32.mrb[0].mxu0
  %1002 = vdwg.mxu0
  %v1003 = vadd.f32 %v959, %v997
  %v1004 = vadd.f32 %v960, %v1000
  %v1005 = vtanh.pop %v1003
  %v1006 = vtanh.pop %v1004
  %1007 = vst [vmem:[#allocation3] sm:$0xff] %v1005
  %1008 = vst [vmem:[#allocation3 + $0x8] sm:$0xff] %v1006
  %v1009 = vpack.c.bf16 %v1006, %v1005
  %s1010 = scalar_lea.vmem %s56, 8
  %1011 = vst [vmem:[%s1010] sm:$0xff] %v1009
  %v1012 = vld [vmem:[#allocation2] sm:$0xff]
  %v1013 = vld [vmem:[#allocation2 + $0x8] sm:$0xff]
  %s1014 = scalar_lea.vmem %s0, 56
  %v1015 = vld [vmem:[%s1014] sm:$0xf]
  %v1016 = vld [vmem:[%s1014 + $0x4] sm:$0xf]
  %v1017 = vunpack.c.l.bf16 %v1015
  %v1018 = vunpack.c.l.bf16 %v1016
  %v1019 = vpack.c.bf16 %v1013, %v1012
  %1020 = vmatprep.subr.bf16.mxu0 0
  %1021 = vmatpush1.bf16.msra.mxu0 %v145
  %1022 = vmatprep.subr.bf16.mxu0 0
  %1023 = vmatpush1.bf16.msra.mxu0 %v146
  %1024 = vmatprep.subr.bf16.mxu0 0
  %1025 = vmatpush1.bf16.msra.mxu0 %v147
  %1026 = vmatprep.subr.bf16.mxu0 0
  %1027 = vmatpush1.bf16.msra.mxu0 %v148
  %1028 = vmatprep.subr.bf16.mxu0 0
  %1029 = vmatpush1.bf16.msra.mxu0 %v149
  %1030 = vmatprep.subr.bf16.mxu0 0
  %1031 = vmatpush1.bf16.msra.mxu0 %v150
  %1032 = vmatprep.subr.bf16.mxu0 0
  %1033 = vmatpush1.bf16.msra.mxu0 %v151
  %1034 = vmatprep.subr.bf16.mxu0 0
  %1035 = vmatpush1.bf16.msra.mxu0 %v152
  %1036 = vmatprep.subr.bf16.mxu0 0
  %1037 = vmatpush1.bf16.msra.mxu0 0
  %1038 = vmatprep.subr.bf16.mxu0 0
  %1039 = vmatpush1.bf16.msra.mxu0 0
  %1040 = vmatprep.subr.bf16.mxu0 0
  %1041 = vmatpush1.bf16.msra.mxu0 0
  %1042 = vmatprep.subr.bf16.mxu0 0
  %1043 = vmatpush1.bf16.msra.mxu0 0
  %1044 = vmatprep.subr.bf16.mxu0 0
  %1045 = vmatpush1.bf16.msra.mxu0 0
  %1046 = vmatprep.subr.bf16.mxu0 0
  %1047 = vmatpush1.bf16.msra.mxu0 0
  %1048 = vmatprep.subr.bf16.mxu0 0
  %1049 = vmatpush1.bf16.msra.mxu0 0
  %1050 = vmatprep.subr.bf16.mxu0 0
  %1051 = vmatpush1.bf16.msra.mxu0 0
  %1052 = vmatprep.mubr.bf16.mxu0 0
  %1053 = vmatmul.mubr.bf16.gmra.mrb[0].mxu0 %v1019
  %v1054 = vpop.f32.mrb[0].mxu0
  %v1055 = vadd.f32 0.0, %v1054
  %v1056 = vpop.f32.mrb[0].mxu0
  %v1057 = vpop.f32.mrb[0].mxu0
  %v1058 = vadd.f32 0.0, %v1057
  %v1059 = vpop.f32.mrb[0].mxu0
  %1060 = vdwg.mxu0
  %v1061 = vadd.f32 %v1017, %v1055
  %v1062 = vadd.f32 %v1018, %v1058
  %v1063 = vtanh.pop %v1061
  %v1064 = vtanh.pop %v1062
  %1065 = vst [vmem:[#allocation2] sm:$0xff] %v1063
  %1066 = vst [vmem:[#allocation2 + $0x8] sm:$0xff] %v1064
  %v1067 = vpack.c.bf16 %v1064, %v1063
  %s1068 = scalar_lea.vmem %s4, 56
  %1069 = vst [vmem:[%s1068] sm:$0xff] %v1067
  %v1070 = vld [vmem:[#allocation3] sm:$0xff]
  %v1071 = vld [vmem:[#allocation3 + $0x8] sm:$0xff]
  %v1072 = vld [vmem:[%s48] sm:$0xf]
  %v1073 = vld [vmem:[%s48 + $0x4] sm:$0xf]
  %v1074 = vunpack.c.l.bf16 %v1072
  %v1075 = vunpack.c.l.bf16 %v1073
  %v1076 = vpack.c.bf16 %v1071, %v1070
  %1077 = vmatprep.subr.bf16.mxu0 0
  %1078 = vmatpush1.bf16.msra.mxu0 %v250
  %1079 = vmatprep.subr.bf16.mxu0 0
  %1080 = vmatpush1.bf16.msra.mxu0 %v251
  %1081 = vmatprep.subr.bf16.mxu0 0
  %1082 = vmatpush1.bf16.msra.mxu0 %v252
  %1083 = vmatprep.subr.bf16.mxu0 0
  %1084 = vmatpush1.bf16.msra.mxu0 %v253
  %1085 = vmatprep.subr.bf16.mxu0 0
  %1086 = vmatpush1.bf16.msra.mxu0 %v254
  %1087 = vmatprep.subr.bf16.mxu0 0
  %1088 = vmatpush1.bf16.msra.mxu0 %v255
  %1089 = vmatprep.subr.bf16.mxu0 0
  %1090 = vmatpush1.bf16.msra.mxu0 %v256
  %1091 = vmatprep.subr.bf16.mxu0 0
  %1092 = vmatpush1.bf16.msra.mxu0 %v257
  %1093 = vmatprep.subr.bf16.mxu0 0
  %1094 = vmatpush1.bf16.msra.mxu0 0
  %1095 = vmatprep.subr.bf16.mxu0 0
  %1096 = vmatpush1.bf16.msra.mxu0 0
  %1097 = vmatprep.subr.bf16.mxu0 0
  %1098 = vmatpush1.bf16.msra.mxu0 0
  %1099 = vmatprep.subr.bf16.mxu0 0
  %1100 = vmatpush1.bf16.msra.mxu0 0
  %1101 = vmatprep.subr.bf16.mxu0 0
  %1102 = vmatpush1.bf16.msra.mxu0 0
  %1103 = vmatprep.subr.bf16.mxu0 0
  %1104 = vmatpush1.bf16.msra.mxu0 0
  %1105 = vmatprep.subr.bf16.mxu0 0
  %1106 = vmatpush1.bf16.msra.mxu0 0
  %1107 = vmatprep.subr.bf16.mxu0 0
  %1108 = vmatpush1.bf16.msra.mxu0 0
  %1109 = vmatprep.mubr.bf16.mxu0 0
  %1110 = vmatmul.mubr.bf16.gmra.mrb[0].mxu0 %v1076
  %v1111 = vpop.f32.mrb[0].mxu0
  %v1112 = vadd.f32 0.0, %v1111
  %v1113 = vpop.f32.mrb[0].mxu0
  %v1114 = vpop.f32.mrb[0].mxu0
  %v1115 = vadd.f32 0.0, %v1114
  %v1116 = vpop.f32.mrb[0].mxu0
  %1117 = vdwg.mxu0
  %v1118 = vadd.f32 %v1074, %v1112
  %v1119 = vadd.f32 %v1075, %v1115
  %v1120 = vtanh.pop %v1118
  %v1121 = vtanh.pop %v1119
  %1122 = vst [vmem:[#allocation3] sm:$0xff] %v1120
  %1123 = vst [vmem:[#allocation3 + $0x8] sm:$0xff] %v1121
  %v1124 = vpack.c.bf16 %v1121, %v1120
  %1125 = vst [vmem:[%s56] sm:$0xff] %v1124
  // Predicated region
  $region22: #{birnn_forward.2} parent=0 // pred_check
    %p1126 = pneg %p60
  $region23: #{birnn_forward.2} parent=0 // pred_check_branch
    %1128 = sbr.rel (%p1126) target = $region25
  $region24: #{birnn_forward.2} parent=0 // pred_region
    %v1129 = vld [vmem:[#allocation2] sm:$0xff]
    %v1130 = vld [vmem:[#allocation2 + $0x8] sm:$0xff]
    %1131 = vst [vmem:[%s6] sm:$0xff] %v1129
    %1132 = vst [vmem:[%s6 + $0x8] sm:$0xff] %v1130
    %v1133 = vld [vmem:[#allocation3] sm:$0xff]
    %v1134 = vld [vmem:[#allocation3 + $0x8] sm:$0xff]
    %s1135 = scalar_lea.vmem %s6, 16
    %1136 = vst [vmem:[%s1135] sm:$0xff] %v1133
    %1137 = vst [vmem:[%s1135 + $0x8] sm:$0xff] %v1134
  $region25: #{birnn_forward.2} parent=0 // pred_fallthru
    _
  %s1138 = ssub.s32 0, 0
  %s1139 = smul.u32 8, %s1138
  %p1140 = scmp.lt.s32.totalorder %s1139, 7
  %s1141 = scalar_select %p1140, %s1139, 7
  %s1142 = smul.addr %s1141, 8
  %s1143 = scalar_lea.vmem %s5, %s1142
  // Predicated region
  $region26: #{birnn_forward.2} parent=0 // pred_check
    _
  $region27: #{birnn_forward.2} parent=0 // pred_check_branch
    %1145 = sbr.rel (0) target = $region29
  $region28: #{birnn_forward.2} parent=0 // pred_region
    _
  $region29: #{birnn_forward.2} parent=0 // pred_fallthru
    _
  // Predicated region
  $region30: #{birnn_forward.2} parent=0 // pred_check
    _
  $region31: #{birnn_forward.2} parent=0 // pred_check_branch
    %1147 = sbr.rel (0) target = $region33
  $region32: #{birnn_forward.2} parent=0 // pred_region
    %s1148 = ssub.s32 0, 0
    %s1149 = smul.u32 8, %s1148
  $region33: #{birnn_forward.2} parent=0 // pred_fallthru
    _
  // Predicated region
  $region34: #{birnn_forward.2} parent=0 // pred_check
    _
  $region35: #{birnn_forward.2} parent=0 // pred_check_branch
    %1151 = sbr.rel (0) target = $region37
  $region36: #{birnn_forward.2} parent=0 // pred_region
    _
  $region37: #{birnn_forward.2} parent=0 // pred_fallthru
    _
  // Predicated region
  $region38: #{birnn_forward.2} parent=0 // pred_check
    _
  $region39: #{birnn_forward.2} parent=0 // pred_check_branch
    %1153 = sbr.rel (0) target = $region41
  $region40: #{birnn_forward.2} parent=0 // pred_region
    _
  $region41: #{birnn_forward.2} parent=0 // pred_fallthru
    _
  // Predicated region
  $region42: #{birnn_forward.2} parent=0 // pred_check
    _
  $region43: #{birnn_forward.2} parent=0 // pred_check_branch
    %1155 = sbr.rel (0) target = $region45
  $region44: #{birnn_forward.2} parent=0 // pred_region
    %s1156 = ssub.s32 0, 0
    %s1157 = smul.u32 8, %s1156
    %p1158 = scmp.lt.s32.totalorder %s1157, 7
    %s1159 = scalar_select %p1158, %s1157, 7
    %s1160 = smul.addr %s1159, 8
    %s1161 = scalar_lea.vmem %s5, %s1160
  $region45: #{birnn_forward.2} parent=0 // pred_fallthru
    _
  // Predicated region
  $region46: #{birnn_forward.2} parent=0 // pred_check
    _
  $region47: #{birnn_forward.2} parent=0 // pred_check_branch
    %1163 = sbr.rel (0) target = $region49
  $region48: #{birnn_forward.2} parent=0 // pred_region
    _
  $region49: #{birnn_forward.2} parent=0 // pred_fallthru
    _

// kernel: birnn_forward.3
$region0: #{birnn_forward.3}
  #allocation0 [shape = 'u32[]', space=smem, size = 0x4, offset = 0x4, fixed_abs, tag = 'smem constant byte address 0x4 - core index']
  #allocation1 [shape = 'u32[144,128]{1,0:T(1,128)}', space=vmem, size = 0x12000, scoped, tag = 'internal scratch']
  #allocation2 [shape = 'f32[16,128]{1,0:T(8,128)}', space=vmem, size = 0x2000, scoped, tag = 'scratch operand']
  #allocation3 [shape = 'f32[16,128]{1,0:T(8,128)}', space=vmem, size = 0x2000, scoped, tag = 'scratch operand']
  %s0 = inlined_call_operand.vmem [shape: bf16[8,16,128], index: 0, kind: input, shape index: {}]
  %s1 = inlined_call_operand.vmem [shape: bf16[8,16,128], index: 1, kind: input, shape index: {}]
  %s2 = inlined_call_operand.vmem [shape: f32[2,16,128], index: 2, kind: input, shape index: {}]
  %s3 = inlined_call_operand.vmem [shape: bf16[2,128,128], index: 3, kind: input, shape index: {}]
  %s4 = inlined_call_operand.vmem [shape: bf16[8,16,128], index: 4, kind: output, shape index: {0}]
  %s5 = inlined_call_operand.vmem [shape: bf16[8,16,128], index: 5, kind: output, shape index: {1}]
  %s6 = inlined_call_operand.vmem [shape: f32[2,16,128], index: 6, kind: output, shape index: {2}]
  %7 = xla_tuple %s4, %s5, %s6
  %s8 = sld [smem:[#allocation0]]
  $region50: #{birnn_forward.3} parent=0
    _
  %s10 = ssub.s32 1, %s8
  %s11 = scalar_select 0, %s10, %s8
  // Predicated region
  $region2: #{birnn_forward.3} parent=0 // pred_check
    _
  $region3: #{birnn_forward.3} parent=0 // pred_check_branch
    %13 = sbr.rel (0) target = $region5
  $region4: #{birnn_forward.3} parent=0 // pred_region
    _
  $region5: #{birnn_forward.3} parent=0 // pred_fallthru
    _
  // Predicated region
  $region6: #{birnn_forward.3} parent=0 // pred_check
    _
  $region7: #{birnn_forward.3} parent=0 // pred_check_branch
    %15 = sbr.rel (0) target = $region9
  $region8: #{birnn_forward.3} parent=0 // pred_region
    %s16 = ssub.s32 0, 0
    %s17 = smul.u32 8, %s16
    %p18 = scmp.lt.s32.totalorder %s17, 7
    %s19 = scalar_select %p18, %s17, 7
    %s20 = smul.addr %s19, 2
    %s21 = smul.addr %s20, 4
    %s22 = scalar_lea.vmem %s1, %s21
    %s23 = ssub.s32 0, 0
    %s24 = smul.u32 8, %s23
  $region9: #{birnn_forward.3} parent=0 // pred_fallthru
    _
  // Predicated region
  $region10: #{birnn_forward.3} parent=0 // pred_check
    _
  $region11: #{birnn_forward.3} parent=0 // pred_check_branch
    %26 = sbr.rel (0) target = $region13
  $region12: #{birnn_forward.3} parent=0 // pred_region
    _
  $region13: #{birnn_forward.3} parent=0 // pred_fallthru
    _
  // Predicated region
  $region14: #{birnn_forward.3} parent=0 // pred_check
    _
  $region15: #{birnn_forward.3} parent=0 // pred_check_branch
    %28 = sbr.rel (0) target = $region17
  $region16: #{birnn_forward.3} parent=0 // pred_region
    _
  $region17: #{birnn_forward.3} parent=0 // pred_fallthru
    _
  %s29 = ssub.s32 0, 0
  %s30 = smul.u32 8, %s29
  %p31 = scmp.lt.s32.totalorder %s30, 7
  %s32 = scalar_select %p31, %s30, 7
  %s33 = smul.addr %s32, 2
  %s34 = smul.addr %s33, 4
  %s35 = scalar_lea.vmem %s1, %s34
  %s36 = ssub.s32 0, 0
  %s37 = smul.u32 8, %s36
  %p38 = scmp.lt.s32.totalorder %s37, 7
  %s39 = scalar_select %p38, %s37, 7
  %s40 = smul.addr %s39, 2
  %s41 = smul.addr %s40, 4
  %s42 = scalar_lea.vmem %s5, %s41
  %s43 = ssub.s32 0, 0
  %s44 = smul.u32 8, %s43
  %p45 = scmp.lt.s32.totalorder %s44, 7
  %s46 = scalar_select %p45, %s44, 7
  %s47 = smul.addr %s46, 2
  %s48 = smul.addr %s47, 4
  %s49 = scalar_lea.vmem %s1, %s48
  %s50 = ssub.s32 0, 0
  %s51 = smul.u32 8, %s50
  %s52 = ssub.s32 0, 0
  %s53 = smul.u32 8, %s52
  %p54 = scmp.lt.s32.totalorder %s53, 7
  %s55 = scalar_select %p54, %s53, 7
  %s56 = smul.addr %s55, 2
  %s57 = smul.addr %s56, 4
  %s58 = scalar_lea.vmem %s5, %s57
  %s59 = ssub.s32 0, 0
  %s60 = smul.u32 8, %s59
  %p62 = scmp.eq.s32.totalorder 0, 0
  // Predicated region
  $region18: #{birnn_forward.3} parent=0 // pred_check
    %p63 = pneg %p62
  $region19: #{birnn_forward.3} parent=0 // pred_check_branch
    %65 = sbr.rel (%p63) target = $region21
  $region20: #{birnn_forward.3} parent=0 // pred_region
    %v66 = vld [vmem:[%s2] sm:$0xff]
    %v67 = vld [vmem:[%s2 + $0x8] sm:$0xff]
    %68 = vst [vmem:[#allocation2] sm:$0xff] %v66
    %69 = vst [vmem:[#allocation2 + $0x8] sm:$0xff] %v67
    %s70 = scalar_lea.vmem %s2, 16
    %v71 = vld [vmem:[%s70] sm:$0xff]
    %v72 = vld [vmem:[%s70 + $0x8] sm:$0xff]
    %73 = vst [vmem:[#allocation3] sm:$0xff] %v71
    %74 = vst [vmem:[#allocation3 + $0x8] sm:$0xff] %v72
  $region21: #{birnn_forward.3} parent=0 // pred_fallthru
    _
  %v75 = vld [vmem:[%s3] sm:$0xf]
  %v76 = vld [vmem:[%s3 + $0x4] sm:$0xf]
  %v77 = vld [vmem:[%s3 + $0x8] sm:$0xf]
  %v78 = vld [vmem:[%s3 + $0xc] sm:$0xf]
  %v79 = vld [vmem:[%s3 + $0x10] sm:$0xf]
  %v80 = vld [vmem:[%s3 + $0x14] sm:$0xf]
  %v81 = vld [vmem:[%s3 + $0x18] sm:$0xf]
  %v82 = vld [vmem:[%s3 + $0x1c] sm:$0xf]
  %v83 = vld [vmem:[%s3 + $0x20] sm:$0xf]
  %v84 = vld [vmem:[%s3 + $0x24] sm:$0xf]
  %v85 = vld [vmem:[%s3 + $0x28] sm:$0xf]
  %v86 = vld [vmem:[%s3 + $0x2c] sm:$0xf]
  %v87 = vld [vmem:[%s3 + $0x30] sm:$0xf]
  %v88 = vld [vmem:[%s3 + $0x34] sm:$0xf]
  %v89 = vld [vmem:[%s3 + $0x38] sm:$0xf]
  %v90 = vld [vmem:[%s3 + $0x3c] sm:$0xf]
  %s91 = scalar_lea.vmem %s3, 64
  %v92 = vld [vmem:[%s91] sm:$0xf]
  %v93 = vld [vmem:[%s91 + $0x4] sm:$0xf]
  %v94 = vld [vmem:[%s91 + $0x8] sm:$0xf]
  %v95 = vld [vmem:[%s91 + $0xc] sm:$0xf]
  %v96 = vld [vmem:[%s91 + $0x10] sm:$0xf]
  %v97 = vld [vmem:[%s91 + $0x14] sm:$0xf]
  %v98 = vld [vmem:[%s91 + $0x18] sm:$0xf]
  %v99 = vld [vmem:[%s91 + $0x1c] sm:$0xf]
  %v100 = vld [vmem:[%s91 + $0x20] sm:$0xf]
  %v101 = vld [vmem:[%s91 + $0x24] sm:$0xf]
  %v102 = vld [vmem:[%s91 + $0x28] sm:$0xf]
  %v103 = vld [vmem:[%s91 + $0x2c] sm:$0xf]
  %v104 = vld [vmem:[%s91 + $0x30] sm:$0xf]
  %v105 = vld [vmem:[%s91 + $0x34] sm:$0xf]
  %v106 = vld [vmem:[%s91 + $0x38] sm:$0xf]
  %v107 = vld [vmem:[%s91 + $0x3c] sm:$0xf]
  %v108 = vld [vmem:[#allocation2] sm:$0xff]
  %v109 = vld [vmem:[#allocation2 + $0x8] sm:$0xff]
  %v110 = vld [vmem:[%s0] sm:$0xf]
  %v111 = vld [vmem:[%s0 + $0x4] sm:$0xf]
  %v112 = vunpack.c.l.bf16 %v110
  %v113 = vunpack.c.l.bf16 %v111
  %v114 = vpack.c.bf16 %v109, %v108
  %v131 = vunpack.c.l.b16 %v75
  %v132 = vunpack.c.l.b16 %v76
  %v133 = vunpack.c.l.b16 %v77
  %v134 = vunpack.c.l.b16 %v78
  %v135 = vunpack.c.l.b16 %v79
  %v136 = vunpack.c.l.b16 %v80
  %v137 = vunpack.c.l.b16 %v81
  %v138 = vunpack.c.l.b16 %v82
  %v139 = vunpack.c.l.b16 %v83
  %v140 = vunpack.c.l.b16 %v84
  %v141 = vunpack.c.l.b16 %v85
  %v142 = vunpack.c.l.b16 %v86
  %v143 = vunpack.c.l.b16 %v87
  %v144 = vunpack.c.l.b16 %v88
  %v145 = vunpack.c.l.b16 %v89
  %v146 = vunpack.c.l.b16 %v90
  %v147 = vpack.c.b16 %v132, %v131
  %v148 = vpack.c.b16 %v134, %v133
  %v149 = vpack.c.b16 %v136, %v135
  %v150 = vpack.c.b16 %v138, %v137
  %v151 = vpack.c.b16 %v140, %v139
  %v152 = vpack.c.b16 %v142, %v141
  %v153 = vpack.c.b16 %v144, %v143
  %v154 = vpack.c.b16 %v146, %v145
  %163 = vmatprep.subr.bf16.mxu0 0
  %164 = vmatpush1.bf16.msra.mxu0 %v147
  %165 = vmatprep.subr.bf16.mxu0 0
  %166 = vmatpush1.bf16.msra.mxu0 %v148
  %167 = vmatprep.subr.bf16.mxu0 0
  %168 = vmatpush1.bf16.msra.mxu0 %v149
  %169 = vmatprep.subr.bf16.mxu0 0
  %170 = vmatpush1.bf16.msra.mxu0 %v150
  %171 = vmatprep.subr.bf16.mxu0 0
  %172 = vmatpush1.bf16.msra.mxu0 %v151
  %173 = vmatprep.subr.bf16.mxu0 0
  %174 = vmatpush1.bf16.msra.mxu0 %v152
  %175 = vmatprep.subr.bf16.mxu0 0
  %176 = vmatpush1.bf16.msra.mxu0 %v153
  %177 = vmatprep.subr.bf16.mxu0 0
  %178 = vmatpush1.bf16.msra.mxu0 %v154
  %179 = vmatprep.subr.bf16.mxu0 0
  %180 = vmatpush1.bf16.msra.mxu0 0
  %181 = vmatprep.subr.bf16.mxu0 0
  %182 = vmatpush1.bf16.msra.mxu0 0
  %183 = vmatprep.subr.bf16.mxu0 0
  %184 = vmatpush1.bf16.msra.mxu0 0
  %185 = vmatprep.subr.bf16.mxu0 0
  %186 = vmatpush1.bf16.msra.mxu0 0
  %187 = vmatprep.subr.bf16.mxu0 0
  %188 = vmatpush1.bf16.msra.mxu0 0
  %189 = vmatprep.subr.bf16.mxu0 0
  %190 = vmatpush1.bf16.msra.mxu0 0
  %191 = vmatprep.subr.bf16.mxu0 0
  %192 = vmatpush1.bf16.msra.mxu0 0
  %193 = vmatprep.subr.bf16.mxu0 0
  %194 = vmatpush1.bf16.msra.mxu0 0
  %195 = vmatprep.mubr.bf16.mxu0 0
  %196 = vmatmul.mubr.bf16.gmra.mrb[0].mxu0 %v114
  %v197 = vpop.f32.mrb[0].mxu0
  %v198 = vadd.f32 0.0, %v197
  %v199 = vpop.f32.mrb[0].mxu0
  %v200 = vpop.f32.mrb[0].mxu0
  %v201 = vadd.f32 0.0, %v200
  %v202 = vpop.f32.mrb[0].mxu0
  %203 = vdwg.mxu0
  %v204 = vadd.f32 %v112, %v198
  %v205 = vadd.f32 %v113, %v201
  %v206 = vtanh.pop %v204
  %v207 = vtanh.pop %v205
  %208 = vst [vmem:[#allocation2] sm:$0xff] %v206
  %209 = vst [vmem:[#allocation2 + $0x8] sm:$0xff] %v207
  %v210 = vpack.c.bf16 %v207, %v206
  %v212 = vunpack.c.l.b16 %v210
  %v213 = vunpack.c.h.b16 %v210
  %v214 = vpack.c.b16 %v212, %v212
  %v215 = vpack.c.b16 %v213, %v213
  %218 = vst [vmem:[%s4] sm:$0xf] %v214
  %219 = vst [vmem:[%s4 + $0x4] sm:$0xf] %v215
  %v220 = vld [vmem:[#allocation3] sm:$0xff]
  %v221 = vld [vmem:[#allocation3 + $0x8] sm:$0xff]
  %s222 = scalar_lea.vmem %s49, 56
  %v223 = vld [vmem:[%s222] sm:$0xf]
  %v224 = vld [vmem:[%s222 + $0x4] sm:$0xf]
  %v225 = vunpack.c.l.bf16 %v223
  %v226 = vunpack.c.l.bf16 %v224
  %v227 = vpack.c.bf16 %v221, %v220
  %v244 = vunpack.c.l.b16 %v92
  %v245 = vunpack.c.l.b16 %v93
  %v246 = vunpack.c.l.b16 %v94
  %v247 = vunpack.c.l.b16 %v95
  %v248 = vunpack.c.l.b16 %v96
  %v249 = vunpack.c.l.b16 %v97
  %v250 = vunpack.c.l.b16 %v98
  %v251 = vunpack.c.l.b16 %v99
  %v252 = vunpack.c.l.b16 %v100
  %v253 = vunpack.c.l.b16 %v101
  %v254 = vunpack.c.l.b16 %v102
  %v255 = vunpack.c.l.b16 %v103
  %v256 = vunpack.c.l.b16 %v104
  %v257 = vunpack.c.l.b16 %v105
  %v258 = vunpack.c.l.b16 %v106
  %v259 = vunpack.c.l.b16 %v107
  %v260 = vpack.c.b16 %v245, %v244
  %v261 = vpack.c.b16 %v247, %v246
  %v262 = vpack.c.b16 %v249, %v248
  %v263 = vpack.c.b16 %v251, %v250
  %v264 = vpack.c.b16 %v253, %v252
  %v265 = vpack.c.b16 %v255, %v254
  %v266 = vpack.c.b16 %v257, %v256
  %v267 = vpack.c.b16 %v259, %v258
  %276 = vmatprep.subr.bf16.mxu0 0
  %277 = vmatpush1.bf16.msra.mxu0 %v260
  %278 = vmatprep.subr.bf16.mxu0 0
  %279 = vmatpush1.bf16.msra.mxu0 %v261
  %280 = vmatprep.subr.bf16.mxu0 0
  %281 = vmatpush1.bf16.msra.mxu0 %v262
  %282 = vmatprep.subr.bf16.mxu0 0
  %283 = vmatpush1.bf16.msra.mxu0 %v263
  %284 = vmatprep.subr.bf16.mxu0 0
  %285 = vmatpush1.bf16.msra.mxu0 %v264
  %286 = vmatprep.subr.bf16.mxu0 0
  %287 = vmatpush1.bf16.msra.mxu0 %v265
  %288 = vmatprep.subr.bf16.mxu0 0
  %289 = vmatpush1.bf16.msra.mxu0 %v266
  %290 = vmatprep.subr.bf16.mxu0 0
  %291 = vmatpush1.bf16.msra.mxu0 %v267
  %292 = vmatprep.subr.bf16.mxu0 0
  %293 = vmatpush1.bf16.msra.mxu0 0
  %294 = vmatprep.subr.bf16.mxu0 0
  %295 = vmatpush1.bf16.msra.mxu0 0
  %296 = vmatprep.subr.bf16.mxu0 0
  %297 = vmatpush1.bf16.msra.mxu0 0
  %298 = vmatprep.subr.bf16.mxu0 0
  %299 = vmatpush1.bf16.msra.mxu0 0
  %300 = vmatprep.subr.bf16.mxu0 0
  %301 = vmatpush1.bf16.msra.mxu0 0
  %302 = vmatprep.subr.bf16.mxu0 0
  %303 = vmatpush1.bf16.msra.mxu0 0
  %304 = vmatprep.subr.bf16.mxu0 0
  %305 = vmatpush1.bf16.msra.mxu0 0
  %306 = vmatprep.subr.bf16.mxu0 0
  %307 = vmatpush1.bf16.msra.mxu0 0
  %308 = vmatprep.mubr.bf16.mxu0 0
  %309 = vmatmul.mubr.bf16.gmra.mrb[0].mxu0 %v227
  %v310 = vpop.f32.mrb[0].mxu0
  %v311 = vadd.f32 0.0, %v310
  %v312 = vpop.f32.mrb[0].mxu0
  %v313 = vpop.f32.mrb[0].mxu0
  %v314 = vadd.f32 0.0, %v313
  %v315 = vpop.f32.mrb[0].mxu0
  %316 = vdwg.mxu0
  %v317 = vadd.f32 %v225, %v311
  %v318 = vadd.f32 %v226, %v314
  %v319 = vtanh.pop %v317
  %v320 = vtanh.pop %v318
  %321 = vst [vmem:[#allocation3] sm:$0xff] %v319
  %322 = vst [vmem:[#allocation3 + $0x8] sm:$0xff] %v320
  %v323 = vpack.c.bf16 %v320, %v319
  %v325 = vunpack.c.l.b16 %v323
  %v326 = vunpack.c.h.b16 %v323
  %v327 = vpack.c.b16 %v325, %v325
  %v328 = vpack.c.b16 %v326, %v326
  %s331 = scalar_lea.vmem %s58, 56
  %332 = vst [vmem:[%s331] sm:$0xf] %v327
  %333 = vst [vmem:[%s331 + $0x4] sm:$0xf] %v328
  %v334 = vld [vmem:[#allocation2] sm:$0xff]
  %v335 = vld [vmem:[#allocation2 + $0x8] sm:$0xff]
  %s336 = scalar_lea.vmem %s0, 8
  %v337 = vld [vmem:[%s336] sm:$0xf]
  %v338 = vld [vmem:[%s336 + $0x4] sm:$0xf]
  %v339 = vunpack.c.l.bf16 %v337
  %v340 = vunpack.c.l.bf16 %v338
  %v341 = vpack.c.bf16 %v335, %v334
  %342 = vmatprep.subr.bf16.mxu0 0
  %343 = vmatpush1.bf16.msra.mxu0 %v147
  %344 = vmatprep.subr.bf16.mxu0 0
  %345 = vmatpush1.bf16.msra.mxu0 %v148
  %346 = vmatprep.subr.bf16.mxu0 0
  %347 = vmatpush1.bf16.msra.mxu0 %v149
  %348 = vmatprep.subr.bf16.mxu0 0
  %349 = vmatpush1.bf16.msra.mxu0 %v150
  %350 = vmatprep.subr.bf16.mxu0 0
  %351 = vmatpush1.bf16.msra.mxu0 %v151
  %352 = vmatprep.subr.bf16.mxu0 0
  %353 = vmatpush1.bf16.msra.mxu0 %v152
  %354 = vmatprep.subr.bf16.mxu0 0
  %355 = vmatpush1.bf16.msra.mxu0 %v153
  %356 = vmatprep.subr.bf16.mxu0 0
  %357 = vmatpush1.bf16.msra.mxu0 %v154
  %358 = vmatprep.subr.bf16.mxu0 0
  %359 = vmatpush1.bf16.msra.mxu0 0
  %360 = vmatprep.subr.bf16.mxu0 0
  %361 = vmatpush1.bf16.msra.mxu0 0
  %362 = vmatprep.subr.bf16.mxu0 0
  %363 = vmatpush1.bf16.msra.mxu0 0
  %364 = vmatprep.subr.bf16.mxu0 0
  %365 = vmatpush1.bf16.msra.mxu0 0
  %366 = vmatprep.subr.bf16.mxu0 0
  %367 = vmatpush1.bf16.msra.mxu0 0
  %368 = vmatprep.subr.bf16.mxu0 0
  %369 = vmatpush1.bf16.msra.mxu0 0
  %370 = vmatprep.subr.bf16.mxu0 0
  %371 = vmatpush1.bf16.msra.mxu0 0
  %372 = vmatprep.subr.bf16.mxu0 0
  %373 = vmatpush1.bf16.msra.mxu0 0
  %374 = vmatprep.mubr.bf16.mxu0 0
  %375 = vmatmul.mubr.bf16.gmra.mrb[0].mxu0 %v341
  %v376 = vpop.f32.mrb[0].mxu0
  %v377 = vadd.f32 0.0, %v376
  %v378 = vpop.f32.mrb[0].mxu0
  %v379 = vpop.f32.mrb[0].mxu0
  %v380 = vadd.f32 0.0, %v379
  %v381 = vpop.f32.mrb[0].mxu0
  %382 = vdwg.mxu0
  %v383 = vadd.f32 %v339, %v377
  %v384 = vadd.f32 %v340, %v380
  %v385 = vtanh.pop %v383
  %v386 = vtanh.pop %v384
  %387 = vst [vmem:[#allocation2] sm:$0xff] %v385
  %388 = vst [vmem:[#allocation2 + $0x8] sm:$0xff] %v386
  %v389 = vpack.c.bf16 %v386, %v385
  %v391 = vunpack.c.l.b16 %v389
  %v392 = vunpack.c.h.b16 %v389
  %v393 = vpack.c.b16 %v391, %v391
  %v394 = vpack.c.b16 %v392, %v392
  %s397 = scalar_lea.vmem %s4, 8
  %398 = vst [vmem:[%s397] sm:$0xf] %v393
  %399 = vst [vmem:[%s397 + $0x4] sm:$0xf] %v394
  %v400 = vld [vmem:[#allocation3] sm:$0xff]
  %v401 = vld [vmem:[#allocation3 + $0x8] sm:$0xff]
  %s402 = scalar_lea.vmem %s49, 48
  %v403 = vld [vmem:[%s402] sm:$0xf]
  %v404 = vld [vmem:[%s402 + $0x4] sm:$0xf]
  %v405 = vunpack.c.l.bf16 %v403
  %v406 = vunpack.c.l.bf16 %v404
  %v407 = vpack.c.bf16 %v401, %v400
  %408 = vmatprep.subr.bf16.mxu0 0
  %409 = vmatpush1.bf16.msra.mxu0 %v260
  %410 = vmatprep.subr.bf16.mxu0 0
  %411 = vmatpush1.bf16.msra.mxu0 %v261
  %412 = vmatprep.subr.bf16.mxu0 0
  %413 = vmatpush1.bf16.msra.mxu0 %v262
  %414 = vmatprep.subr.bf16.mxu0 0
  %415 = vmatpush1.bf16.msra.mxu0 %v263
  %416 = vmatprep.subr.bf16.mxu0 0
  %417 = vmatpush1.bf16.msra.mxu0 %v264
  %418 = vmatprep.subr.bf16.mxu0 0
  %419 = vmatpush1.bf16.msra.mxu0 %v265
  %420 = vmatprep.subr.bf16.mxu0 0
  %421 = vmatpush1.bf16.msra.mxu0 %v266
  %422 = vmatprep.subr.bf16.mxu0 0
  %423 = vmatpush1.bf16.msra.mxu0 %v267
  %424 = vmatprep.subr.bf16.mxu0 0
  %425 = vmatpush1.bf16.msra.mxu0 0
  %426 = vmatprep.subr.bf16.mxu0 0
  %427 = vmatpush1.bf16.msra.mxu0 0
  %428 = vmatprep.subr.bf16.mxu0 0
  %429 = vmatpush1.bf16.msra.mxu0 0
  %430 = vmatprep.subr.bf16.mxu0 0
  %431 = vmatpush1.bf16.msra.mxu0 0
  %432 = vmatprep.subr.bf16.mxu0 0
  %433 = vmatpush1.bf16.msra.mxu0 0
  %434 = vmatprep.subr.bf16.mxu0 0
  %435 = vmatpush1.bf16.msra.mxu0 0
  %436 = vmatprep.subr.bf16.mxu0 0
  %437 = vmatpush1.bf16.msra.mxu0 0
  %438 = vmatprep.subr.bf16.mxu0 0
  %439 = vmatpush1.bf16.msra.mxu0 0
  %440 = vmatprep.mubr.bf16.mxu0 0
  %441 = vmatmul.mubr.bf16.gmra.mrb[0].mxu0 %v407
  %v442 = vpop.f32.mrb[0].mxu0
  %v443 = vadd.f32 0.0, %v442
  %v444 = vpop.f32.mrb[0].mxu0
  %v445 = vpop.f32.mrb[0].mxu0
  %v446 = vadd.f32 0.0, %v445
  %v447 = vpop.f32.mrb[0].mxu0
  %448 = vdwg.mxu0
  %v449 = vadd.f32 %v405, %v443
  %v450 = vadd.f32 %v406, %v446
  %v451 = vtanh.pop %v449
  %v452 = vtanh.pop %v450
  %453 = vst [vmem:[#allocation3] sm:$0xff] %v451
  %454 = vst [vmem:[#allocation3 + $0x8] sm:$0xff] %v452
  %v455 = vpack.c.bf16 %v452, %v451
  %v457 = vunpack.c.l.b16 %v455
  %v458 = vunpack.c.h.b16 %v455
  %v459 = vpack.c.b16 %v457, %v457
  %v460 = vpack.c.b16 %v458, %v458
  %s463 = scalar_lea.vmem %s58, 48
  %464 = vst [vmem:[%s463] sm:$0xf] %v459
  %465 = vst [vmem:[%s463 + $0x4] sm:$0xf] %v460
  %v466 = vld [vmem:[#allocation2] sm:$0xff]
  %v467 = vld [vmem:[#allocation2 + $0x8] sm:$0xff]
  %s468 = scalar_lea.vmem %s0, 16
  %v469 = vld [vmem:[%s468] sm:$0xf]
  %v470 = vld [vmem:[%s468 + $0x4] sm:$0xf]
  %v471 = vunpack.c.l.bf16 %v469
  %v472 = vunpack.c.l.bf16 %v470
  %v473 = vpack.c.bf16 %v467, %v466
  %474 = vmatprep.subr.bf16.mxu0 0
  %475 = vmatpush1.bf16.msra.mxu0 %v147
  %476 = vmatprep.subr.bf16.mxu0 0
  %477 = vmatpush1.bf16.msra.mxu0 %v148
  %478 = vmatprep.subr.bf16.mxu0 0
  %479 = vmatpush1.bf16.msra.mxu0 %v149
  %480 = vmatprep.subr.bf16.mxu0 0
  %481 = vmatpush1.bf16.msra.mxu0 %v150
  %482 = vmatprep.subr.bf16.mxu0 0
  %483 = vmatpush1.bf16.msra.mxu0 %v151
  %484 = vmatprep.subr.bf16.mxu0 0
  %485 = vmatpush1.bf16.msra.mxu0 %v152
  %486 = vmatprep.subr.bf16.mxu0 0
  %487 = vmatpush1.bf16.msra.mxu0 %v153
  %488 = vmatprep.subr.bf16.mxu0 0
  %489 = vmatpush1.bf16.msra.mxu0 %v154
  %490 = vmatprep.subr.bf16.mxu0 0
  %491 = vmatpush1.bf16.msra.mxu0 0
  %492 = vmatprep.subr.bf16.mxu0 0
  %493 = vmatpush1.bf16.msra.mxu0 0
  %494 = vmatprep.subr.bf16.mxu0 0
  %495 = vmatpush1.bf16.msra.mxu0 0
  %496 = vmatprep.subr.bf16.mxu0 0
  %497 = vmatpush1.bf16.msra.mxu0 0
  %498 = vmatprep.subr.bf16.mxu0 0
  %499 = vmatpush1.bf16.msra.mxu0 0
  %500 = vmatprep.subr.bf16.mxu0 0
  %501 = vmatpush1.bf16.msra.mxu0 0
  %502 = vmatprep.subr.bf16.mxu0 0
  %503 = vmatpush1.bf16.msra.mxu0 0
  %504 = vmatprep.subr.bf16.mxu0 0
  %505 = vmatpush1.bf16.msra.mxu0 0
  %506 = vmatprep.mubr.bf16.mxu0 0
  %507 = vmatmul.mubr.bf16.gmra.mrb[0].mxu0 %v473
  %v508 = vpop.f32.mrb[0].mxu0
  %v509 = vadd.f32 0.0, %v508
  %v510 = vpop.f32.mrb[0].mxu0
  %v511 = vpop.f32.mrb[0].mxu0
  %v512 = vadd.f32 0.0, %v511
  %v513 = vpop.f32.mrb[0].mxu0
  %514 = vdwg.mxu0
  %v515 = vadd.f32 %v471, %v509
  %v516 = vadd.f32 %v472, %v512
  %v517 = vtanh.pop %v515
  %v518 = vtanh.pop %v516
  %519 = vst [vmem:[#allocation2] sm:$0xff] %v517
  %520 = vst [vmem:[#allocation2 + $0x8] sm:$0xff] %v518
  %v521 = vpack.c.bf16 %v518, %v517
  %v523 = vunpack.c.l.b16 %v521
  %v524 = vunpack.c.h.b16 %v521
  %v525 = vpack.c.b16 %v523, %v523
  %v526 = vpack.c.b16 %v524, %v524
  %s529 = scalar_lea.vmem %s4, 16
  %530 = vst [vmem:[%s529] sm:$0xf] %v525
  %531 = vst [vmem:[%s529 + $0x4] sm:$0xf] %v526
  %v532 = vld [vmem:[#allocation3] sm:$0xff]
  %v533 = vld [vmem:[#allocation3 + $0x8] sm:$0xff]
  %s534 = scalar_lea.vmem %s49, 40
  %v535 = vld [vmem:[%s534] sm:$0xf]
  %v536 = vld [vmem:[%s534 + $0x4] sm:$0xf]
  %v537 = vunpack.c.l.bf16 %v535
  %v538 = vunpack.c.l.bf16 %v536
  %v539 = vpack.c.bf16 %v533, %v532
  %540 = vmatprep.subr.bf16.mxu0 0
  %541 = vmatpush1.bf16.msra.mxu0 %v260
  %542 = vmatprep.subr.bf16.mxu0 0
  %543 = vmatpush1.bf16.msra.mxu0 %v261
  %544 = vmatprep.subr.bf16.mxu0 0
  %545 = vmatpush1.bf16.msra.mxu0 %v262
  %546 = vmatprep.subr.bf16.mxu0 0
  %547 = vmatpush1.bf16.msra.mxu0 %v263
  %548 = vmatprep.subr.bf16.mxu0 0
  %549 = vmatpush1.bf16.msra.mxu0 %v264
  %550 = vmatprep.subr.bf16.mxu0 0
  %551 = vmatpush1.bf16.msra.mxu0 %v265
  %552 = vmatprep.subr.bf16.mxu0 0
  %553 = vmatpush1.bf16.msra.mxu0 %v266
  %554 = vmatprep.subr.bf16.mxu0 0
  %555 = vmatpush1.bf16.msra.mxu0 %v267
  %556 = vmatprep.subr.bf16.mxu0 0
  %557 = vmatpush1.bf16.msra.mxu0 0
  %558 = vmatprep.subr.bf16.mxu0 0
  %559 = vmatpush1.bf16.msra.mxu0 0
  %560 = vmatprep.subr.bf16.mxu0 0
  %561 = vmatpush1.bf16.msra.mxu0 0
  %562 = vmatprep.subr.bf16.mxu0 0
  %563 = vmatpush1.bf16.msra.mxu0 0
  %564 = vmatprep.subr.bf16.mxu0 0
  %565 = vmatpush1.bf16.msra.mxu0 0
  %566 = vmatprep.subr.bf16.mxu0 0
  %567 = vmatpush1.bf16.msra.mxu0 0
  %568 = vmatprep.subr.bf16.mxu0 0
  %569 = vmatpush1.bf16.msra.mxu0 0
  %570 = vmatprep.subr.bf16.mxu0 0
  %571 = vmatpush1.bf16.msra.mxu0 0
  %572 = vmatprep.mubr.bf16.mxu0 0
  %573 = vmatmul.mubr.bf16.gmra.mrb[0].mxu0 %v539
  %v574 = vpop.f32.mrb[0].mxu0
  %v575 = vadd.f32 0.0, %v574
  %v576 = vpop.f32.mrb[0].mxu0
  %v577 = vpop.f32.mrb[0].mxu0
  %v578 = vadd.f32 0.0, %v577
  %v579 = vpop.f32.mrb[0].mxu0
  %580 = vdwg.mxu0
  %v581 = vadd.f32 %v537, %v575
  %v582 = vadd.f32 %v538, %v578
  %v583 = vtanh.pop %v581
  %v584 = vtanh.pop %v582
  %585 = vst [vmem:[#allocation3] sm:$0xff] %v583
  %586 = vst [vmem:[#allocation3 + $0x8] sm:$0xff] %v584
  %v587 = vpack.c.bf16 %v584, %v583
  %v589 = vunpack.c.l.b16 %v587
  %v590 = vunpack.c.h.b16 %v587
  %v591 = vpack.c.b16 %v589, %v589
  %v592 = vpack.c.b16 %v590, %v590
  %s595 = scalar_lea.vmem %s58, 40
  %596 = vst [vmem:[%s595] sm:$0xf] %v591
  %597 = vst [vmem:[%s595 + $0x4] sm:$0xf] %v592
  %v598 = vld [vmem:[#allocation2] sm:$0xff]
  %v599 = vld [vmem:[#allocation2 + $0x8] sm:$0xff]
  %s600 = scalar_lea.vmem %s0, 24
  %v601 = vld [vmem:[%s600] sm:$0xf]
  %v602 = vld [vmem:[%s600 + $0x4] sm:$0xf]
  %v603 = vunpack.c.l.bf16 %v601
  %v604 = vunpack.c.l.bf16 %v602
  %v605 = vpack.c.bf16 %v599, %v598
  %606 = vmatprep.subr.bf16.mxu0 0
  %607 = vmatpush1.bf16.msra.mxu0 %v147
  %608 = vmatprep.subr.bf16.mxu0 0
  %609 = vmatpush1.bf16.msra.mxu0 %v148
  %610 = vmatprep.subr.bf16.mxu0 0
  %611 = vmatpush1.bf16.msra.mxu0 %v149
  %612 = vmatprep.subr.bf16.mxu0 0
  %613 = vmatpush1.bf16.msra.mxu0 %v150
  %614 = vmatprep.subr.bf16.mxu0 0
  %615 = vmatpush1.bf16.msra.mxu0 %v151
  %616 = vmatprep.subr.bf16.mxu0 0
  %617 = vmatpush1.bf16.msra.mxu0 %v152
  %618 = vmatprep.subr.bf16.mxu0 0
  %619 = vmatpush1.bf16.msra.mxu0 %v153
  %620 = vmatprep.subr.bf16.mxu0 0
  %621 = vmatpush1.bf16.msra.mxu0 %v154
  %622 = vmatprep.subr.bf16.mxu0 0
  %623 = vmatpush1.bf16.msra.mxu0 0
  %624 = vmatprep.subr.bf16.mxu0 0
  %625 = vmatpush1.bf16.msra.mxu0 0
  %626 = vmatprep.subr.bf16.mxu0 0
  %627 = vmatpush1.bf16.msra.mxu0 0
  %628 = vmatprep.subr.bf16.mxu0 0
  %629 = vmatpush1.bf16.msra.mxu0 0
  %630 = vmatprep.subr.bf16.mxu0 0
  %631 = vmatpush1.bf16.msra.mxu0 0
  %632 = vmatprep.subr.bf16.mxu0 0
  %633 = vmatpush1.bf16.msra.mxu0 0
  %634 = vmatprep.subr.bf16.mxu0 0
  %635 = vmatpush1.bf16.msra.mxu0 0
  %636 = vmatprep.subr.bf16.mxu0 0
  %637 = vmatpush1.bf16.msra.mxu0 0
  %638 = vmatprep.mubr.bf16.mxu0 0
  %639 = vmatmul.mubr.bf16.gmra.mrb[0].mxu0 %v605
  %v640 = vpop.f32.mrb[0].mxu0
  %v641 = vadd.f32 0.0, %v640
  %v642 = vpop.f32.mrb[0].mxu0
  %v643 = vpop.f32.mrb[0].mxu0
  %v644 = vadd.f32 0.0, %v643
  %v645 = vpop.f32.mrb[0].mxu0
  %646 = vdwg.mxu0
  %v647 = vadd.f32 %v603, %v641
  %v648 = vadd.f32 %v604, %v644
  %v649 = vtanh.pop %v647
  %v650 = vtanh.pop %v648
  %651 = vst [vmem:[#allocation2] sm:$0xff] %v649
  %652 = vst [vmem:[#allocation2 + $0x8] sm:$0xff] %v650
  %v653 = vpack.c.bf16 %v650, %v649
  %v655 = vunpack.c.l.b16 %v653
  %v656 = vunpack.c.h.b16 %v653
  %v657 = vpack.c.b16 %v655, %v655
  %v658 = vpack.c.b16 %v656, %v656
  %s661 = scalar_lea.vmem %s4, 24
  %662 = vst [vmem:[%s661] sm:$0xf] %v657
  %663 = vst [vmem:[%s661 + $0x4] sm:$0xf] %v658
  %v664 = vld [vmem:[#allocation3] sm:$0xff]
  %v665 = vld [vmem:[#allocation3 + $0x8] sm:$0xff]
  %s666 = scalar_lea.vmem %s49, 32
  %v667 = vld [vmem:[%s666] sm:$0xf]
  %v668 = vld [vmem:[%s666 + $0x4] sm:$0xf]
  %v669 = vunpack.c.l.bf16 %v667
  %v670 = vunpack.c.l.bf16 %v668
  %v671 = vpack.c.bf16 %v665, %v664
  %672 = vmatprep.subr.bf16.mxu0 0
  %673 = vmatpush1.bf16.msra.mxu0 %v260
  %674 = vmatprep.subr.bf16.mxu0 0
  %675 = vmatpush1.bf16.msra.mxu0 %v261
  %676 = vmatprep.subr.bf16.mxu0 0
  %677 = vmatpush1.bf16.msra.mxu0 %v262
  %678 = vmatprep.subr.bf16.mxu0 0
  %679 = vmatpush1.bf16.msra.mxu0 %v263
  %680 = vmatprep.subr.bf16.mxu0 0
  %681 = vmatpush1.bf16.msra.mxu0 %v264
  %682 = vmatprep.subr.bf16.mxu0 0
  %683 = vmatpush1.bf16.msra.mxu0 %v265
  %684 = vmatprep.subr.bf16.mxu0 0
  %685 = vmatpush1.bf16.msra.mxu0 %v266
  %686 = vmatprep.subr.bf16.mxu0 0
  %687 = vmatpush1.bf16.msra.mxu0 %v267
  %688 = vmatprep.subr.bf16.mxu0 0
  %689 = vmatpush1.bf16.msra.mxu0 0
  %690 = vmatprep.subr.bf16.mxu0 0
  %691 = vmatpush1.bf16.msra.mxu0 0
  %692 = vmatprep.subr.bf16.mxu0 0
  %693 = vmatpush1.bf16.msra.mxu0 0
  %694 = vmatprep.subr.bf16.mxu0 0
  %695 = vmatpush1.bf16.msra.mxu0 0
  %696 = vmatprep.subr.bf16.mxu0 0
  %697 = vmatpush1.bf16.msra.mxu0 0
  %698 = vmatprep.subr.bf16.mxu0 0
  %699 = vmatpush1.bf16.msra.mxu0 0
  %700 = vmatprep.subr.bf16.mxu0 0
  %701 = vmatpush1.bf16.msra.mxu0 0
  %702 = vmatprep.subr.bf16.mxu0 0
  %703 = vmatpush1.bf16.msra.mxu0 0
  %704 = vmatprep.mubr.bf16.mxu0 0
  %705 = vmatmul.mubr.bf16.gmra.mrb[0].mxu0 %v671
  %v706 = vpop.f32.mrb[0].mxu0
  %v707 = vadd.f32 0.0, %v706
  %v708 = vpop.f32.mrb[0].mxu0
  %v709 = vpop.f32.mrb[0].mxu0
  %v710 = vadd.f32 0.0, %v709
  %v711 = vpop.f32.mrb[0].mxu0
  %712 = vdwg.mxu0
  %v713 = vadd.f32 %v669, %v707
  %v714 = vadd.f32 %v670, %v710
  %v715 = vtanh.pop %v713
  %v716 = vtanh.pop %v714
  %717 = vst [vmem:[#allocation3] sm:$0xff] %v715
  %718 = vst [vmem:[#allocation3 + $0x8] sm:$0xff] %v716
  %v719 = vpack.c.bf16 %v716, %v715
  %v721 = vunpack.c.l.b16 %v719
  %v722 = vunpack.c.h.b16 %v719
  %v723 = vpack.c.b16 %v721, %v721
  %v724 = vpack.c.b16 %v722, %v722
  %s727 = scalar_lea.vmem %s58, 32
  %728 = vst [vmem:[%s727] sm:$0xf] %v723
  %729 = vst [vmem:[%s727 + $0x4] sm:$0xf] %v724
  %v730 = vld [vmem:[#allocation2] sm:$0xff]
  %v731 = vld [vmem:[#allocation2 + $0x8] sm:$0xff]
  %s732 = scalar_lea.vmem %s0, 32
  %v733 = vld [vmem:[%s732] sm:$0xf]
  %v734 = vld [vmem:[%s732 + $0x4] sm:$0xf]
  %v735 = vunpack.c.l.bf16 %v733
  %v736 = vunpack.c.l.bf16 %v734
  %v737 = vpack.c.bf16 %v731, %v730
  %738 = vmatprep.subr.bf16.mxu0 0
  %739 = vmatpush1.bf16.msra.mxu0 %v147
  %740 = vmatprep.subr.bf16.mxu0 0
  %741 = vmatpush1.bf16.msra.mxu0 %v148
  %742 = vmatprep.subr.bf16.mxu0 0
  %743 = vmatpush1.bf16.msra.mxu0 %v149
  %744 = vmatprep.subr.bf16.mxu0 0
  %745 = vmatpush1.bf16.msra.mxu0 %v150
  %746 = vmatprep.subr.bf16.mxu0 0
  %747 = vmatpush1.bf16.msra.mxu0 %v151
  %748 = vmatprep.subr.bf16.mxu0 0
  %749 = vmatpush1.bf16.msra.mxu0 %v152
  %750 = vmatprep.subr.bf16.mxu0 0
  %751 = vmatpush1.bf16.msra.mxu0 %v153
  %752 = vmatprep.subr.bf16.mxu0 0
  %753 = vmatpush1.bf16.msra.mxu0 %v154
  %754 = vmatprep.subr.bf16.mxu0 0
  %755 = vmatpush1.bf16.msra.mxu0 0
  %756 = vmatprep.subr.bf16.mxu0 0
  %757 = vmatpush1.bf16.msra.mxu0 0
  %758 = vmatprep.subr.bf16.mxu0 0
  %759 = vmatpush1.bf16.msra.mxu0 0
  %760 = vmatprep.subr.bf16.mxu0 0
  %761 = vmatpush1.bf16.msra.mxu0 0
  %762 = vmatprep.subr.bf16.mxu0 0
  %763 = vmatpush1.bf16.msra.mxu0 0
  %764 = vmatprep.subr.bf16.mxu0 0
  %765 = vmatpush1.bf16.msra.mxu0 0
  %766 = vmatprep.subr.bf16.mxu0 0
  %767 = vmatpush1.bf16.msra.mxu0 0
  %768 = vmatprep.subr.bf16.mxu0 0
  %769 = vmatpush1.bf16.msra.mxu0 0
  %770 = vmatprep.mubr.bf16.mxu0 0
  %771 = vmatmul.mubr.bf16.gmra.mrb[0].mxu0 %v737
  %v772 = vpop.f32.mrb[0].mxu0
  %v773 = vadd.f32 0.0, %v772
  %v774 = vpop.f32.mrb[0].mxu0
  %v775 = vpop.f32.mrb[0].mxu0
  %v776 = vadd.f32 0.0, %v775
  %v777 = vpop.f32.mrb[0].mxu0
  %778 = vdwg.mxu0
  %v779 = vadd.f32 %v735, %v773
  %v780 = vadd.f32 %v736, %v776
  %v781 = vtanh.pop %v779
  %v782 = vtanh.pop %v780
  %783 = vst [vmem:[#allocation2] sm:$0xff] %v781
  %784 = vst [vmem:[#allocation2 + $0x8] sm:$0xff] %v782
  %v785 = vpack.c.bf16 %v782, %v781
  %v787 = vunpack.c.l.b16 %v785
  %v788 = vunpack.c.h.b16 %v785
  %v789 = vpack.c.b16 %v787, %v787
  %v790 = vpack.c.b16 %v788, %v788
  %s793 = scalar_lea.vmem %s4, 32
  %794 = vst [vmem:[%s793] sm:$0xf] %v789
  %795 = vst [vmem:[%s793 + $0x4] sm:$0xf] %v790
  %v796 = vld [vmem:[#allocation3] sm:$0xff]
  %v797 = vld [vmem:[#allocation3 + $0x8] sm:$0xff]
  %s798 = scalar_lea.vmem %s49, 24
  %v799 = vld [vmem:[%s798] sm:$0xf]
  %v800 = vld [vmem:[%s798 + $0x4] sm:$0xf]
  %v801 = vunpack.c.l.bf16 %v799
  %v802 = vunpack.c.l.bf16 %v800
  %v803 = vpack.c.bf16 %v797, %v796
  %804 = vmatprep.subr.bf16.mxu0 0
  %805 = vmatpush1.bf16.msra.mxu0 %v260
  %806 = vmatprep.subr.bf16.mxu0 0
  %807 = vmatpush1.bf16.msra.mxu0 %v261
  %808 = vmatprep.subr.bf16.mxu0 0
  %809 = vmatpush1.bf16.msra.mxu0 %v262
  %810 = vmatprep.subr.bf16.mxu0 0
  %811 = vmatpush1.bf16.msra.mxu0 %v263
  %812 = vmatprep.subr.bf16.mxu0 0
  %813 = vmatpush1.bf16.msra.mxu0 %v264
  %814 = vmatprep.subr.bf16.mxu0 0
  %815 = vmatpush1.bf16.msra.mxu0 %v265
  %816 = vmatprep.subr.bf16.mxu0 0
  %817 = vmatpush1.bf16.msra.mxu0 %v266
  %818 = vmatprep.subr.bf16.mxu0 0
  %819 = vmatpush1.bf16.msra.mxu0 %v267
  %820 = vmatprep.subr.bf16.mxu0 0
  %821 = vmatpush1.bf16.msra.mxu0 0
  %822 = vmatprep.subr.bf16.mxu0 0
  %823 = vmatpush1.bf16.msra.mxu0 0
  %824 = vmatprep.subr.bf16.mxu0 0
  %825 = vmatpush1.bf16.msra.mxu0 0
  %826 = vmatprep.subr.bf16.mxu0 0
  %827 = vmatpush1.bf16.msra.mxu0 0
  %828 = vmatprep.subr.bf16.mxu0 0
  %829 = vmatpush1.bf16.msra.mxu0 0
  %830 = vmatprep.subr.bf16.mxu0 0
  %831 = vmatpush1.bf16.msra.mxu0 0
  %832 = vmatprep.subr.bf16.mxu0 0
  %833 = vmatpush1.bf16.msra.mxu0 0
  %834 = vmatprep.subr.bf16.mxu0 0
  %835 = vmatpush1.bf16.msra.mxu0 0
  %836 = vmatprep.mubr.bf16.mxu0 0
  %837 = vmatmul.mubr.bf16.gmra.mrb[0].mxu0 %v803
  %v838 = vpop.f32.mrb[0].mxu0
  %v839 = vadd.f32 0.0, %v838
  %v840 = vpop.f32.mrb[0].mxu0
  %v841 = vpop.f32.mrb[0].mxu0
  %v842 = vadd.f32 0.0, %v841
  %v843 = vpop.f32.mrb[0].mxu0
  %844 = vdwg.mxu0
  %v845 = vadd.f32 %v801, %v839
  %v846 = vadd.f32 %v802, %v842
  %v847 = vtanh.pop %v845
  %v848 = vtanh.pop %v846
  %849 = vst [vmem:[#allocation3] sm:$0xff] %v847
  %850 = vst [vmem:[#allocation3 + $0x8] sm:$0xff] %v848
  %v851 = vpack.c.bf16 %v848, %v847
  %v853 = vunpack.c.l.b16 %v851
  %v854 = vunpack.c.h.b16 %v851
  %v855 = vpack.c.b16 %v853, %v853
  %v856 = vpack.c.b16 %v854, %v854
  %s859 = scalar_lea.vmem %s58, 24
  %860 = vst [vmem:[%s859] sm:$0xf] %v855
  %861 = vst [vmem:[%s859 + $0x4] sm:$0xf] %v856
  %v862 = vld [vmem:[#allocation2] sm:$0xff]
  %v863 = vld [vmem:[#allocation2 + $0x8] sm:$0xff]
  %s864 = scalar_lea.vmem %s0, 40
  %v865 = vld [vmem:[%s864] sm:$0xf]
  %v866 = vld [vmem:[%s864 + $0x4] sm:$0xf]
  %v867 = vunpack.c.l.bf16 %v865
  %v868 = vunpack.c.l.bf16 %v866
  %v869 = vpack.c.bf16 %v863, %v862
  %870 = vmatprep.subr.bf16.mxu0 0
  %871 = vmatpush1.bf16.msra.mxu0 %v147
  %872 = vmatprep.subr.bf16.mxu0 0
  %873 = vmatpush1.bf16.msra.mxu0 %v148
  %874 = vmatprep.subr.bf16.mxu0 0
  %875 = vmatpush1.bf16.msra.mxu0 %v149
  %876 = vmatprep.subr.bf16.mxu0 0
  %877 = vmatpush1.bf16.msra.mxu0 %v150
  %878 = vmatprep.subr.bf16.mxu0 0
  %879 = vmatpush1.bf16.msra.mxu0 %v151
  %880 = vmatprep.subr.bf16.mxu0 0
  %881 = vmatpush1.bf16.msra.mxu0 %v152
  %882 = vmatprep.subr.bf16.mxu0 0
  %883 = vmatpush1.bf16.msra.mxu0 %v153
  %884 = vmatprep.subr.bf16.mxu0 0
  %885 = vmatpush1.bf16.msra.mxu0 %v154
  %886 = vmatprep.subr.bf16.mxu0 0
  %887 = vmatpush1.bf16.msra.mxu0 0
  %888 = vmatprep.subr.bf16.mxu0 0
  %889 = vmatpush1.bf16.msra.mxu0 0
  %890 = vmatprep.subr.bf16.mxu0 0
  %891 = vmatpush1.bf16.msra.mxu0 0
  %892 = vmatprep.subr.bf16.mxu0 0
  %893 = vmatpush1.bf16.msra.mxu0 0
  %894 = vmatprep.subr.bf16.mxu0 0
  %895 = vmatpush1.bf16.msra.mxu0 0
  %896 = vmatprep.subr.bf16.mxu0 0
  %897 = vmatpush1.bf16.msra.mxu0 0
  %898 = vmatprep.subr.bf16.mxu0 0
  %899 = vmatpush1.bf16.msra.mxu0 0
  %900 = vmatprep.subr.bf16.mxu0 0
  %901 = vmatpush1.bf16.msra.mxu0 0
  %902 = vmatprep.mubr.bf16.mxu0 0
  %903 = vmatmul.mubr.bf16.gmra.mrb[0].mxu0 %v869
  %v904 = vpop.f32.mrb[0].mxu0
  %v905 = vadd.f32 0.0, %v904
  %v906 = vpop.f32.mrb[0].mxu0
  %v907 = vpop.f32.mrb[0].mxu0
  %v908 = vadd.f32 0.0, %v907
  %v909 = vpop.f32.mrb[0].mxu0
  %910 = vdwg.mxu0
  %v911 = vadd.f32 %v867, %v905
  %v912 = vadd.f32 %v868, %v908
  %v913 = vtanh.pop %v911
  %v914 = vtanh.pop %v912
  %915 = vst [vmem:[#allocation2] sm:$0xff] %v913
  %916 = vst [vmem:[#allocation2 + $0x8] sm:$0xff] %v914
  %v917 = vpack.c.bf16 %v914, %v913
  %v919 = vunpack.c.l.b16 %v917
  %v920 = vunpack.c.h.b16 %v917
  %v921 = vpack.c.b16 %v919, %v919
  %v922 = vpack.c.b16 %v920, %v920
  %s925 = scalar_lea.vmem %s4, 40
  %926 = vst [vmem:[%s925] sm:$0xf] %v921
  %927 = vst [vmem:[%s925 + $0x4] sm:$0xf] %v922
  %v928 = vld [vmem:[#allocation3] sm:$0xff]
  %v929 = vld [vmem:[#allocation3 + $0x8] sm:$0xff]
  %s930 = scalar_lea.vmem %s49, 16
  %v931 = vld [vmem:[%s930] sm:$0xf]
  %v932 = vld [vmem:[%s930 + $0x4] sm:$0xf]
  %v933 = vunpack.c.l.bf16 %v931
  %v934 = vunpack.c.l.bf16 %v932
  %v935 = vpack.c.bf16 %v929, %v928
  %936 = vmatprep.subr.bf16.mxu0 0
  %937 = vmatpush1.bf16.msra.mxu0 %v260
  %938 = vmatprep.subr.bf16.mxu0 0
  %939 = vmatpush1.bf16.msra.mxu0 %v261
  %940 = vmatprep.subr.bf16.mxu0 0
  %941 = vmatpush1.bf16.msra.mxu0 %v262
  %942 = vmatprep.subr.bf16.mxu0 0
  %943 = vmatpush1.bf16.msra.mxu0 %v263
  %944 = vmatprep.subr.bf16.mxu0 0
  %945 = vmatpush1.bf16.msra.mxu0 %v264
  %946 = vmatprep.subr.bf16.mxu0 0
  %947 = vmatpush1.bf16.msra.mxu0 %v265
  %948 = vmatprep.subr.bf16.mxu0 0
  %949 = vmatpush1.bf16.msra.mxu0 %v266
  %950 = vmatprep.subr.bf16.mxu0 0
  %951 = vmatpush1.bf16.msra.mxu0 %v267
  %952 = vmatprep.subr.bf16.mxu0 0
  %953 = vmatpush1.bf16.msra.mxu0 0
  %954 = vmatprep.subr.bf16.mxu0 0
  %955 = vmatpush1.bf16.msra.mxu0 0
  %956 = vmatprep.subr.bf16.mxu0 0
  %957 = vmatpush1.bf16.msra.mxu0 0
  %958 = vmatprep.subr.bf16.mxu0 0
  %959 = vmatpush1.bf16.msra.mxu0 0
  %960 = vmatprep.subr.bf16.mxu0 0
  %961 = vmatpush1.bf16.msra.mxu0 0
  %962 = vmatprep.subr.bf16.mxu0 0
  %963 = vmatpush1.bf16.msra.mxu0 0
  %964 = vmatprep.subr.bf16.mxu0 0
  %965 = vmatpush1.bf16.msra.mxu0 0
  %966 = vmatprep.subr.bf16.mxu0 0
  %967 = vmatpush1.bf16.msra.mxu0 0
  %968 = vmatprep.mubr.bf16.mxu0 0
  %969 = vmatmul.mubr.bf16.gmra.mrb[0].mxu0 %v935
  %v970 = vpop.f32.mrb[0].mxu0
  %v971 = vadd.f32 0.0, %v970
  %v972 = vpop.f32.mrb[0].mxu0
  %v973 = vpop.f32.mrb[0].mxu0
  %v974 = vadd.f32 0.0, %v973
  %v975 = vpop.f32.mrb[0].mxu0
  %976 = vdwg.mxu0
  %v977 = vadd.f32 %v933, %v971
  %v978 = vadd.f32 %v934, %v974
  %v979 = vtanh.pop %v977
  %v980 = vtanh.pop %v978
  %981 = vst [vmem:[#allocation3] sm:$0xff] %v979
  %982 = vst [vmem:[#allocation3 + $0x8] sm:$0xff] %v980
  %v983 = vpack.c.bf16 %v980, %v979
  %v985 = vunpack.c.l.b16 %v983
  %v986 = vunpack.c.h.b16 %v983
  %v987 = vpack.c.b16 %v985, %v985
  %v988 = vpack.c.b16 %v986, %v986
  %s991 = scalar_lea.vmem %s58, 16
  %992 = vst [vmem:[%s991] sm:$0xf] %v987
  %993 = vst [vmem:[%s991 + $0x4] sm:$0xf] %v988
  %v994 = vld [vmem:[#allocation2] sm:$0xff]
  %v995 = vld [vmem:[#allocation2 + $0x8] sm:$0xff]
  %s996 = scalar_lea.vmem %s0, 48
  %v997 = vld [vmem:[%s996] sm:$0xf]
  %v998 = vld [vmem:[%s996 + $0x4] sm:$0xf]
  %v999 = vunpack.c.l.bf16 %v997
  %v1000 = vunpack.c.l.bf16 %v998
  %v1001 = vpack.c.bf16 %v995, %v994
  %1002 = vmatprep.subr.bf16.mxu0 0
  %1003 = vmatpush1.bf16.msra.mxu0 %v147
  %1004 = vmatprep.subr.bf16.mxu0 0
  %1005 = vmatpush1.bf16.msra.mxu0 %v148
  %1006 = vmatprep.subr.bf16.mxu0 0
  %1007 = vmatpush1.bf16.msra.mxu0 %v149
  %1008 = vmatprep.subr.bf16.mxu0 0
  %1009 = vmatpush1.bf16.msra.mxu0 %v150
  %1010 = vmatprep.subr.bf16.mxu0 0
  %1011 = vmatpush1.bf16.msra.mxu0 %v151
  %1012 = vmatprep.subr.bf16.mxu0 0
  %1013 = vmatpush1.bf16.msra.mxu0 %v152
  %1014 = vmatprep.subr.bf16.mxu0 0
  %1015 = vmatpush1.bf16.msra.mxu0 %v153
  %1016 = vmatprep.subr.bf16.mxu0 0
  %1017 = vmatpush1.bf16.msra.mxu0 %v154
  %1018 = vmatprep.subr.bf16.mxu0 0
  %1019 = vmatpush1.bf16.msra.mxu0 0
  %1020 = vmatprep.subr.bf16.mxu0 0
  %1021 = vmatpush1.bf16.msra.mxu0 0
  %1022 = vmatprep.subr.bf16.mxu0 0
  %1023 = vmatpush1.bf16.msra.mxu0 0
  %1024 = vmatprep.subr.bf16.mxu0 0
  %1025 = vmatpush1.bf16.msra.mxu0 0
  %1026 = vmatprep.subr.bf16.mxu0 0
  %1027 = vmatpush1.bf16.msra.mxu0 0
  %1028 = vmatprep.subr.bf16.mxu0 0
  %1029 = vmatpush1.bf16.msra.mxu0 0
  %1030 = vmatprep.subr.bf16.mxu0 0
  %1031 = vmatpush1.bf16.msra.mxu0 0
  %1032 = vmatprep.subr.bf16.mxu0 0
  %1033 = vmatpush1.bf16.msra.mxu0 0
  %1034 = vmatprep.mubr.bf16.mxu0 0
  %1035 = vmatmul.mubr.bf16.gmra.mrb[0].mxu0 %v1001
  %v1036 = vpop.f32.mrb[0].mxu0
  %v1037 = vadd.f32 0.0, %v1036
  %v1038 = vpop.f32.mrb[0].mxu0
  %v1039 = vpop.f32.mrb[0].mxu0
  %v1040 = vadd.f32 0.0, %v1039
  %v1041 = vpop.f32.mrb[0].mxu0
  %1042 = vdwg.mxu0
  %v1043 = vadd.f32 %v999, %v1037
  %v1044 = vadd.f32 %v1000, %v1040
  %v1045 = vtanh.pop %v1043
  %v1046 = vtanh.pop %v1044
  %1047 = vst [vmem:[#allocation2] sm:$0xff] %v1045
  %1048 = vst [vmem:[#allocation2 + $0x8] sm:$0xff] %v1046
  %v1049 = vpack.c.bf16 %v1046, %v1045
  %v1051 = vunpack.c.l.b16 %v1049
  %v1052 = vunpack.c.h.b16 %v1049
  %v1053 = vpack.c.b16 %v1051, %v1051
  %v1054 = vpack.c.b16 %v1052, %v1052
  %s1057 = scalar_lea.vmem %s4, 48
  %1058 = vst [vmem:[%s1057] sm:$0xf] %v1053
  %1059 = vst [vmem:[%s1057 + $0x4] sm:$0xf] %v1054
  %v1060 = vld [vmem:[#allocation3] sm:$0xff]
  %v1061 = vld [vmem:[#allocation3 + $0x8] sm:$0xff]
  %s1062 = scalar_lea.vmem %s49, 8
  %v1063 = vld [vmem:[%s1062] sm:$0xf]
  %v1064 = vld [vmem:[%s1062 + $0x4] sm:$0xf]
  %v1065 = vunpack.c.l.bf16 %v1063
  %v1066 = vunpack.c.l.bf16 %v1064
  %v1067 = vpack.c.bf16 %v1061, %v1060
  %1068 = vmatprep.subr.bf16.mxu0 0
  %1069 = vmatpush1.bf16.msra.mxu0 %v260
  %1070 = vmatprep.subr.bf16.mxu0 0
  %1071 = vmatpush1.bf16.msra.mxu0 %v261
  %1072 = vmatprep.subr.bf16.mxu0 0
  %1073 = vmatpush1.bf16.msra.mxu0 %v262
  %1074 = vmatprep.subr.bf16.mxu0 0
  %1075 = vmatpush1.bf16.msra.mxu0 %v263
  %1076 = vmatprep.subr.bf16.mxu0 0
  %1077 = vmatpush1.bf16.msra.mxu0 %v264
  %1078 = vmatprep.subr.bf16.mxu0 0
  %1079 = vmatpush1.bf16.msra.mxu0 %v265
  %1080 = vmatprep.subr.bf16.mxu0 0
  %1081 = vmatpush1.bf16.msra.mxu0 %v266
  %1082 = vmatprep.subr.bf16.mxu0 0
  %1083 = vmatpush1.bf16.msra.mxu0 %v267
  %1084 = vmatprep.subr.bf16.mxu0 0
  %1085 = vmatpush1.bf16.msra.mxu0 0
  %1086 = vmatprep.subr.bf16.mxu0 0
  %1087 = vmatpush1.bf16.msra.mxu0 0
  %1088 = vmatprep.subr.bf16.mxu0 0
  %1089 = vmatpush1.bf16.msra.mxu0 0
  %1090 = vmatprep.subr.bf16.mxu0 0
  %1091 = vmatpush1.bf16.msra.mxu0 0
  %1092 = vmatprep.subr.bf16.mxu0 0
  %1093 = vmatpush1.bf16.msra.mxu0 0
  %1094 = vmatprep.subr.bf16.mxu0 0
  %1095 = vmatpush1.bf16.msra.mxu0 0
  %1096 = vmatprep.subr.bf16.mxu0 0
  %1097 = vmatpush1.bf16.msra.mxu0 0
  %1098 = vmatprep.subr.bf16.mxu0 0
  %1099 = vmatpush1.bf16.msra.mxu0 0
  %1100 = vmatprep.mubr.bf16.mxu0 0
  %1101 = vmatmul.mubr.bf16.gmra.mrb[0].mxu0 %v1067
  %v1102 = vpop.f32.mrb[0].mxu0
  %v1103 = vadd.f32 0.0, %v1102
  %v1104 = vpop.f32.mrb[0].mxu0
  %v1105 = vpop.f32.mrb[0].mxu0
  %v1106 = vadd.f32 0.0, %v1105
  %v1107 = vpop.f32.mrb[0].mxu0
  %1108 = vdwg.mxu0
  %v1109 = vadd.f32 %v1065, %v1103
  %v1110 = vadd.f32 %v1066, %v1106
  %v1111 = vtanh.pop %v1109
  %v1112 = vtanh.pop %v1110
  %1113 = vst [vmem:[#allocation3] sm:$0xff] %v1111
  %1114 = vst [vmem:[#allocation3 + $0x8] sm:$0xff] %v1112
  %v1115 = vpack.c.bf16 %v1112, %v1111
  %v1117 = vunpack.c.l.b16 %v1115
  %v1118 = vunpack.c.h.b16 %v1115
  %v1119 = vpack.c.b16 %v1117, %v1117
  %v1120 = vpack.c.b16 %v1118, %v1118
  %s1123 = scalar_lea.vmem %s58, 8
  %1124 = vst [vmem:[%s1123] sm:$0xf] %v1119
  %1125 = vst [vmem:[%s1123 + $0x4] sm:$0xf] %v1120
  %v1126 = vld [vmem:[#allocation2] sm:$0xff]
  %v1127 = vld [vmem:[#allocation2 + $0x8] sm:$0xff]
  %s1128 = scalar_lea.vmem %s0, 56
  %v1129 = vld [vmem:[%s1128] sm:$0xf]
  %v1130 = vld [vmem:[%s1128 + $0x4] sm:$0xf]
  %v1131 = vunpack.c.l.bf16 %v1129
  %v1132 = vunpack.c.l.bf16 %v1130
  %v1133 = vpack.c.bf16 %v1127, %v1126
  %1134 = vmatprep.subr.bf16.mxu0 0
  %1135 = vmatpush1.bf16.msra.mxu0 %v147
  %1136 = vmatprep.subr.bf16.mxu0 0
  %1137 = vmatpush1.bf16.msra.mxu0 %v148
  %1138 = vmatprep.subr.bf16.mxu0 0
  %1139 = vmatpush1.bf16.msra.mxu0 %v149
  %1140 = vmatprep.subr.bf16.mxu0 0
  %1141 = vmatpush1.bf16.msra.mxu0 %v150
  %1142 = vmatprep.subr.bf16.mxu0 0
  %1143 = vmatpush1.bf16.msra.mxu0 %v151
  %1144 = vmatprep.subr.bf16.mxu0 0
  %1145 = vmatpush1.bf16.msra.mxu0 %v152
  %1146 = vmatprep.subr.bf16.mxu0 0
  %1147 = vmatpush1.bf16.msra.mxu0 %v153
  %1148 = vmatprep.subr.bf16.mxu0 0
  %1149 = vmatpush1.bf16.msra.mxu0 %v154
  %1150 = vmatprep.subr.bf16.mxu0 0
  %1151 = vmatpush1.bf16.msra.mxu0 0
  %1152 = vmatprep.subr.bf16.mxu0 0
  %1153 = vmatpush1.bf16.msra.mxu0 0
  %1154 = vmatprep.subr.bf16.mxu0 0
  %1155 = vmatpush1.bf16.msra.mxu0 0
  %1156 = vmatprep.subr.bf16.mxu0 0
  %1157 = vmatpush1.bf16.msra.mxu0 0
  %1158 = vmatprep.subr.bf16.mxu0 0
  %1159 = vmatpush1.bf16.msra.mxu0 0
  %1160 = vmatprep.subr.bf16.mxu0 0
  %1161 = vmatpush1.bf16.msra.mxu0 0
  %1162 = vmatprep.subr.bf16.mxu0 0
  %1163 = vmatpush1.bf16.msra.mxu0 0
  %1164 = vmatprep.subr.bf16.mxu0 0
  %1165 = vmatpush1.bf16.msra.mxu0 0
  %1166 = vmatprep.mubr.bf16.mxu0 0
  %1167 = vmatmul.mubr.bf16.gmra.mrb[0].mxu0 %v1133
  %v1168 = vpop.f32.mrb[0].mxu0
  %v1169 = vadd.f32 0.0, %v1168
  %v1170 = vpop.f32.mrb[0].mxu0
  %v1171 = vpop.f32.mrb[0].mxu0
  %v1172 = vadd.f32 0.0, %v1171
  %v1173 = vpop.f32.mrb[0].mxu0
  %1174 = vdwg.mxu0
  %v1175 = vadd.f32 %v1131, %v1169
  %v1176 = vadd.f32 %v1132, %v1172
  %v1177 = vtanh.pop %v1175
  %v1178 = vtanh.pop %v1176
  %1179 = vst [vmem:[#allocation2] sm:$0xff] %v1177
  %1180 = vst [vmem:[#allocation2 + $0x8] sm:$0xff] %v1178
  %v1181 = vpack.c.bf16 %v1178, %v1177
  %v1183 = vunpack.c.l.b16 %v1181
  %v1184 = vunpack.c.h.b16 %v1181
  %v1185 = vpack.c.b16 %v1183, %v1183
  %v1186 = vpack.c.b16 %v1184, %v1184
  %s1189 = scalar_lea.vmem %s4, 56
  %1190 = vst [vmem:[%s1189] sm:$0xf] %v1185
  %1191 = vst [vmem:[%s1189 + $0x4] sm:$0xf] %v1186
  %v1192 = vld [vmem:[#allocation3] sm:$0xff]
  %v1193 = vld [vmem:[#allocation3 + $0x8] sm:$0xff]
  %v1194 = vld [vmem:[%s49] sm:$0xf]
  %v1195 = vld [vmem:[%s49 + $0x4] sm:$0xf]
  %v1196 = vunpack.c.l.bf16 %v1194
  %v1197 = vunpack.c.l.bf16 %v1195
  %v1198 = vpack.c.bf16 %v1193, %v1192
  %1199 = vmatprep.subr.bf16.mxu0 0
  %1200 = vmatpush1.bf16.msra.mxu0 %v260
  %1201 = vmatprep.subr.bf16.mxu0 0
  %1202 = vmatpush1.bf16.msra.mxu0 %v261
  %1203 = vmatprep.subr.bf16.mxu0 0
  %1204 = vmatpush1.bf16.msra.mxu0 %v262
  %1205 = vmatprep.subr.bf16.mxu0 0
  %1206 = vmatpush1.bf16.msra.mxu0 %v263
  %1207 = vmatprep.subr.bf16.mxu0 0
  %1208 = vmatpush1.bf16.msra.mxu0 %v264
  %1209 = vmatprep.subr.bf16.mxu0 0
  %1210 = vmatpush1.bf16.msra.mxu0 %v265
  %1211 = vmatprep.subr.bf16.mxu0 0
  %1212 = vmatpush1.bf16.msra.mxu0 %v266
  %1213 = vmatprep.subr.bf16.mxu0 0
  %1214 = vmatpush1.bf16.msra.mxu0 %v267
  %1215 = vmatprep.subr.bf16.mxu0 0
  %1216 = vmatpush1.bf16.msra.mxu0 0
  %1217 = vmatprep.subr.bf16.mxu0 0
  %1218 = vmatpush1.bf16.msra.mxu0 0
  %1219 = vmatprep.subr.bf16.mxu0 0
  %1220 = vmatpush1.bf16.msra.mxu0 0
  %1221 = vmatprep.subr.bf16.mxu0 0
  %1222 = vmatpush1.bf16.msra.mxu0 0
  %1223 = vmatprep.subr.bf16.mxu0 0
  %1224 = vmatpush1.bf16.msra.mxu0 0
  %1225 = vmatprep.subr.bf16.mxu0 0
  %1226 = vmatpush1.bf16.msra.mxu0 0
  %1227 = vmatprep.subr.bf16.mxu0 0
  %1228 = vmatpush1.bf16.msra.mxu0 0
  %1229 = vmatprep.subr.bf16.mxu0 0
  %1230 = vmatpush1.bf16.msra.mxu0 0
  %1231 = vmatprep.mubr.bf16.mxu0 0
  %1232 = vmatmul.mubr.bf16.gmra.mrb[0].mxu0 %v1198
  %v1233 = vpop.f32.mrb[0].mxu0
  %v1234 = vadd.f32 0.0, %v1233
  %v1235 = vpop.f32.mrb[0].mxu0
  %v1236 = vpop.f32.mrb[0].mxu0
  %v1237 = vadd.f32 0.0, %v1236
  %v1238 = vpop.f32.mrb[0].mxu0
  %1239 = vdwg.mxu0
  %v1240 = vadd.f32 %v1196, %v1234
  %v1241 = vadd.f32 %v1197, %v1237
  %v1242 = vtanh.pop %v1240
  %v1243 = vtanh.pop %v1241
  %1244 = vst [vmem:[#allocation3] sm:$0xff] %v1242
  %1245 = vst [vmem:[#allocation3 + $0x8] sm:$0xff] %v1243
  %v1246 = vpack.c.bf16 %v1243, %v1242
  %v1248 = vunpack.c.l.b16 %v1246
  %v1249 = vunpack.c.h.b16 %v1246
  %v1250 = vpack.c.b16 %v1248, %v1248
  %v1251 = vpack.c.b16 %v1249, %v1249
  %1254 = vst [vmem:[%s58] sm:$0xf] %v1250
  %1255 = vst [vmem:[%s58 + $0x4] sm:$0xf] %v1251
  // Predicated region
  $region22: #{birnn_forward.3} parent=0 // pred_check
    %p1256 = pneg %p62
  $region23: #{birnn_forward.3} parent=0 // pred_check_branch
    %1258 = sbr.rel (%p1256) target = $region25
  $region24: #{birnn_forward.3} parent=0 // pred_region
    %v1259 = vld [vmem:[#allocation2] sm:$0xff]
    %v1260 = vld [vmem:[#allocation2 + $0x8] sm:$0xff]
    %1261 = vst [vmem:[%s6] sm:$0xff] %v1259
    %1262 = vst [vmem:[%s6 + $0x8] sm:$0xff] %v1260
    %v1263 = vld [vmem:[#allocation3] sm:$0xff]
    %v1264 = vld [vmem:[#allocation3 + $0x8] sm:$0xff]
    %s1265 = scalar_lea.vmem %s6, 16
    %1266 = vst [vmem:[%s1265] sm:$0xff] %v1263
    %1267 = vst [vmem:[%s1265 + $0x8] sm:$0xff] %v1264
  $region25: #{birnn_forward.3} parent=0 // pred_fallthru
    _
  %s1268 = ssub.s32 0, 0
  %s1269 = smul.u32 8, %s1268
  %p1270 = scmp.lt.s32.totalorder %s1269, 7
  %s1271 = scalar_select %p1270, %s1269, 7
  %s1272 = smul.addr %s1271, 2
  %s1273 = smul.addr %s1272, 4
  %s1274 = scalar_lea.vmem %s5, %s1273
  // Predicated region
  $region26: #{birnn_forward.3} parent=0 // pred_check
    _
  $region27: #{birnn_forward.3} parent=0 // pred_check_branch
    %1276 = sbr.rel (0) target = $region29
  $region28: #{birnn_forward.3} parent=0 // pred_region
    _
  $region29: #{birnn_forward.3} parent=0 // pred_fallthru
    _
  // Predicated region
  $region30: #{birnn_forward.3} parent=0 // pred_check
    _
  $region31: #{birnn_forward.3} parent=0 // pred_check_branch
    %1278 = sbr.rel (0) target = $region33
  $region32: #{birnn_forward.3} parent=0 // pred_region
    %s1279 = ssub.s32 0, 0
    %s1280 = smul.u32 8, %s1279
  $region33: #{birnn_forward.3} parent=0 // pred_fallthru
    _
  // Predicated region
  $region34: #{birnn_forward.3} parent=0 // pred_check
    _
  $region35: #{birnn_forward.3} parent=0 // pred_check_branch
    %1282 = sbr.rel (0) target = $region37
  $region36: #{birnn_forward.3} parent=0 // pred_region
    _
  $region37: #{birnn_forward.3} parent=0 // pred_fallthru
    _
  // Predicated region
  $region38: #{birnn_forward.3} parent=0 // pred_check
    _
  $region39: #{birnn_forward.3} parent=0 // pred_check_branch
    %1284 = sbr.rel (0) target = $region41
  $region40: #{birnn_forward.3} parent=0 // pred_region
    _
  $region41: #{birnn_forward.3} parent=0 // pred_fallthru
    _
  // Predicated region
  $region42: #{birnn_forward.3} parent=0 // pred_check
    _
  $region43: #{birnn_forward.3} parent=0 // pred_check_branch
    %1286 = sbr.rel (0) target = $region45
  $region44: #{birnn_forward.3} parent=0 // pred_region
    %s1287 = ssub.s32 0, 0
    %s1288 = smul.u32 8, %s1287
    %p1289 = scmp.lt.s32.totalorder %s1288, 7
    %s1290 = scalar_select %p1289, %s1288, 7
    %s1291 = smul.addr %s1290, 2
    %s1292 = smul.addr %s1291, 4
    %s1293 = scalar_lea.vmem %s5, %s1292
  $region45: #{birnn_forward.3} parent=0 // pred_fallthru
    _
  // Predicated region
  $region46: #{birnn_forward.3} parent=0 // pred_check
    _
  $region47: #{birnn_forward.3} parent=0 // pred_check_branch
    %1295 = sbr.rel (0) target = $region49
  $region48: #{birnn_forward.3} parent=0 // pred_region
    _
  $region49: #{birnn_forward.3} parent=0 // pred_fallthru
    _

</llo_original>
